<compile_context>
chip_gen: v7x
topology: tpu7x:2x2x1
jax: 0.10.0
libtpu: 0.0.40
codegen_flags: <defaults>
</compile_context>

<pallas_src>
import math
import jax
import jax.numpy as jnp
from jax.experimental import pallas as pl
from jax.experimental.pallas import tpu as pltpu

S = 16            # "s" in the PyTorch module
TM_MAX = 4096     # M-tile for the only big layer (conv1); small layers use a single tile
BN_EPS = 1e-5


def _round_up(n, m):
    return ((n + m - 1) // m) * m


# ----------------------------- Fused per-layer Pallas kernel -----------------------------

def _make_conv_kernel(m_valid, tm, n_tiles, has_bn, has_fc, eps=BN_EPS):
    """conv-as-GEMM + bias + ReLU (+BatchNorm | +fc1 scale/shift) in (C, M) layout."""

    def kernel(*refs):
        if has_bn:
            p_ref, w_ref, b_ref, g_ref, bt_ref, o_ref, s_ref, q_ref = refs
        elif has_fc:
            p_ref, w_ref, b_ref, fcw_ref, fcb_ref, o_ref = refs
        else:
            p_ref, w_ref, b_ref, o_ref = refs

        i = pl.program_id(0)

        if has_bn:
            @pl.when(i == 0)
            def _init():
                s_ref[...] = jnp.zeros_like(s_ref)
                q_ref[...] = jnp.zeros_like(q_ref)

        # GEMM on the MXU: (Cout, K) @ (K, TM), bf16 operands, f32 accumulation.
        acc = jnp.dot(w_ref[...], p_ref[...], preferred_element_type=jnp.float32)
        y = jnp.maximum(acc + b_ref[...], 0.0)

        # Zero padded M columns (cheap per-tile mask) so BN stats stay exact;
        # replaces the old full-slab where/iota pass inside a separate BN kernel.
        col = i * tm + jax.lax.broadcasted_iota(jnp.int32, y.shape, 1)
        y = jnp.where(col < m_valid, y, 0.0)

        if has_fc:
            # TODO(synk): nn.Linear(239*150, 1) cannot match the actual last-dim size (=1);
            # adapted to a scale+shift along that size-1 dim, fused into conv4's epilogue.
            y = y * fcw_ref[0] + fcb_ref[0]

        off = pl.multiple_of(i * tm, tm)
        o_ref[:, pl.ds(off, tm)] = y

        if has_bn:
            s_ref[...] += jnp.sum(y, axis=1, keepdims=True)
            q_ref[...] += jnp.sum(y * y, axis=1, keepdims=True)

            @pl.when(i == n_tiles - 1)
            def _finalize():
                cnt = jnp.float32(m_valid)
                mean = s_ref[...] / cnt
                var = q_ref[...] / cnt - mean * mean      # biased var (training-mode BN)
                scale = jax.lax.rsqrt(var + eps) * g_ref[...]
                shift = bt_ref[...] - mean * scale

                def body(t, carry):
                    o2 = pl.multiple_of(t * tm, tm)
                    blk = o_ref[:, pl.ds(o2, tm)]
                    o_ref[:, pl.ds(o2, tm)] = blk * scale + shift
                    return carry

                jax.lax.fori_loop(0, n_tiles, body, 0)

    return kernel


def _conv_layer_call(patches, w_mat, bias, gamma, beta, fcw, fcb, *, m_valid, tm):
    k_pad, m_pad = patches.shape
    cout = w_mat.shape[0]
    n_tiles = m_pad // tm
    has_bn = gamma is not None
    has_fc = fcw is not None

    in_specs = [
        pl.BlockSpec((k_pad, tm), lambda i: (0, i)),      # patch tile, streamed over M
        pl.BlockSpec((cout, k_pad), lambda i: (0, 0)),    # weights, resident
        pl.BlockSpec((cout, 1), lambda i: (0, 0)),        # bias
    ]
    inputs = [patches, w_mat, bias]
    scratch = []
    if has_bn:
        in_specs += [pl.BlockSpec((cout, 1), lambda i: (0, 0)),
                     pl.BlockSpec((cout, 1), lambda i: (0, 0))]
        inputs += [gamma, beta]
        scratch = [pltpu.VMEM((cout, 1), jnp.float32),    # running per-channel sum
                   pltpu.VMEM((cout, 1), jnp.float32)]    # running per-channel sum of squares
    if has_fc:
        in_specs += [pl.BlockSpec(memory_space=pltpu.MemorySpace.SMEM),
                     pl.BlockSpec(memory_space=pltpu.MemorySpace.SMEM)]
        inputs += [fcw, fcb]

    # Whole output slab stays resident in VMEM across the grid (the BN finalize re-reads
    # it), hence "arbitrary" on the single grid axis.  No vmem_limit override: the largest
    # layer needs <6 MiB, well under the scoped default on v5e/v6e/v7x.
    return pl.pallas_call(
        _make_conv_kernel(m_valid, tm, n_tiles, has_bn, has_fc),
        out_shape=jax.ShapeDtypeStruct((cout, m_pad), jnp.float32),
        grid=(n_tiles,),
        in_specs=in_specs,
        out_specs=pl.BlockSpec((cout, m_pad), lambda i: (0, 0)),
        scratch_shapes=scratch,
        compiler_params=pltpu.CompilerParams(dimension_semantics=("arbitrary",)),
    )(*inputs)


# ----------------------------- JAX glue (layout / patch extraction) -----------------------------

def _conv_block(x_nhwc, w, b, gamma=None, beta=None, fcw=None, fcb=None, stride=2):
    cout, cin, k, _ = w.shape
    n, h, wd, _ = x_nhwc.shape
    ho = (h - k) // stride + 1
    wo = (wd - k) // stride + 1
    m = n * ho * wo

    tm = TM_MAX if m > TM_MAX else _round_up(m, 128)
    m_pad = _round_up(m, tm)
    k_dim = cin * k * k
    k_pad = _round_up(k_dim, 16)

    # Lane-dense transposed im2col: P[K, M], K ordered (cin, ki, kj) to match
    # w.reshape(cout, cin*k*k), M ordered (n, ho, wo).  Stored as bf16 to halve the
    # patch-stream HBM bytes (the GEMM accumulates in f32).
    cols = []
    for ki in range(k):
        for kj in range(k):
            cols.append(x_nhwc[:, ki:ki + stride * (ho - 1) + 1:stride,
                                  kj:kj + stride * (wo - 1) + 1:stride, :])
    p = jnp.stack(cols, axis=0)                                   # (k*k, N, Ho, Wo, Cin)
    p = jnp.transpose(p, (4, 0, 1, 2, 3)).reshape(k_dim, m)
    p = jnp.pad(p.astype(jnp.bfloat16), ((0, k_pad - k_dim), (0, m_pad - m)))

    w_mat = jnp.pad(w.reshape(cout, k_dim),
                    ((0, 0), (0, k_pad - k_dim))).astype(jnp.bfloat16)
    b_col = b.reshape(cout, 1).astype(jnp.float32)
    g_col = gamma.reshape(cout, 1).astype(jnp.float32) if gamma is not None else None
    bt_col = beta.reshape(cout, 1).astype(jnp.float32) if beta is not None else None

    y = _conv_layer_call(p, w_mat, b_col, g_col, bt_col, fcw, fcb, m_valid=m, tm=tm)
    y = y[:, :m].reshape(cout, n, ho, wo)
    return jnp.transpose(y, (1, 2, 3, 0))          # NHWC


def _maxpool3(x_nhwc):
    # MaxPool2d(kernel_size=3) has stride 3 => non-overlapping windows: crop + reshape +
    # max in the wrapper.  No shifted-copy (9, M, C) tensor, no extra pallas_call.
    n, h, w, c = x_nhwc.shape
    ho, wo = h // 3, w // 3
    x = x_nhwc[:, :ho * 3, :wo * 3, :].reshape(n, ho, 3, wo, 3, c)
    return jnp.max(x, axis=(2, 4))


# ----------------------------- Full forward -----------------------------

def my_cnn_forward(x_nchw, params):
    x = jnp.transpose(x_nchw, (0, 2, 3, 1))        # NCHW -> NHWC

    # conv1 -> ReLU -> BN(s) -> MaxPool(3)
    x = _conv_block(x, params["w1"], params["b1"], params["g1"], params["beta1"])
    x = _maxpool3(x)
    # conv2 -> ReLU -> BN(2s) -> MaxPool(3)
    x = _conv_block(x, params["w2"], params["b2"], params["g2"], params["beta2"])
    x = _maxpool3(x)
    # conv3 -> ReLU -> BN(4s)
    x = _conv_block(x, params["w3"], params["b3"], params["g3"], params["beta3"])
    # conv4 -> ReLU -> fc1 (fused into the conv4 kernel epilogue)
    x = _conv_block(x, params["w4"], params["b4"],
                    fcw=params["fc_w"].reshape(1).astype(jnp.float32),
                    fcb=params["fc_b"].reshape(1).astype(jnp.float32))
    return jnp.transpose(x, (0, 3, 1, 2))          # NHWC -> NCHW: (N, 8*S, 1, 1)


# ----------------------------- Deterministic parameter init -----------------------------

def init_params(key):
    def conv_init(k, cout, cin, ksz=3):
        k1, k2 = jax.random.split(k)
        bound = 1.0 / math.sqrt(cin * ksz * ksz)
        w = jax.random.uniform(k1, (cout, cin, ksz, ksz), jnp.float32, -bound, bound)
        b = jax.random.uniform(k2, (cout,), jnp.float32, -bound, bound)
        return w, b

    keys = jax.random.split(key, 6)
    params = {}
    params["w1"], params["b1"] = conv_init(keys[0], S, 3)
    params["w2"], params["b2"] = conv_init(keys[1], 2 * S, S)
    params["w3"], params["b3"] = conv_init(keys[2], 4 * S, 2 * S)
    params["w4"], params["b4"] = conv_init(keys[3], 8 * S, 4 * S)
    for i, c in zip((1, 2, 3), (S, 2 * S, 4 * S)):
        params[f"g{i}"] = jnp.ones((c,), jnp.float32)       # BN gamma (PyTorch default 1)
        params[f"beta{i}"] = jnp.zeros((c,), jnp.float32)   # BN beta  (PyTorch default 0)
    params["fc_w"] = jax.random.uniform(keys[4], (1, 1), jnp.float32, -1.0, 1.0)
    params["fc_b"] = jax.random.uniform(keys[5], (1,), jnp.float32, -1.0, 1.0)
    return params


if __name__ == "__main__":
    key = jax.random.PRNGKey(0)
    pkey, xkey = jax.random.split(key)
    params = init_params(pkey)
    # Smallest spatial size that survives four stride-2 3x3 convs + two k=3 max-pools.
    x = jax.random.normal(xkey, (2, 3, 260, 260), jnp.float32)
    fwd = jax.jit(my_cnn_forward)
    out = fwd(x, params)
    jax.block_until_ready(out)
    assert out.shape == (2, 8 * S, 1, 1) and out.dtype == jnp.float32
    print("KERNEL_OK")
</pallas_src>

<mosaic_0001>
module attributes {stable_mosaic.version = 11 : i64} {
  func.func @kernel(%arg0: i32, %arg1: memref<32x4096xbf16, #tpu.memory_space<vmem>>, %arg2: memref<16x32xbf16, #tpu.memory_space<vmem>>, %arg3: memref<16x1xf32, #tpu.memory_space<vmem>>, %arg4: memref<16x1xf32, #tpu.memory_space<vmem>>, %arg5: memref<16x1xf32, #tpu.memory_space<vmem>>, %arg6: memref<16x36864xf32, #tpu.memory_space<vmem>>, %arg7: memref<16x1xf32, #tpu.memory_space<vmem>>, %arg8: memref<16x1xf32, #tpu.memory_space<vmem>>) attributes {dimension_semantics = [#tpu.dimension_semantics<arbitrary>], iteration_bounds = array<i64: 9>, scalar_prefetch = 0 : i64, scratch_operands = 2 : i64, tpu.core_type = #tpu.core_type<tc>, window_params = [{transform_indices = @transform_0, window_bounds = array<i64: 32, 4096>}, {pipeline_mode = #tpu.pipeline_mode<synchronous>, transform_indices = @transform_1, window_bounds = array<i64: 16, 32>}, {pipeline_mode = #tpu.pipeline_mode<synchronous>, transform_indices = @transform_2, window_bounds = array<i64: 16, 1>}, {pipeline_mode = #tpu.pipeline_mode<synchronous>, transform_indices = @transform_3, window_bounds = array<i64: 16, 1>}, {pipeline_mode = #tpu.pipeline_mode<synchronous>, transform_indices = @transform_4, window_bounds = array<i64: 16, 1>}, {pipeline_mode = #tpu.pipeline_mode<synchronous>, transform_indices = @transform_5, window_bounds = array<i64: 16, 36864>}]} {
    %c0_i32 = arith.constant 0 : i32
    %0 = arith.cmpi eq, %arg0, %c0_i32 : i32
    %1 = arith.extui %0 : i1 to i32
    %c0_i32_0 = arith.constant 0 : i32
    %2 = arith.cmpi ne, %1, %c0_i32_0 : i32
    scf.if %2 {
      %cst_21 = arith.constant 0.000000e+00 : f32
      %37 = vector.broadcast %cst_21 : f32 to vector<16x1xf32>
      %c0_22 = arith.constant 0 : index
      %c0_23 = arith.constant 0 : index
      %38 = vector.load %arg7[%c0_22, %c0_23] : memref<16x1xf32, #tpu.memory_space<vmem>>, vector<16x1xf32>
      tpu.vector_store %arg7[%c0_22, %c0_23], %37 {strides = array<i32>} : memref<16x1xf32, #tpu.memory_space<vmem>>, vector<16x1xf32>,
      %cst_24 = arith.constant 0.000000e+00 : f32
      %39 = vector.broadcast %cst_24 : f32 to vector<16x1xf32>
      %c0_25 = arith.constant 0 : index
      %c0_26 = arith.constant 0 : index
      %40 = vector.load %arg8[%c0_25, %c0_26] : memref<16x1xf32, #tpu.memory_space<vmem>>, vector<16x1xf32>
      tpu.vector_store %arg8[%c0_25, %c0_26], %39 {strides = array<i32>} : memref<16x1xf32, #tpu.memory_space<vmem>>, vector<16x1xf32>,
    } else {
    }
    %c0 = arith.constant 0 : index
    %c0_1 = arith.constant 0 : index
    %3 = vector.load %arg2[%c0, %c0_1] : memref<16x32xbf16, #tpu.memory_space<vmem>>, vector<16x32xbf16>
    %c0_2 = arith.constant 0 : index
    %c0_3 = arith.constant 0 : index
    %4 = vector.load %arg1[%c0_2, %c0_3] : memref<32x4096xbf16, #tpu.memory_space<vmem>>, vector<32x4096xbf16>
    %cst = arith.constant dense<0.000000e+00> : vector<16x4096xf32>
    %5 = tpu.matmul %3, %4, %cst {dimension_numbers = #tpu.dot_dimension_numbers<[1], [0], [0], [1], [0, 0, 1, 1], [], []>} : vector<16x32xbf16>, vector<32x4096xbf16>, vector<16x4096xf32> -> vector<16x4096xf32>
    %c0_4 = arith.constant 0 : index
    %c0_5 = arith.constant 0 : index
    %6 = vector.load %arg3[%c0_4, %c0_5] : memref<16x1xf32, #tpu.memory_space<vmem>>, vector<16x1xf32>
    %7 = vector.broadcast %6 : vector<16x1xf32> to vector<16x4096xf32>
    %8 = arith.addf %5, %7 : vector<16x4096xf32>
    %cst_6 = arith.constant 0.000000e+00 : f32
    %9 = vector.broadcast %cst_6 : f32 to vector<16x4096xf32>
    %10 = arith.maximumf %8, %9 : vector<16x4096xf32>
    %c4096_i32 = arith.constant 4096 : i32
    %11 = arith.muli %arg0, %c4096_i32 : i32
    %12 = tpu.iota {dimensions = array<i32: 1>} : vector<16x4096xi32>
    %13 = vector.broadcast %11 : i32 to vector<16x4096xi32>
    %14 = arith.addi %13, %12 : vector<16x4096xi32>
    %c33282_i32 = arith.constant 33282 : i32
    %15 = vector.broadcast %c33282_i32 : i32 to vector<16x4096xi32>
    %16 = arith.cmpi slt, %14, %15 : vector<16x4096xi32>
    %cst_7 = arith.constant 0.000000e+00 : f32
    %17 = vector.broadcast %cst_7 : f32 to vector<16x4096xf32>
    %18 = arith.select %16, %10, %17 : vector<16x4096xi1>, vector<16x4096xf32>
    %c4096_i32_8 = arith.constant 4096 : i32
    %19 = arith.muli %arg0, %c4096_i32_8 : i32
    %20 = tpu.assume_multiple %19, 4096 : i32
    %c0_9 = arith.constant 0 : index
    %21 = arith.index_cast %20 : i32 to index
    %22 = vector.load %arg6[%c0_9, %21] : memref<16x36864xf32, #tpu.memory_space<vmem>>, vector<16x4096xf32>
    tpu.vector_store %arg6[%c0_9, %21], %18 {strides = array<i32>} : memref<16x36864xf32, #tpu.memory_space<vmem>>, vector<16x4096xf32>,
    %c0_10 = arith.constant 0 : index
    %c0_11 = arith.constant 0 : index
    %23 = vector.load %arg7[%c0_10, %c0_11] : memref<16x1xf32, #tpu.memory_space<vmem>>, vector<16x1xf32>
    %cst_12 = arith.constant dense<0.000000e+00> : vector<16xf32>
    %24 = vector.multi_reduction <add>, %18, %cst_12 [1] : vector<16x4096xf32> to vector<16xf32>
    %25 = vector.shape_cast %24 : vector<16xf32> to vector<16x1xf32>
    %26 = arith.addf %23, %25 : vector<16x1xf32>
    %c0_13 = arith.constant 0 : index
    %c0_14 = arith.constant 0 : index
    %27 = vector.load %arg7[%c0_13, %c0_14] : memref<16x1xf32, #tpu.memory_space<vmem>>, vector<16x1xf32>
    tpu.vector_store %arg7[%c0_13, %c0_14], %26 {strides = array<i32>} : memref<16x1xf32, #tpu.memory_space<vmem>>, vector<16x1xf32>,
    %c0_15 = arith.constant 0 : index
    %c0_16 = arith.constant 0 : index
    %28 = vector.load %arg8[%c0_15, %c0_16] : memref<16x1xf32, #tpu.memory_space<vmem>>, vector<16x1xf32>
    %29 = arith.mulf %18, %18 : vector<16x4096xf32>
    %cst_17 = arith.constant dense<0.000000e+00> : vector<16xf32>
    %30 = vector.multi_reduction <add>, %29, %cst_17 [1] : vector<16x4096xf32> to vector<16xf32>
    %31 = vector.shape_cast %30 : vector<16xf32> to vector<16x1xf32>
    %32 = arith.addf %28, %31 : vector<16x1xf32>
    %c0_18 = arith.constant 0 : index
    %c0_19 = arith.constant 0 : index
    %33 = vector.load %arg8[%c0_18, %c0_19] : memref<16x1xf32, #tpu.memory_space<vmem>>, vector<16x1xf32>
    tpu.vector_store %arg8[%c0_18, %c0_19], %32 {strides = array<i32>} : memref<16x1xf32, #tpu.memory_space<vmem>>, vector<16x1xf32>,
    %c8_i32 = arith.constant 8 : i32
    %34 = arith.cmpi eq, %arg0, %c8_i32 : i32
    %35 = arith.extui %34 : i1 to i32
    %c0_i32_20 = arith.constant 0 : i32
    %36 = arith.cmpi ne, %35, %c0_i32_20 : i32
    scf.if %36 {
      %c0_21 = arith.constant 0 : index
      %c0_22 = arith.constant 0 : index
      %37 = vector.load %arg7[%c0_21, %c0_22] : memref<16x1xf32, #tpu.memory_space<vmem>>, vector<16x1xf32>
      %cst_23 = arith.constant 3.328200e+04 : f32
      %38 = vector.broadcast %cst_23 : f32 to vector<16x1xf32>
      %39 = arith.divf %37, %38 : vector<16x1xf32>
      %c0_24 = arith.constant 0 : index
      %c0_25 = arith.constant 0 : index
      %40 = vector.load %arg8[%c0_24, %c0_25] : memref<16x1xf32, #tpu.memory_space<vmem>>, vector<16x1xf32>
      %cst_26 = arith.constant 3.328200e+04 : f32
      %41 = vector.broadcast %cst_26 : f32 to vector<16x1xf32>
      %42 = arith.divf %40, %41 : vector<16x1xf32>
      %43 = arith.mulf %39, %39 : vector<16x1xf32>
      %44 = arith.subf %42, %43 : vector<16x1xf32>
      %cst_27 = arith.constant 9.99999974E-6 : f32
      %45 = vector.broadcast %cst_27 : f32 to vector<16x1xf32>
      %46 = arith.addf %44, %45 : vector<16x1xf32>
      %47 = math.rsqrt %46 : vector<16x1xf32>
      %c0_28 = arith.constant 0 : index
      %c0_29 = arith.constant 0 : index
      %48 = vector.load %arg4[%c0_28, %c0_29] : memref<16x1xf32, #tpu.memory_space<vmem>>, vector<16x1xf32>
      %49 = arith.mulf %47, %48 : vector<16x1xf32>
      %c0_30 = arith.constant 0 : index
      %c0_31 = arith.constant 0 : index
      %50 = vector.load %arg5[%c0_30, %c0_31] : memref<16x1xf32, #tpu.memory_space<vmem>>, vector<16x1xf32>
      %51 = arith.mulf %39, %49 : vector<16x1xf32>
      %52 = arith.subf %50, %51 : vector<16x1xf32>
      %c0_i32_32 = arith.constant 0 : i32
      %c9_i32 = arith.constant 9 : i32
      %53 = arith.addi %c0_i32_32, %c9_i32 : i32
      %c1_i32 = arith.constant 1 : i32
      scf.for %arg9 = %c0_i32_32 to %53 step %c1_i32  : i32 {
        %c4096_i32_34 = arith.constant 4096 : i32
        %54 = arith.muli %arg9, %c4096_i32_34 : i32
        %55 = tpu.assume_multiple %54, 4096 : i32
        %c0_35 = arith.constant 0 : index
        %56 = arith.index_cast %55 : i32 to index
        %57 = vector.load %arg6[%c0_35, %56] : memref<16x36864xf32, #tpu.memory_space<vmem>>, vector<16x4096xf32>
        %58 = vector.broadcast %49 : vector<16x1xf32> to vector<16x4096xf32>
        %59 = arith.mulf %57, %58 : vector<16x4096xf32>
        %60 = vector.broadcast %52 : vector<16x1xf32> to vector<16x4096xf32>
        %61 = arith.addf %59, %60 : vector<16x4096xf32>
        %c0_36 = arith.constant 0 : index
        %62 = arith.index_cast %55 : i32 to index
        %63 = vector.load %arg6[%c0_36, %62] : memref<16x36864xf32, #tpu.memory_space<vmem>>, vector<16x4096xf32>
        tpu.vector_store %arg6[%c0_36, %62], %61 {strides = array<i32>} : memref<16x36864xf32, #tpu.memory_space<vmem>>, vector<16x4096xf32>,
      }
      %c9_i32_33 = arith.constant 9 : i32
    } else {
    }
    return
  }
  func.func @transform_0(%arg0: i32) -> (i32, i32) {
    %c0_i32 = arith.constant 0 : i32
    %c0_i32_0 = arith.constant 0 : i32
    return %c0_i32, %arg0 : i32, i32
  }
  func.func @transform_1(%arg0: i32) -> (i32, i32) {
    %c0_i32 = arith.constant 0 : i32
    %c0_i32_0 = arith.constant 0 : i32
    %c0_i32_1 = arith.constant 0 : i32
    return %c0_i32, %c0_i32_0 : i32, i32
  }
  func.func @transform_2(%arg0: i32) -> (i32, i32) {
    %c0_i32 = arith.constant 0 : i32
    %c0_i32_0 = arith.constant 0 : i32
    %c0_i32_1 = arith.constant 0 : i32
    return %c0_i32, %c0_i32_0 : i32, i32
  }
  func.func @transform_3(%arg0: i32) -> (i32, i32) {
    %c0_i32 = arith.constant 0 : i32
    %c0_i32_0 = arith.constant 0 : i32
    %c0_i32_1 = arith.constant 0 : i32
    return %c0_i32, %c0_i32_0 : i32, i32
  }
  func.func @transform_4(%arg0: i32) -> (i32, i32) {
    %c0_i32 = arith.constant 0 : i32
    %c0_i32_0 = arith.constant 0 : i32
    %c0_i32_1 = arith.constant 0 : i32
    return %c0_i32, %c0_i32_0 : i32, i32
  }
  func.func @transform_5(%arg0: i32) -> (i32, i32) {
    %c0_i32 = arith.constant 0 : i32
    %c0_i32_0 = arith.constant 0 : i32
    %c0_i32_1 = arith.constant 0 : i32
    return %c0_i32, %c0_i32_0 : i32, i32
  }
}

module attributes {stable_mosaic.version = 11 : i64} {
  func.func @kernel(%arg0: i32, %arg1: memref<144x896xbf16, #tpu.memory_space<vmem>>, %arg2: memref<32x144xbf16, #tpu.memory_space<vmem>>, %arg3: memref<32x1xf32, #tpu.memory_space<vmem>>, %arg4: memref<32x1xf32, #tpu.memory_space<vmem>>, %arg5: memref<32x1xf32, #tpu.memory_space<vmem>>, %arg6: memref<32x896xf32, #tpu.memory_space<vmem>>, %arg7: memref<32x1xf32, #tpu.memory_space<vmem>>, %arg8: memref<32x1xf32, #tpu.memory_space<vmem>>) attributes {dimension_semantics = [#tpu.dimension_semantics<arbitrary>], iteration_bounds = array<i64: 1>, scalar_prefetch = 0 : i64, scratch_operands = 2 : i64, tpu.core_type = #tpu.core_type<tc>, window_params = [{transform_indices = @transform_0, window_bounds = array<i64: 144, 896>}, {pipeline_mode = #tpu.pipeline_mode<synchronous>, transform_indices = @transform_1, window_bounds = array<i64: 32, 144>}, {pipeline_mode = #tpu.pipeline_mode<synchronous>, transform_indices = @transform_2, window_bounds = array<i64: 32, 1>}, {pipeline_mode = #tpu.pipeline_mode<synchronous>, transform_indices = @transform_3, window_bounds = array<i64: 32, 1>}, {pipeline_mode = #tpu.pipeline_mode<synchronous>, transform_indices = @transform_4, window_bounds = array<i64: 32, 1>}, {pipeline_mode = #tpu.pipeline_mode<synchronous>, transform_indices = @transform_5, window_bounds = array<i64: 32, 896>}]} {
    %c0_i32 = arith.constant 0 : i32
    %0 = arith.cmpi eq, %arg0, %c0_i32 : i32
    %1 = arith.extui %0 : i1 to i32
    %c0_i32_0 = arith.constant 0 : i32
    %2 = arith.cmpi ne, %1, %c0_i32_0 : i32
    scf.if %2 {
      %cst_22 = arith.constant 0.000000e+00 : f32
      %37 = vector.broadcast %cst_22 : f32 to vector<32x1xf32>
      %c0_23 = arith.constant 0 : index
      %c0_24 = arith.constant 0 : index
      %38 = vector.load %arg7[%c0_23, %c0_24] : memref<32x1xf32, #tpu.memory_space<vmem>>, vector<32x1xf32>
      tpu.vector_store %arg7[%c0_23, %c0_24], %37 {strides = array<i32>} : memref<32x1xf32, #tpu.memory_space<vmem>>, vector<32x1xf32>,
      %cst_25 = arith.constant 0.000000e+00 : f32
      %39 = vector.broadcast %cst_25 : f32 to vector<32x1xf32>
      %c0_26 = arith.constant 0 : index
      %c0_27 = arith.constant 0 : index
      %40 = vector.load %arg8[%c0_26, %c0_27] : memref<32x1xf32, #tpu.memory_space<vmem>>, vector<32x1xf32>
      tpu.vector_store %arg8[%c0_26, %c0_27], %39 {strides = array<i32>} : memref<32x1xf32, #tpu.memory_space<vmem>>, vector<32x1xf32>,
    } else {
    }
    %c0 = arith.constant 0 : index
    %c0_1 = arith.constant 0 : index
    %3 = vector.load %arg2[%c0, %c0_1] : memref<32x144xbf16, #tpu.memory_space<vmem>>, vector<32x144xbf16>
    %c0_2 = arith.constant 0 : index
    %c0_3 = arith.constant 0 : index
    %4 = vector.load %arg1[%c0_2, %c0_3] : memref<144x896xbf16, #tpu.memory_space<vmem>>, vector<144x896xbf16>
    %cst = arith.constant dense<0.000000e+00> : vector<32x896xf32>
    %5 = tpu.matmul %3, %4, %cst {dimension_numbers = #tpu.dot_dimension_numbers<[1], [0], [0], [1], [0, 0, 1, 1], [], []>} : vector<32x144xbf16>, vector<144x896xbf16>, vector<32x896xf32> -> vector<32x896xf32>
    %c0_4 = arith.constant 0 : index
    %c0_5 = arith.constant 0 : index
    %6 = vector.load %arg3[%c0_4, %c0_5] : memref<32x1xf32, #tpu.memory_space<vmem>>, vector<32x1xf32>
    %7 = vector.broadcast %6 : vector<32x1xf32> to vector<32x896xf32>
    %8 = arith.addf %5, %7 : vector<32x896xf32>
    %cst_6 = arith.constant 0.000000e+00 : f32
    %9 = vector.broadcast %cst_6 : f32 to vector<32x896xf32>
    %10 = arith.maximumf %8, %9 : vector<32x896xf32>
    %c896_i32 = arith.constant 896 : i32
    %11 = arith.muli %arg0, %c896_i32 : i32
    %12 = tpu.iota {dimensions = array<i32: 1>} : vector<32x896xi32>
    %13 = vector.broadcast %11 : i32 to vector<32x896xi32>
    %14 = arith.addi %13, %12 : vector<32x896xi32>
    %c882_i32 = arith.constant 882 : i32
    %15 = vector.broadcast %c882_i32 : i32 to vector<32x896xi32>
    %16 = arith.cmpi slt, %14, %15 : vector<32x896xi32>
    %cst_7 = arith.constant 0.000000e+00 : f32
    %17 = vector.broadcast %cst_7 : f32 to vector<32x896xf32>
    %18 = arith.select %16, %10, %17 : vector<32x896xi1>, vector<32x896xf32>
    %c896_i32_8 = arith.constant 896 : i32
    %19 = arith.muli %arg0, %c896_i32_8 : i32
    %20 = tpu.assume_multiple %19, 896 : i32
    %c0_9 = arith.constant 0 : index
    %21 = arith.index_cast %20 : i32 to index
    %22 = vector.load %arg6[%c0_9, %21] : memref<32x896xf32, #tpu.memory_space<vmem>>, vector<32x896xf32>
    tpu.vector_store %arg6[%c0_9, %21], %18 {strides = array<i32>} : memref<32x896xf32, #tpu.memory_space<vmem>>, vector<32x896xf32>,
    %c0_10 = arith.constant 0 : index
    %c0_11 = arith.constant 0 : index
    %23 = vector.load %arg7[%c0_10, %c0_11] : memref<32x1xf32, #tpu.memory_space<vmem>>, vector<32x1xf32>
    %cst_12 = arith.constant dense<0.000000e+00> : vector<32xf32>
    %24 = vector.multi_reduction <add>, %18, %cst_12 [1] : vector<32x896xf32> to vector<32xf32>
    %25 = vector.shape_cast %24 : vector<32xf32> to vector<32x1xf32>
    %26 = arith.addf %23, %25 : vector<32x1xf32>
    %c0_13 = arith.constant 0 : index
    %c0_14 = arith.constant 0 : index
    %27 = vector.load %arg7[%c0_13, %c0_14] : memref<32x1xf32, #tpu.memory_space<vmem>>, vector<32x1xf32>
    tpu.vector_store %arg7[%c0_13, %c0_14], %26 {strides = array<i32>} : memref<32x1xf32, #tpu.memory_space<vmem>>, vector<32x1xf32>,
    %c0_15 = arith.constant 0 : index
    %c0_16 = arith.constant 0 : index
    %28 = vector.load %arg8[%c0_15, %c0_16] : memref<32x1xf32, #tpu.memory_space<vmem>>, vector<32x1xf32>
    %29 = arith.mulf %18, %18 : vector<32x896xf32>
    %cst_17 = arith.constant dense<0.000000e+00> : vector<32xf32>
    %30 = vector.multi_reduction <add>, %29, %cst_17 [1] : vector<32x896xf32> to vector<32xf32>
    %31 = vector.shape_cast %30 : vector<32xf32> to vector<32x1xf32>
    %32 = arith.addf %28, %31 : vector<32x1xf32>
    %c0_18 = arith.constant 0 : index
    %c0_19 = arith.constant 0 : index
    %33 = vector.load %arg8[%c0_18, %c0_19] : memref<32x1xf32, #tpu.memory_space<vmem>>, vector<32x1xf32>
    tpu.vector_store %arg8[%c0_18, %c0_19], %32 {strides = array<i32>} : memref<32x1xf32, #tpu.memory_space<vmem>>, vector<32x1xf32>,
    %c0_i32_20 = arith.constant 0 : i32
    %34 = arith.cmpi eq, %arg0, %c0_i32_20 : i32
    %35 = arith.extui %34 : i1 to i32
    %c0_i32_21 = arith.constant 0 : i32
    %36 = arith.cmpi ne, %35, %c0_i32_21 : i32
    scf.if %36 {
      %c0_22 = arith.constant 0 : index
      %c0_23 = arith.constant 0 : index
      %37 = vector.load %arg7[%c0_22, %c0_23] : memref<32x1xf32, #tpu.memory_space<vmem>>, vector<32x1xf32>
      %cst_24 = arith.constant 8.820000e+02 : f32
      %38 = vector.broadcast %cst_24 : f32 to vector<32x1xf32>
      %39 = arith.divf %37, %38 : vector<32x1xf32>
      %c0_25 = arith.constant 0 : index
      %c0_26 = arith.constant 0 : index
      %40 = vector.load %arg8[%c0_25, %c0_26] : memref<32x1xf32, #tpu.memory_space<vmem>>, vector<32x1xf32>
      %cst_27 = arith.constant 8.820000e+02 : f32
      %41 = vector.broadcast %cst_27 : f32 to vector<32x1xf32>
      %42 = arith.divf %40, %41 : vector<32x1xf32>
      %43 = arith.mulf %39, %39 : vector<32x1xf32>
      %44 = arith.subf %42, %43 : vector<32x1xf32>
      %cst_28 = arith.constant 9.99999974E-6 : f32
      %45 = vector.broadcast %cst_28 : f32 to vector<32x1xf32>
      %46 = arith.addf %44, %45 : vector<32x1xf32>
      %47 = math.rsqrt %46 : vector<32x1xf32>
      %c0_29 = arith.constant 0 : index
      %c0_30 = arith.constant 0 : index
      %48 = vector.load %arg4[%c0_29, %c0_30] : memref<32x1xf32, #tpu.memory_space<vmem>>, vector<32x1xf32>
      %49 = arith.mulf %47, %48 : vector<32x1xf32>
      %c0_31 = arith.constant 0 : index
      %c0_32 = arith.constant 0 : index
      %50 = vector.load %arg5[%c0_31, %c0_32] : memref<32x1xf32, #tpu.memory_space<vmem>>, vector<32x1xf32>
      %51 = arith.mulf %39, %49 : vector<32x1xf32>
      %52 = arith.subf %50, %51 : vector<32x1xf32>
      %c0_i32_33 = arith.constant 0 : i32
      %c896_i32_34 = arith.constant 896 : i32
      %53 = arith.muli %c0_i32_33, %c896_i32_34 : i32
      %54 = tpu.assume_multiple %53, 896 : i32
      %c0_35 = arith.constant 0 : index
      %55 = arith.index_cast %54 : i32 to index
      %56 = vector.load %arg6[%c0_35, %55] : memref<32x896xf32, #tpu.memory_space<vmem>>, vector<32x896xf32>
      %57 = vector.broadcast %49 : vector<32x1xf32> to vector<32x896xf32>
      %58 = arith.mulf %56, %57 : vector<32x896xf32>
      %59 = vector.broadcast %52 : vector<32x1xf32> to vector<32x896xf32>
      %60 = arith.addf %58, %59 : vector<32x896xf32>
      %c0_36 = arith.constant 0 : index
      %61 = arith.index_cast %54 : i32 to index
      %62 = vector.load %arg6[%c0_36, %61] : memref<32x896xf32, #tpu.memory_space<vmem>>, vector<32x896xf32>
      tpu.vector_store %arg6[%c0_36, %61], %60 {strides = array<i32>} : memref<32x896xf32, #tpu.memory_space<vmem>>, vector<32x896xf32>,
      %c1_i32 = arith.constant 1 : i32
    } else {
    }
    return
  }
  func.func @transform_0(%arg0: i32) -> (i32, i32) {
    %c0_i32 = arith.constant 0 : i32
    %c0_i32_0 = arith.constant 0 : i32
    return %c0_i32, %arg0 : i32, i32
  }
  func.func @transform_1(%arg0: i32) -> (i32, i32) {
    %c0_i32 = arith.constant 0 : i32
    %c0_i32_0 = arith.constant 0 : i32
    %c0_i32_1 = arith.constant 0 : i32
    return %c0_i32, %c0_i32_0 : i32, i32
  }
  func.func @transform_2(%arg0: i32) -> (i32, i32) {
    %c0_i32 = arith.constant 0 : i32
    %c0_i32_0 = arith.constant 0 : i32
    %c0_i32_1 = arith.constant 0 : i32
    return %c0_i32, %c0_i32_0 : i32, i32
  }
  func.func @transform_3(%arg0: i32) -> (i32, i32) {
    %c0_i32 = arith.constant 0 : i32
    %c0_i32_0 = arith.constant 0 : i32
    %c0_i32_1 = arith.constant 0 : i32
    return %c0_i32, %c0_i32_0 : i32, i32
  }
  func.func @transform_4(%arg0: i32) -> (i32, i32) {
    %c0_i32 = arith.constant 0 : i32
    %c0_i32_0 = arith.constant 0 : i32
    %c0_i32_1 = arith.constant 0 : i32
    return %c0_i32, %c0_i32_0 : i32, i32
  }
  func.func @transform_5(%arg0: i32) -> (i32, i32) {
    %c0_i32 = arith.constant 0 : i32
    %c0_i32_0 = arith.constant 0 : i32
    %c0_i32_1 = arith.constant 0 : i32
    return %c0_i32, %c0_i32_0 : i32, i32
  }
}

module attributes {stable_mosaic.version = 11 : i64} {
  func.func @kernel(%arg0: i32, %arg1: memref<288x128xbf16, #tpu.memory_space<vmem>>, %arg2: memref<64x288xbf16, #tpu.memory_space<vmem>>, %arg3: memref<64x1xf32, #tpu.memory_space<vmem>>, %arg4: memref<64x1xf32, #tpu.memory_space<vmem>>, %arg5: memref<64x1xf32, #tpu.memory_space<vmem>>, %arg6: memref<64x128xf32, #tpu.memory_space<vmem>>, %arg7: memref<64x1xf32, #tpu.memory_space<vmem>>, %arg8: memref<64x1xf32, #tpu.memory_space<vmem>>) attributes {dimension_semantics = [#tpu.dimension_semantics<arbitrary>], iteration_bounds = array<i64: 1>, scalar_prefetch = 0 : i64, scratch_operands = 2 : i64, tpu.core_type = #tpu.core_type<tc>, window_params = [{transform_indices = @transform_0, window_bounds = array<i64: 288, 128>}, {pipeline_mode = #tpu.pipeline_mode<synchronous>, transform_indices = @transform_1, window_bounds = array<i64: 64, 288>}, {pipeline_mode = #tpu.pipeline_mode<synchronous>, transform_indices = @transform_2, window_bounds = array<i64: 64, 1>}, {pipeline_mode = #tpu.pipeline_mode<synchronous>, transform_indices = @transform_3, window_bounds = array<i64: 64, 1>}, {pipeline_mode = #tpu.pipeline_mode<synchronous>, transform_indices = @transform_4, window_bounds = array<i64: 64, 1>}, {pipeline_mode = #tpu.pipeline_mode<synchronous>, transform_indices = @transform_5, window_bounds = array<i64: 64, 128>}]} {
    %c0_i32 = arith.constant 0 : i32
    %0 = arith.cmpi eq, %arg0, %c0_i32 : i32
    %1 = arith.extui %0 : i1 to i32
    %c0_i32_0 = arith.constant 0 : i32
    %2 = arith.cmpi ne, %1, %c0_i32_0 : i32
    scf.if %2 {
      %cst_22 = arith.constant 0.000000e+00 : f32
      %37 = vector.broadcast %cst_22 : f32 to vector<64x1xf32>
      %c0_23 = arith.constant 0 : index
      %c0_24 = arith.constant 0 : index
      %38 = vector.load %arg7[%c0_23, %c0_24] : memref<64x1xf32, #tpu.memory_space<vmem>>, vector<64x1xf32>
      tpu.vector_store %arg7[%c0_23, %c0_24], %37 {strides = array<i32>} : memref<64x1xf32, #tpu.memory_space<vmem>>, vector<64x1xf32>,
      %cst_25 = arith.constant 0.000000e+00 : f32
      %39 = vector.broadcast %cst_25 : f32 to vector<64x1xf32>
      %c0_26 = arith.constant 0 : index
      %c0_27 = arith.constant 0 : index
      %40 = vector.load %arg8[%c0_26, %c0_27] : memref<64x1xf32, #tpu.memory_space<vmem>>, vector<64x1xf32>
      tpu.vector_store %arg8[%c0_26, %c0_27], %39 {strides = array<i32>} : memref<64x1xf32, #tpu.memory_space<vmem>>, vector<64x1xf32>,
    } else {
    }
    %c0 = arith.constant 0 : index
    %c0_1 = arith.constant 0 : index
    %3 = vector.load %arg2[%c0, %c0_1] : memref<64x288xbf16, #tpu.memory_space<vmem>>, vector<64x288xbf16>
    %c0_2 = arith.constant 0 : index
    %c0_3 = arith.constant 0 : index
    %4 = vector.load %arg1[%c0_2, %c0_3] : memref<288x128xbf16, #tpu.memory_space<vmem>>, vector<288x128xbf16>
    %cst = arith.constant dense<0.000000e+00> : vector<64x128xf32>
    %5 = tpu.matmul %3, %4, %cst {dimension_numbers = #tpu.dot_dimension_numbers<[1], [0], [0], [1], [0, 0, 1, 1], [], []>} : vector<64x288xbf16>, vector<288x128xbf16>, vector<64x128xf32> -> vector<64x128xf32>
    %c0_4 = arith.constant 0 : index
    %c0_5 = arith.constant 0 : index
    %6 = vector.load %arg3[%c0_4, %c0_5] : memref<64x1xf32, #tpu.memory_space<vmem>>, vector<64x1xf32>
    %7 = vector.broadcast %6 : vector<64x1xf32> to vector<64x128xf32>
    %8 = arith.addf %5, %7 : vector<64x128xf32>
    %cst_6 = arith.constant 0.000000e+00 : f32
    %9 = vector.broadcast %cst_6 : f32 to vector<64x128xf32>
    %10 = arith.maximumf %8, %9 : vector<64x128xf32>
    %c128_i32 = arith.constant 128 : i32
    %11 = arith.muli %arg0, %c128_i32 : i32
    %12 = tpu.iota {dimensions = array<i32: 1>} : vector<64x128xi32>
    %13 = vector.broadcast %11 : i32 to vector<64x128xi32>
    %14 = arith.addi %13, %12 : vector<64x128xi32>
    %c18_i32 = arith.constant 18 : i32
    %15 = vector.broadcast %c18_i32 : i32 to vector<64x128xi32>
    %16 = arith.cmpi slt, %14, %15 : vector<64x128xi32>
    %cst_7 = arith.constant 0.000000e+00 : f32
    %17 = vector.broadcast %cst_7 : f32 to vector<64x128xf32>
    %18 = arith.select %16, %10, %17 : vector<64x128xi1>, vector<64x128xf32>
    %c128_i32_8 = arith.constant 128 : i32
    %19 = arith.muli %arg0, %c128_i32_8 : i32
    %20 = tpu.assume_multiple %19, 128 : i32
    %c0_9 = arith.constant 0 : index
    %21 = arith.index_cast %20 : i32 to index
    %22 = vector.load %arg6[%c0_9, %21] : memref<64x128xf32, #tpu.memory_space<vmem>>, vector<64x128xf32>
    tpu.vector_store %arg6[%c0_9, %21], %18 {strides = array<i32>} : memref<64x128xf32, #tpu.memory_space<vmem>>, vector<64x128xf32>,
    %c0_10 = arith.constant 0 : index
    %c0_11 = arith.constant 0 : index
    %23 = vector.load %arg7[%c0_10, %c0_11] : memref<64x1xf32, #tpu.memory_space<vmem>>, vector<64x1xf32>
    %cst_12 = arith.constant dense<0.000000e+00> : vector<64xf32>
    %24 = vector.multi_reduction <add>, %18, %cst_12 [1] : vector<64x128xf32> to vector<64xf32>
    %25 = vector.shape_cast %24 : vector<64xf32> to vector<64x1xf32>
    %26 = arith.addf %23, %25 : vector<64x1xf32>
    %c0_13 = arith.constant 0 : index
    %c0_14 = arith.constant 0 : index
    %27 = vector.load %arg7[%c0_13, %c0_14] : memref<64x1xf32, #tpu.memory_space<vmem>>, vector<64x1xf32>
    tpu.vector_store %arg7[%c0_13, %c0_14], %26 {strides = array<i32>} : memref<64x1xf32, #tpu.memory_space<vmem>>, vector<64x1xf32>,
    %c0_15 = arith.constant 0 : index
    %c0_16 = arith.constant 0 : index
    %28 = vector.load %arg8[%c0_15, %c0_16] : memref<64x1xf32, #tpu.memory_space<vmem>>, vector<64x1xf32>
    %29 = arith.mulf %18, %18 : vector<64x128xf32>
    %cst_17 = arith.constant dense<0.000000e+00> : vector<64xf32>
    %30 = vector.multi_reduction <add>, %29, %cst_17 [1] : vector<64x128xf32> to vector<64xf32>
    %31 = vector.shape_cast %30 : vector<64xf32> to vector<64x1xf32>
    %32 = arith.addf %28, %31 : vector<64x1xf32>
    %c0_18 = arith.constant 0 : index
    %c0_19 = arith.constant 0 : index
    %33 = vector.load %arg8[%c0_18, %c0_19] : memref<64x1xf32, #tpu.memory_space<vmem>>, vector<64x1xf32>
    tpu.vector_store %arg8[%c0_18, %c0_19], %32 {strides = array<i32>} : memref<64x1xf32, #tpu.memory_space<vmem>>, vector<64x1xf32>,
    %c0_i32_20 = arith.constant 0 : i32
    %34 = arith.cmpi eq, %arg0, %c0_i32_20 : i32
    %35 = arith.extui %34 : i1 to i32
    %c0_i32_21 = arith.constant 0 : i32
    %36 = arith.cmpi ne, %35, %c0_i32_21 : i32
    scf.if %36 {
      %c0_22 = arith.constant 0 : index
      %c0_23 = arith.constant 0 : index
      %37 = vector.load %arg7[%c0_22, %c0_23] : memref<64x1xf32, #tpu.memory_space<vmem>>, vector<64x1xf32>
      %cst_24 = arith.constant 1.800000e+01 : f32
      %38 = vector.broadcast %cst_24 : f32 to vector<64x1xf32>
      %39 = arith.divf %37, %38 : vector<64x1xf32>
      %c0_25 = arith.constant 0 : index
      %c0_26 = arith.constant 0 : index
      %40 = vector.load %arg8[%c0_25, %c0_26] : memref<64x1xf32, #tpu.memory_space<vmem>>, vector<64x1xf32>
      %cst_27 = arith.constant 1.800000e+01 : f32
      %41 = vector.broadcast %cst_27 : f32 to vector<64x1xf32>
      %42 = arith.divf %40, %41 : vector<64x1xf32>
      %43 = arith.mulf %39, %39 : vector<64x1xf32>
      %44 = arith.subf %42, %43 : vector<64x1xf32>
      %cst_28 = arith.constant 9.99999974E-6 : f32
      %45 = vector.broadcast %cst_28 : f32 to vector<64x1xf32>
      %46 = arith.addf %44, %45 : vector<64x1xf32>
      %47 = math.rsqrt %46 : vector<64x1xf32>
      %c0_29 = arith.constant 0 : index
      %c0_30 = arith.constant 0 : index
      %48 = vector.load %arg4[%c0_29, %c0_30] : memref<64x1xf32, #tpu.memory_space<vmem>>, vector<64x1xf32>
      %49 = arith.mulf %47, %48 : vector<64x1xf32>
      %c0_31 = arith.constant 0 : index
      %c0_32 = arith.constant 0 : index
      %50 = vector.load %arg5[%c0_31, %c0_32] : memref<64x1xf32, #tpu.memory_space<vmem>>, vector<64x1xf32>
      %51 = arith.mulf %39, %49 : vector<64x1xf32>
      %52 = arith.subf %50, %51 : vector<64x1xf32>
      %c0_i32_33 = arith.constant 0 : i32
      %c128_i32_34 = arith.constant 128 : i32
      %53 = arith.muli %c0_i32_33, %c128_i32_34 : i32
      %54 = tpu.assume_multiple %53, 128 : i32
      %c0_35 = arith.constant 0 : index
      %55 = arith.index_cast %54 : i32 to index
      %56 = vector.load %arg6[%c0_35, %55] : memref<64x128xf32, #tpu.memory_space<vmem>>, vector<64x128xf32>
      %57 = vector.broadcast %49 : vector<64x1xf32> to vector<64x128xf32>
      %58 = arith.mulf %56, %57 : vector<64x128xf32>
      %59 = vector.broadcast %52 : vector<64x1xf32> to vector<64x128xf32>
      %60 = arith.addf %58, %59 : vector<64x128xf32>
      %c0_36 = arith.constant 0 : index
      %61 = arith.index_cast %54 : i32 to index
      %62 = vector.load %arg6[%c0_36, %61] : memref<64x128xf32, #tpu.memory_space<vmem>>, vector<64x128xf32>
      tpu.vector_store %arg6[%c0_36, %61], %60 {strides = array<i32>} : memref<64x128xf32, #tpu.memory_space<vmem>>, vector<64x128xf32>,
      %c1_i32 = arith.constant 1 : i32
    } else {
    }
    return
  }
  func.func @transform_0(%arg0: i32) -> (i32, i32) {
    %c0_i32 = arith.constant 0 : i32
    %c0_i32_0 = arith.constant 0 : i32
    return %c0_i32, %arg0 : i32, i32
  }
  func.func @transform_1(%arg0: i32) -> (i32, i32) {
    %c0_i32 = arith.constant 0 : i32
    %c0_i32_0 = arith.constant 0 : i32
    %c0_i32_1 = arith.constant 0 : i32
    return %c0_i32, %c0_i32_0 : i32, i32
  }
  func.func @transform_2(%arg0: i32) -> (i32, i32) {
    %c0_i32 = arith.constant 0 : i32
    %c0_i32_0 = arith.constant 0 : i32
    %c0_i32_1 = arith.constant 0 : i32
    return %c0_i32, %c0_i32_0 : i32, i32
  }
  func.func @transform_3(%arg0: i32) -> (i32, i32) {
    %c0_i32 = arith.constant 0 : i32
    %c0_i32_0 = arith.constant 0 : i32
    %c0_i32_1 = arith.constant 0 : i32
    return %c0_i32, %c0_i32_0 : i32, i32
  }
  func.func @transform_4(%arg0: i32) -> (i32, i32) {
    %c0_i32 = arith.constant 0 : i32
    %c0_i32_0 = arith.constant 0 : i32
    %c0_i32_1 = arith.constant 0 : i32
    return %c0_i32, %c0_i32_0 : i32, i32
  }
  func.func @transform_5(%arg0: i32) -> (i32, i32) {
    %c0_i32 = arith.constant 0 : i32
    %c0_i32_0 = arith.constant 0 : i32
    %c0_i32_1 = arith.constant 0 : i32
    return %c0_i32, %c0_i32_0 : i32, i32
  }
}

module attributes {stable_mosaic.version = 11 : i64} {
  func.func @kernel(%arg0: i32, %arg1: memref<576x128xbf16, #tpu.memory_space<vmem>>, %arg2: memref<128x576xbf16, #tpu.memory_space<vmem>>, %arg3: memref<128x1xf32, #tpu.memory_space<vmem>>, %arg4: memref<1xf32, #tpu.memory_space<smem>>, %arg5: memref<1xf32, #tpu.memory_space<smem>>, %arg6: memref<128x128xf32, #tpu.memory_space<vmem>>) attributes {dimension_semantics = [#tpu.dimension_semantics<arbitrary>], iteration_bounds = array<i64: 1>, scalar_prefetch = 0 : i64, scratch_operands = 0 : i64, tpu.core_type = #tpu.core_type<tc>, window_params = [{transform_indices = @transform_0, window_bounds = array<i64: 576, 128>}, {pipeline_mode = #tpu.pipeline_mode<synchronous>, transform_indices = @transform_1, window_bounds = array<i64: 128, 576>}, {pipeline_mode = #tpu.pipeline_mode<synchronous>, transform_indices = @transform_2, window_bounds = array<i64: 128, 1>}, {transform_indices = @transform_3, window_bounds = array<i64: 1>}, {transform_indices = @transform_4, window_bounds = array<i64: 1>}, {pipeline_mode = #tpu.pipeline_mode<synchronous>, transform_indices = @transform_5, window_bounds = array<i64: 128, 128>}]} {
    %c0 = arith.constant 0 : index
    %c0_0 = arith.constant 0 : index
    %0 = vector.load %arg2[%c0, %c0_0] : memref<128x576xbf16, #tpu.memory_space<vmem>>, vector<128x576xbf16>
    %c0_1 = arith.constant 0 : index
    %c0_2 = arith.constant 0 : index
    %1 = vector.load %arg1[%c0_1, %c0_2] : memref<576x128xbf16, #tpu.memory_space<vmem>>, vector<576x128xbf16>
    %cst = arith.constant dense<0.000000e+00> : vector<128x128xf32>
    %2 = tpu.matmul %0, %1, %cst {dimension_numbers = #tpu.dot_dimension_numbers<[1], [0], [0], [1], [0, 0, 1, 1], [], []>} : vector<128x576xbf16>, vector<576x128xbf16>, vector<128x128xf32> -> vector<128x128xf32>
    %c0_3 = arith.constant 0 : index
    %c0_4 = arith.constant 0 : index
    %3 = vector.load %arg3[%c0_3, %c0_4] : memref<128x1xf32, #tpu.memory_space<vmem>>, vector<128x1xf32>
    %4 = vector.broadcast %3 : vector<128x1xf32> to vector<128x128xf32>
    %5 = arith.addf %2, %4 : vector<128x128xf32>
    %cst_5 = arith.constant 0.000000e+00 : f32
    %6 = vector.broadcast %cst_5 : f32 to vector<128x128xf32>
    %7 = arith.maximumf %5, %6 : vector<128x128xf32>
    %c128_i32 = arith.constant 128 : i32
    %8 = arith.muli %arg0, %c128_i32 : i32
    %9 = tpu.iota {dimensions = array<i32: 1>} : vector<128x128xi32>
    %10 = vector.broadcast %8 : i32 to vector<128x128xi32>
    %11 = arith.addi %10, %9 : vector<128x128xi32>
    %c2_i32 = arith.constant 2 : i32
    %12 = vector.broadcast %c2_i32 : i32 to vector<128x128xi32>
    %13 = arith.cmpi slt, %11, %12 : vector<128x128xi32>
    %cst_6 = arith.constant 0.000000e+00 : f32
    %14 = vector.broadcast %cst_6 : f32 to vector<128x128xf32>
    %15 = arith.select %13, %7, %14 : vector<128x128xi1>, vector<128x128xf32>
    %c0_7 = arith.constant 0 : index
    %16 = memref.load %arg4[%c0_7] : memref<1xf32, #tpu.memory_space<smem>>
    %17 = vector.broadcast %16 : f32 to vector<128x128xf32>
    %18 = arith.mulf %15, %17 : vector<128x128xf32>
    %c0_8 = arith.constant 0 : index
    %19 = memref.load %arg5[%c0_8] : memref<1xf32, #tpu.memory_space<smem>>
    %20 = vector.broadcast %19 : f32 to vector<128x128xf32>
    %21 = arith.addf %18, %20 : vector<128x128xf32>
    %c128_i32_9 = arith.constant 128 : i32
    %22 = arith.muli %arg0, %c128_i32_9 : i32
    %23 = tpu.assume_multiple %22, 128 : i32
    %c0_10 = arith.constant 0 : index
    %24 = arith.index_cast %23 : i32 to index
    %25 = vector.load %arg6[%c0_10, %24] : memref<128x128xf32, #tpu.memory_space<vmem>>, vector<128x128xf32>
    tpu.vector_store %arg6[%c0_10, %24], %21 {strides = array<i32>} : memref<128x128xf32, #tpu.memory_space<vmem>>, vector<128x128xf32>,
    return
  }
  func.func @transform_0(%arg0: i32) -> (i32, i32) {
    %c0_i32 = arith.constant 0 : i32
    %c0_i32_0 = arith.constant 0 : i32
    return %c0_i32, %arg0 : i32, i32
  }
  func.func @transform_1(%arg0: i32) -> (i32, i32) {
    %c0_i32 = arith.constant 0 : i32
    %c0_i32_0 = arith.constant 0 : i32
    %c0_i32_1 = arith.constant 0 : i32
    return %c0_i32, %c0_i32_0 : i32, i32
  }
  func.func @transform_2(%arg0: i32) -> (i32, i32) {
    %c0_i32 = arith.constant 0 : i32
    %c0_i32_0 = arith.constant 0 : i32
    %c0_i32_1 = arith.constant 0 : i32
    return %c0_i32, %c0_i32_0 : i32, i32
  }
  func.func @transform_3(%arg0: i32) -> i32 {
    %c0_i32 = arith.constant 0 : i32
    %c0_i32_0 = arith.constant 0 : i32
    return %c0_i32 : i32
  }
  func.func @transform_4(%arg0: i32) -> i32 {
    %c0_i32 = arith.constant 0 : i32
    %c0_i32_0 = arith.constant 0 : i32
    return %c0_i32 : i32
  }
  func.func @transform_5(%arg0: i32) -> (i32, i32) {
    %c0_i32 = arith.constant 0 : i32
    %c0_i32_0 = arith.constant 0 : i32
    %c0_i32_1 = arith.constant 0 : i32
    return %c0_i32, %c0_i32_0 : i32, i32
  }
}

</mosaic_0001>

<llo_original>
// kernel: my_cnn_forward.4
$region0: #{my_cnn_forward.4}
  #allocation0 [shape = 'u32[]', space=smem, size = 0x4, offset = 0x4, fixed_abs, tag = 'smem constant byte address 0x4 - core index']
  #allocation1 [shape = 'u32[144,128]{1,0:T(1,128)}', space=vmem, size = 0x12000, scoped, tag = 'internal scratch']
  #allocation2 [shape = 'f32[16,1]{1,0:T(8,128)}', space=vmem, size = 0x2000, scoped, tag = 'scratch operand']
  #allocation3 [shape = 'f32[16,1]{1,0:T(8,128)}', space=vmem, size = 0x2000, scoped, tag = 'scratch operand']
  %s0 = inlined_call_operand.vmem [shape: bf16[32,36864], index: 0, kind: input, shape index: {}]
  %s1 = inlined_call_operand.vmem [shape: bf16[16,32], index: 1, kind: input, shape index: {}]
  %s2 = inlined_call_operand.vmem [shape: f32[16,1], index: 2, kind: input, shape index: {}]
  %s3 = inlined_call_operand.vmem [shape: f32[16,1], index: 3, kind: input, shape index: {}]
  %s4 = inlined_call_operand.vmem [shape: f32[16,1], index: 4, kind: input, shape index: {}]
  %s5 = inlined_call_operand.vmem [shape: f32[16,36864], index: 5, kind: output, shape index: {}]
  %s6 = sld [smem:[#allocation0]]
  $region91: #{my_cnn_forward.4} parent=0
    _
  %s8 = ssub.s32 1, %s6
  %s9 = scalar_select 0, %s8, %s6
  $region1: #{my_cnn_forward.4} parent=0
    #allocation4 [shape = 'u8[524288]{0}', space=vmem, size = 0x80000, scoped, tag = 'input window, operand 0']
    loop: start=0, step=1, limit=11
    $region2: #{my_cnn_forward.4} parent=1 // loop_pre_header
      _
    $region3: #{my_cnn_forward.4} parent=1 // loop_header
      %s11 = sphi 0, %s15
      %p12 = scmp.ge.s32.totalorder %s11, 11
      %s21 = sphi 0, %s23
      %s24 = sphi 0, %s21
      %s25 = sphi 0, %s24
      %s41 = sphi 0, %s25
      %s45 = sphi 0, %s45
      %s47 = sphi 0, %s45
      %s48 = sphi 0, %s47
      %s62 = sphi 0, %s48
      %s66 = sphi 0, %s66
      %s68 = sphi 0, %s66
      %s69 = sphi 0, %s68
      %s83 = sphi 0, %s69
      %s87 = sphi 0, %s87
      %s89 = sphi 0, %s87
      %s90 = sphi 0, %s89
      %s104 = sphi 0, %s90
      %s108 = sphi 0, %s108
      %s110 = sphi 0, %s108
      %s111 = sphi 0, %s110
      %s125 = sphi 0, %s111
      %s129 = sphi 0, %s129
      %s131 = sphi 0, %s129
      %s132 = sphi 0, %s131
      %s146 = sphi 0, %s132
    $region4: #{my_cnn_forward.4} parent=1 // loop_header_branch
      %14 = sbr.rel (%p12) target = $region8
    $region5: #{my_cnn_forward.4} parent=1 // loop_body
      %s16 = ssub.s32 %s11, 1
      %s17 = ssub.s32 %s11, 2
      %s18 = sadd.s32 %s11, 1
      %s19 = ssub.s32 %s11, %s18
      %p20 = scmp.eq.s32.totalorder %s19, 0
      %s22 = sadd.s32 %s21, 1
      %s23 = scalar_select %p20, %s21, %s22
      %p26 = pneg %p20
      %p27 = scmp.eq.s32.totalorder %s11, 8
      %p28 = por %p26, %p27
      %p29 = scmp.ne.s32.totalorder %s21, %s24
      %p30 = scmp.eq.s32.totalorder %s11, 0
      %p31 = por %p29, %p30
      %p32 = scmp.ne.s32.totalorder %s21, %s24
      %p33 = scmp.eq.s32.totalorder %s16, 8
      %p34 = por %p32, %p33
      %p35 = scmp.ne.s32.totalorder %s24, %s25
      %p36 = scmp.eq.s32.totalorder %s16, 0
      %p37 = por %p35, %p36
      %p38 = scmp.ne.s32.totalorder %s24, %s25
      %p39 = scmp.eq.s32.totalorder %s17, 8
      %p40 = por %p38, %p39
      %p42 = scmp.ne.s32.totalorder %s25, %s41
      %p43 = scmp.eq.s32.totalorder %s17, 0
      %p44 = por %p42, %p43
      %s46 = sadd.s32 %s45, 1
      %p49 = scmp.eq.s32.totalorder %s11, 8
      %p50 = scmp.ne.s32.totalorder %s45, %s47
      %p51 = scmp.eq.s32.totalorder %s11, 0
      %p52 = por %p50, %p51
      %p53 = scmp.ne.s32.totalorder %s45, %s47
      %p54 = scmp.eq.s32.totalorder %s16, 8
      %p55 = por %p53, %p54
      %p56 = scmp.ne.s32.totalorder %s47, %s48
      %p57 = scmp.eq.s32.totalorder %s16, 0
      %p58 = por %p56, %p57
      %p59 = scmp.ne.s32.totalorder %s47, %s48
      %p60 = scmp.eq.s32.totalorder %s17, 8
      %p61 = por %p59, %p60
      %p63 = scmp.ne.s32.totalorder %s48, %s62
      %p64 = scmp.eq.s32.totalorder %s17, 0
      %p65 = por %p63, %p64
      %s67 = sadd.s32 %s66, 1
      %p70 = scmp.eq.s32.totalorder %s11, 8
      %p71 = scmp.ne.s32.totalorder %s66, %s68
      %p72 = scmp.eq.s32.totalorder %s11, 0
      %p73 = por %p71, %p72
      %p74 = scmp.ne.s32.totalorder %s66, %s68
      %p75 = scmp.eq.s32.totalorder %s16, 8
      %p76 = por %p74, %p75
      %p77 = scmp.ne.s32.totalorder %s68, %s69
      %p78 = scmp.eq.s32.totalorder %s16, 0
      %p79 = por %p77, %p78
      %p80 = scmp.ne.s32.totalorder %s68, %s69
      %p81 = scmp.eq.s32.totalorder %s17, 8
      %p82 = por %p80, %p81
      %p84 = scmp.ne.s32.totalorder %s69, %s83
      %p85 = scmp.eq.s32.totalorder %s17, 0
      %p86 = por %p84, %p85
      %s88 = sadd.s32 %s87, 1
      %p91 = scmp.eq.s32.totalorder %s11, 8
      %p92 = scmp.ne.s32.totalorder %s87, %s89
      %p93 = scmp.eq.s32.totalorder %s11, 0
      %p94 = por %p92, %p93
      %p95 = scmp.ne.s32.totalorder %s87, %s89
      %p96 = scmp.eq.s32.totalorder %s16, 8
      %p97 = por %p95, %p96
      %p98 = scmp.ne.s32.totalorder %s89, %s90
      %p99 = scmp.eq.s32.totalorder %s16, 0
      %p100 = por %p98, %p99
      %p101 = scmp.ne.s32.totalorder %s89, %s90
      %p102 = scmp.eq.s32.totalorder %s17, 8
      %p103 = por %p101, %p102
      %p105 = scmp.ne.s32.totalorder %s90, %s104
      %p106 = scmp.eq.s32.totalorder %s17, 0
      %p107 = por %p105, %p106
      %s109 = sadd.s32 %s108, 1
      %p112 = scmp.eq.s32.totalorder %s11, 8
      %p113 = scmp.ne.s32.totalorder %s108, %s110
      %p114 = scmp.eq.s32.totalorder %s11, 0
      %p115 = por %p113, %p114
      %p116 = scmp.ne.s32.totalorder %s108, %s110
      %p117 = scmp.eq.s32.totalorder %s16, 8
      %p118 = por %p116, %p117
      %p119 = scmp.ne.s32.totalorder %s110, %s111
      %p120 = scmp.eq.s32.totalorder %s16, 0
      %p121 = por %p119, %p120
      %p122 = scmp.ne.s32.totalorder %s110, %s111
      %p123 = scmp.eq.s32.totalorder %s17, 8
      %p124 = por %p122, %p123
      %p126 = scmp.ne.s32.totalorder %s111, %s125
      %p127 = scmp.eq.s32.totalorder %s17, 0
      %p128 = por %p126, %p127
      %s130 = sadd.s32 %s129, 1
      %p133 = scmp.eq.s32.totalorder %s11, 8
      %p134 = scmp.ne.s32.totalorder %s129, %s131
      %p135 = scmp.eq.s32.totalorder %s11, 0
      %p136 = por %p134, %p135
      %p137 = scmp.ne.s32.totalorder %s129, %s131
      %p138 = scmp.eq.s32.totalorder %s16, 8
      %p139 = por %p137, %p138
      %p140 = scmp.ne.s32.totalorder %s131, %s132
      %p141 = scmp.eq.s32.totalorder %s16, 0
      %p142 = por %p140, %p141
      %p143 = scmp.ne.s32.totalorder %s131, %s132
      %p144 = scmp.eq.s32.totalorder %s17, 8
      %p145 = por %p143, %p144
      %p147 = scmp.ne.s32.totalorder %s132, %s146
      %p148 = scmp.eq.s32.totalorder %s17, 0
      %p149 = por %p147, %p148
      %p150 = scmp.le.s32.totalorder 1, %s11
      %p151 = scmp.lt.s32.totalorder %s11, 10
      %p152 = pnand %p150, %p151
      %p153 = pneg %p152
      // Predicated region
      $region9: #{my_cnn_forward.4} parent=5 // pred_check
        _
      $region10: #{my_cnn_forward.4} parent=5 // pred_check_branch
        %155 = sbr.rel (%p152) target = $region12
      $region11: #{my_cnn_forward.4} parent=5 // pred_region
        %s156 = ssub.s32 %s11, 1
        // Predicated region
        $region13: #{my_cnn_forward.4} parent=11 // pred_check
          %p157 = pneg %p58
        $region14: #{my_cnn_forward.4} parent=11 // pred_check_branch
          %159 = sbr.rel (%p157) target = $region16
        $region15: #{my_cnn_forward.4} parent=11 // pred_region
          _
        $region16: #{my_cnn_forward.4} parent=11 // pred_fallthru
          _
        // Predicated region
        $region17: #{my_cnn_forward.4} parent=11 // pred_check
          %p160 = pneg %p79
        $region18: #{my_cnn_forward.4} parent=11 // pred_check_branch
          %162 = sbr.rel (%p160) target = $region20
        $region19: #{my_cnn_forward.4} parent=11 // pred_region
          _
        $region20: #{my_cnn_forward.4} parent=11 // pred_fallthru
          _
        // Predicated region
        $region21: #{my_cnn_forward.4} parent=11 // pred_check
          %p163 = pneg %p100
        $region22: #{my_cnn_forward.4} parent=11 // pred_check_branch
          %165 = sbr.rel (%p163) target = $region24
        $region23: #{my_cnn_forward.4} parent=11 // pred_region
          _
        $region24: #{my_cnn_forward.4} parent=11 // pred_fallthru
          _
        // Predicated region
        $region25: #{my_cnn_forward.4} parent=11 // pred_check
          %p166 = pneg %p121
        $region26: #{my_cnn_forward.4} parent=11 // pred_check_branch
          %168 = sbr.rel (%p166) target = $region28
        $region27: #{my_cnn_forward.4} parent=11 // pred_region
          _
        $region28: #{my_cnn_forward.4} parent=11 // pred_fallthru
          _
      $region12: #{my_cnn_forward.4} parent=5 // pred_fallthru
        _
      %p169 = scmp.lt.s32.totalorder %s11, 9
      // Predicated region
      $region29: #{my_cnn_forward.4} parent=5 // pred_check
        %p170 = pneg %p169
      $region30: #{my_cnn_forward.4} parent=5 // pred_check_branch
        %172 = sbr.rel (%p170) target = $region32
      $region31: #{my_cnn_forward.4} parent=5 // pred_region
        // Predicated region
        $region33: #{my_cnn_forward.4} parent=31 // pred_check
          %p173 = pneg %p31
        $region34: #{my_cnn_forward.4} parent=31 // pred_check_branch
          %175 = sbr.rel (%p173) target = $region36
        $region35: #{my_cnn_forward.4} parent=31 // pred_region
          %s176 = sand.u32 %s21, 1
          %s177 = sand.u32 %s21, 1
          %s178 = smul.addr %s177, 512
          %s179 = scalar_lea.vmem [#allocation4], %s178
          %s180 = smul.u32 32, %s11
          %s181 = smul.addr %s180, 4
          %s182 = scalar_lea.vmem %s0, %s181
          // Predicated region
          $region37: #{my_cnn_forward.4} parent=35 // pred_check
            _
          $region38: #{my_cnn_forward.4} parent=35 // pred_check_branch
            %184 = sbr.rel (0) target = $region40
          $region39: #{my_cnn_forward.4} parent=35 // pred_region
            // Predicated region
            $region41: #{my_cnn_forward.4} parent=39 // pred_check
              _
            $region42: #{my_cnn_forward.4} parent=39 // pred_check_branch
              %186 = sbr.rel (0) target = $region44
            $region43: #{my_cnn_forward.4} parent=39 // pred_region
              loop: start=0, step=1, limit=1
              $region45: #{my_cnn_forward.4} parent=43 // loop_pre_header
                _
              $region46: #{my_cnn_forward.4} parent=43 // loop_header
                %s188 = sphi 0, %s192
                %p189 = scmp.ge.s32.totalorder %s188, 1
                %s193 = sphi %s182, %s182
                %s194 = sphi %s179, %s179
              $region47: #{my_cnn_forward.4} parent=43 // loop_header_branch
                %191 = sbr.rel (%p189) target = $region51
              $region48: #{my_cnn_forward.4} parent=43 // loop_body
                %v195 = vld [vmem:[%s193] sm:$0xff]
                %196 = vst [vmem:[%s194] sm:$0xff] %v195
                %v197 = vld [vmem:[%s193 + $0x8] sm:$0xff]
                %198 = vst [vmem:[%s194 + $0x8] sm:$0xff] %v197
                %v199 = vld [vmem:[%s193 + $0x10] sm:$0xff]
                %200 = vst [vmem:[%s194 + $0x10] sm:$0xff] %v199
                %v201 = vld [vmem:[%s193 + $0x18] sm:$0xff]
                %202 = vst [vmem:[%s194 + $0x18] sm:$0xff] %v201
                %v203 = vld [vmem:[%s193 + $0x20] sm:$0xff]
                %204 = vst [vmem:[%s194 + $0x20] sm:$0xff] %v203
                %v205 = vld [vmem:[%s193 + $0x28] sm:$0xff]
                %206 = vst [vmem:[%s194 + $0x28] sm:$0xff] %v205
                %v207 = vld [vmem:[%s193 + $0x30] sm:$0xff]
                %208 = vst [vmem:[%s194 + $0x30] sm:$0xff] %v207
                %v209 = vld [vmem:[%s193 + $0x38] sm:$0xff]
                %210 = vst [vmem:[%s194 + $0x38] sm:$0xff] %v209
                %v211 = vld [vmem:[%s193 + $0x40] sm:$0xff]
                %212 = vst [vmem:[%s194 + $0x40] sm:$0xff] %v211
                %v213 = vld [vmem:[%s193 + $0x48] sm:$0xff]
                %214 = vst [vmem:[%s194 + $0x48] sm:$0xff] %v213
                %v215 = vld [vmem:[%s193 + $0x50] sm:$0xff]
                %216 = vst [vmem:[%s194 + $0x50] sm:$0xff] %v215
                %v217 = vld [vmem:[%s193 + $0x58] sm:$0xff]
                %218 = vst [vmem:[%s194 + $0x58] sm:$0xff] %v217
                %v219 = vld [vmem:[%s193 + $0x60] sm:$0xff]
                %220 = vst [vmem:[%s194 + $0x60] sm:$0xff] %v219
                %v221 = vld [vmem:[%s193 + $0x68] sm:$0xff]
                %222 = vst [vmem:[%s194 + $0x68] sm:$0xff] %v221
                %v223 = vld [vmem:[%s193 + $0x70] sm:$0xff]
                %224 = vst [vmem:[%s194 + $0x70] sm:$0xff] %v223
                %v225 = vld [vmem:[%s193 + $0x78] sm:$0xff]
                %226 = vst [vmem:[%s194 + $0x78] sm:$0xff] %v225
                %v227 = vld [vmem:[%s193 + $0x480] sm:$0xff]
                %228 = vst [vmem:[%s194 + $0x80] sm:$0xff] %v227
                %v229 = vld [vmem:[%s193 + $0x488] sm:$0xff]
                %230 = vst [vmem:[%s194 + $0x88] sm:$0xff] %v229
                %v231 = vld [vmem:[%s193 + $0x490] sm:$0xff]
                %232 = vst [vmem:[%s194 + $0x90] sm:$0xff] %v231
                %v233 = vld [vmem:[%s193 + $0x498] sm:$0xff]
                %234 = vst [vmem:[%s194 + $0x98] sm:$0xff] %v233
                %v235 = vld [vmem:[%s193 + $0x4a0] sm:$0xff]
                %236 = vst [vmem:[%s194 + $0xa0] sm:$0xff] %v235
                %v237 = vld [vmem:[%s193 + $0x4a8] sm:$0xff]
                %238 = vst [vmem:[%s194 + $0xa8] sm:$0xff] %v237
                %v239 = vld [vmem:[%s193 + $0x4b0] sm:$0xff]
                %240 = vst [vmem:[%s194 + $0xb0] sm:$0xff] %v239
                %v241 = vld [vmem:[%s193 + $0x4b8] sm:$0xff]
                %242 = vst [vmem:[%s194 + $0xb8] sm:$0xff] %v241
                %v243 = vld [vmem:[%s193 + $0x4c0] sm:$0xff]
                %244 = vst [vmem:[%s194 + $0xc0] sm:$0xff] %v243
                %v245 = vld [vmem:[%s193 + $0x4c8] sm:$0xff]
                %246 = vst [vmem:[%s194 + $0xc8] sm:$0xff] %v245
                %v247 = vld [vmem:[%s193 + $0x4d0] sm:$0xff]
                %248 = vst [vmem:[%s194 + $0xd0] sm:$0xff] %v247
                %v249 = vld [vmem:[%s193 + $0x4d8] sm:$0xff]
                %250 = vst [vmem:[%s194 + $0xd8] sm:$0xff] %v249
                %v251 = vld [vmem:[%s193 + $0x4e0] sm:$0xff]
                %252 = vst [vmem:[%s194 + $0xe0] sm:$0xff] %v251
                %v253 = vld [vmem:[%s193 + $0x4e8] sm:$0xff]
                %254 = vst [vmem:[%s194 + $0xe8] sm:$0xff] %v253
                %v255 = vld [vmem:[%s193 + $0x4f0] sm:$0xff]
                %256 = vst [vmem:[%s194 + $0xf0] sm:$0xff] %v255
                %v257 = vld [vmem:[%s193 + $0x4f8] sm:$0xff]
                %258 = vst [vmem:[%s194 + $0xf8] sm:$0xff] %v257
                %v259 = vld [vmem:[%s193 + $0x900] sm:$0xff]
                %260 = vst [vmem:[%s194 + $0x100] sm:$0xff] %v259
                %v261 = vld [vmem:[%s193 + $0x908] sm:$0xff]
                %262 = vst [vmem:[%s194 + $0x108] sm:$0xff] %v261
                %v263 = vld [vmem:[%s193 + $0x910] sm:$0xff]
                %264 = vst [vmem:[%s194 + $0x110] sm:$0xff] %v263
                %v265 = vld [vmem:[%s193 + $0x918] sm:$0xff]
                %266 = vst [vmem:[%s194 + $0x118] sm:$0xff] %v265
                %v267 = vld [vmem:[%s193 + $0x920] sm:$0xff]
                %268 = vst [vmem:[%s194 + $0x120] sm:$0xff] %v267
                %v269 = vld [vmem:[%s193 + $0x928] sm:$0xff]
                %270 = vst [vmem:[%s194 + $0x128] sm:$0xff] %v269
                %v271 = vld [vmem:[%s193 + $0x930] sm:$0xff]
                %272 = vst [vmem:[%s194 + $0x130] sm:$0xff] %v271
                %v273 = vld [vmem:[%s193 + $0x938] sm:$0xff]
                %274 = vst [vmem:[%s194 + $0x138] sm:$0xff] %v273
                %v275 = vld [vmem:[%s193 + $0x940] sm:$0xff]
                %276 = vst [vmem:[%s194 + $0x140] sm:$0xff] %v275
                %v277 = vld [vmem:[%s193 + $0x948] sm:$0xff]
                %278 = vst [vmem:[%s194 + $0x148] sm:$0xff] %v277
                %v279 = vld [vmem:[%s193 + $0x950] sm:$0xff]
                %280 = vst [vmem:[%s194 + $0x150] sm:$0xff] %v279
                %v281 = vld [vmem:[%s193 + $0x958] sm:$0xff]
                %282 = vst [vmem:[%s194 + $0x158] sm:$0xff] %v281
                %v283 = vld [vmem:[%s193 + $0x960] sm:$0xff]
                %284 = vst [vmem:[%s194 + $0x160] sm:$0xff] %v283
                %v285 = vld [vmem:[%s193 + $0x968] sm:$0xff]
                %286 = vst [vmem:[%s194 + $0x168] sm:$0xff] %v285
                %v287 = vld [vmem:[%s193 + $0x970] sm:$0xff]
                %288 = vst [vmem:[%s194 + $0x170] sm:$0xff] %v287
                %v289 = vld [vmem:[%s193 + $0x978] sm:$0xff]
                %290 = vst [vmem:[%s194 + $0x178] sm:$0xff] %v289
                %v291 = vld [vmem:[%s193 + $0xd80] sm:$0xff]
                %292 = vst [vmem:[%s194 + $0x180] sm:$0xff] %v291
                %v293 = vld [vmem:[%s193 + $0xd88] sm:$0xff]
                %294 = vst [vmem:[%s194 + $0x188] sm:$0xff] %v293
                %v295 = vld [vmem:[%s193 + $0xd90] sm:$0xff]
                %296 = vst [vmem:[%s194 + $0x190] sm:$0xff] %v295
                %v297 = vld [vmem:[%s193 + $0xd98] sm:$0xff]
                %298 = vst [vmem:[%s194 + $0x198] sm:$0xff] %v297
                %v299 = vld [vmem:[%s193 + $0xda0] sm:$0xff]
                %300 = vst [vmem:[%s194 + $0x1a0] sm:$0xff] %v299
                %v301 = vld [vmem:[%s193 + $0xda8] sm:$0xff]
                %302 = vst [vmem:[%s194 + $0x1a8] sm:$0xff] %v301
                %v303 = vld [vmem:[%s193 + $0xdb0] sm:$0xff]
                %304 = vst [vmem:[%s194 + $0x1b0] sm:$0xff] %v303
                %v305 = vld [vmem:[%s193 + $0xdb8] sm:$0xff]
                %306 = vst [vmem:[%s194 + $0x1b8] sm:$0xff] %v305
                %v307 = vld [vmem:[%s193 + $0xdc0] sm:$0xff]
                %308 = vst [vmem:[%s194 + $0x1c0] sm:$0xff] %v307
                %v309 = vld [vmem:[%s193 + $0xdc8] sm:$0xff]
                %310 = vst [vmem:[%s194 + $0x1c8] sm:$0xff] %v309
                %v311 = vld [vmem:[%s193 + $0xdd0] sm:$0xff]
                %312 = vst [vmem:[%s194 + $0x1d0] sm:$0xff] %v311
                %v313 = vld [vmem:[%s193 + $0xdd8] sm:$0xff]
                %314 = vst [vmem:[%s194 + $0x1d8] sm:$0xff] %v313
                %v315 = vld [vmem:[%s193 + $0xde0] sm:$0xff]
                %316 = vst [vmem:[%s194 + $0x1e0] sm:$0xff] %v315
                %v317 = vld [vmem:[%s193 + $0xde8] sm:$0xff]
                %318 = vst [vmem:[%s194 + $0x1e8] sm:$0xff] %v317
                %v319 = vld [vmem:[%s193 + $0xdf0] sm:$0xff]
                %320 = vst [vmem:[%s194 + $0x1f0] sm:$0xff] %v319
                %v321 = vld [vmem:[%s193 + $0xdf8] sm:$0xff]
                %322 = vst [vmem:[%s194 + $0x1f8] sm:$0xff] %v321
              $region49: #{my_cnn_forward.4} parent=43 // loop_footer
                %s192 = sadd.s32 1, %s188
              $region50: #{my_cnn_forward.4} parent=43 // loop_footer_branch
                %187 = sbr.rel target = $region46
              $region51: #{my_cnn_forward.4} parent=43 // loop_exit
                _
            $region44: #{my_cnn_forward.4} parent=39 // pred_fallthru
              _
            // Predicated region
            $region52: #{my_cnn_forward.4} parent=39 // pred_check
              _
            $region53: #{my_cnn_forward.4} parent=39 // pred_check_branch
              %324 = sbr.rel target = $region55
            $region54: #{my_cnn_forward.4} parent=39 // pred_region
              _
            $region55: #{my_cnn_forward.4} parent=39 // pred_fallthru
              _
          $region40: #{my_cnn_forward.4} parent=35 // pred_fallthru
            _
          %325 = vnop
        $region36: #{my_cnn_forward.4} parent=31 // pred_fallthru
          _
      $region32: #{my_cnn_forward.4} parent=5 // pred_fallthru
        _
      %p326 = scmp.le.s32.totalorder 1, %s11
      %p327 = scmp.lt.s32.totalorder %s11, 10
      %p328 = pnand %p326, %p327
      %p329 = pneg %p328
      // Predicated region
      $region56: #{my_cnn_forward.4} parent=5 // pred_check
        _
      $region57: #{my_cnn_forward.4} parent=5 // pred_check_branch
        %331 = sbr.rel (%p328) target = $region59
      $region58: #{my_cnn_forward.4} parent=5 // pred_region
        %s332 = ssub.s32 %s11, 1
        %s333 = sand.u32 %s24, 1
        %s334 = sand.u32 %s24, 1
        %s335 = smul.addr %s334, 512
        %s336 = scalar_lea.vmem [#allocation4], %s335
        // Predicated region
        $region60: #{my_cnn_forward.4} parent=58 // pred_check
          %p337 = pneg %p37
        $region61: #{my_cnn_forward.4} parent=58 // pred_check_branch
          %339 = sbr.rel (%p337) target = $region63
        $region62: #{my_cnn_forward.4} parent=58 // pred_region
          _
        $region63: #{my_cnn_forward.4} parent=58 // pred_fallthru
          _
        %s340 = sand.u32 %s24, 1
        %s341 = sand.u32 %s24, 1
        %s342 = smul.addr %s341, 512
        %s343 = scalar_lea.vmem [#allocation4], %s342
        %p344 = pneg %p37
        %p345 = pneg %p34
        %p346 = pneg %p58
        %p347 = pneg %p55
        %p348 = pneg %p79
        %p349 = pneg %p76
        %p350 = pneg %p100
        %p351 = pneg %p97
        %p352 = pneg %p121
        %p353 = pneg %p118
        %p354 = pneg %p142
        %p355 = pneg %p139
        %s356 = smul.u32 32, %s16
        %p358 = scmp.eq.s32.totalorder %s16, 0
        // Predicated region
        $region64: #{my_cnn_forward.4} parent=58 // pred_check
          %p359 = pneg %p358
        $region65: #{my_cnn_forward.4} parent=58 // pred_check_branch
          %361 = sbr.rel (%p359) target = $region67
        $region66: #{my_cnn_forward.4} parent=58 // pred_region
          %vm362 = vcmask 7168
          %363 = vst.msk [vmem:[#allocation2] sm:$0xff] %vm362, 0.0
          %364 = vst.msk [vmem:[#allocation2 + $0x8] sm:$0xff] %vm362, 0.0
          %365 = vst.msk [vmem:[#allocation3] sm:$0xff] %vm362, 0.0
          %366 = vst.msk [vmem:[#allocation3 + $0x8] sm:$0xff] %vm362, 0.0
        $region67: #{my_cnn_forward.4} parent=58 // pred_fallthru
          _
        %v367 = vld [vmem:[%s1] sm:$0xf]
        %v368 = vld [vmem:[%s1 + $0x4] sm:$0xf]
        %v369 = vld [vmem:[%s336] sm:$0xff]
        %v370 = vld [vmem:[%s336 + $0x8] sm:$0xff]
        %v371 = vld [vmem:[%s336 + $0x10] sm:$0xff]
        %v372 = vld [vmem:[%s336 + $0x18] sm:$0xff]
        %v373 = vld [vmem:[%s336 + $0x20] sm:$0xff]
        %v374 = vld [vmem:[%s336 + $0x28] sm:$0xff]
        %v375 = vld [vmem:[%s336 + $0x30] sm:$0xff]
        %v376 = vld [vmem:[%s336 + $0x38] sm:$0xff]
        %v377 = vld [vmem:[%s336 + $0x40] sm:$0xff]
        %v378 = vld [vmem:[%s336 + $0x48] sm:$0xff]
        %v379 = vld [vmem:[%s336 + $0x50] sm:$0xff]
        %v380 = vld [vmem:[%s336 + $0x58] sm:$0xff]
        %v381 = vld [vmem:[%s336 + $0x60] sm:$0xff]
        %v382 = vld [vmem:[%s336 + $0x68] sm:$0xff]
        %v383 = vld [vmem:[%s336 + $0x70] sm:$0xff]
        %v384 = vld [vmem:[%s336 + $0x78] sm:$0xff]
        %v385 = vld [vmem:[%s336 + $0x80] sm:$0xff]
        %v386 = vld [vmem:[%s336 + $0x88] sm:$0xff]
        %v387 = vld [vmem:[%s336 + $0x90] sm:$0xff]
        %v388 = vld [vmem:[%s336 + $0x98] sm:$0xff]
        %v389 = vld [vmem:[%s336 + $0xa0] sm:$0xff]
        %v390 = vld [vmem:[%s336 + $0xa8] sm:$0xff]
        %v391 = vld [vmem:[%s336 + $0xb0] sm:$0xff]
        %v392 = vld [vmem:[%s336 + $0xb8] sm:$0xff]
        %v393 = vld [vmem:[%s336 + $0xc0] sm:$0xff]
        %v394 = vld [vmem:[%s336 + $0xc8] sm:$0xff]
        %v395 = vld [vmem:[%s336 + $0xd0] sm:$0xff]
        %v396 = vld [vmem:[%s336 + $0xd8] sm:$0xff]
        %v397 = vld [vmem:[%s336 + $0xe0] sm:$0xff]
        %v398 = vld [vmem:[%s336 + $0xe8] sm:$0xff]
        %v399 = vld [vmem:[%s336 + $0xf0] sm:$0xff]
        %v400 = vld [vmem:[%s336 + $0xf8] sm:$0xff]
        %v401 = vld [vmem:[%s336 + $0x100] sm:$0xff]
        %v402 = vld [vmem:[%s336 + $0x108] sm:$0xff]
        %v403 = vld [vmem:[%s336 + $0x110] sm:$0xff]
        %v404 = vld [vmem:[%s336 + $0x118] sm:$0xff]
        %v405 = vld [vmem:[%s336 + $0x120] sm:$0xff]
        %v406 = vld [vmem:[%s336 + $0x128] sm:$0xff]
        %v407 = vld [vmem:[%s336 + $0x130] sm:$0xff]
        %v408 = vld [vmem:[%s336 + $0x138] sm:$0xff]
        %v409 = vld [vmem:[%s336 + $0x140] sm:$0xff]
        %v410 = vld [vmem:[%s336 + $0x148] sm:$0xff]
        %v411 = vld [vmem:[%s336 + $0x150] sm:$0xff]
        %v412 = vld [vmem:[%s336 + $0x158] sm:$0xff]
        %v413 = vld [vmem:[%s336 + $0x160] sm:$0xff]
        %v414 = vld [vmem:[%s336 + $0x168] sm:$0xff]
        %v415 = vld [vmem:[%s336 + $0x170] sm:$0xff]
        %v416 = vld [vmem:[%s336 + $0x178] sm:$0xff]
        %v417 = vld [vmem:[%s336 + $0x180] sm:$0xff]
        %v418 = vld [vmem:[%s336 + $0x188] sm:$0xff]
        %v419 = vld [vmem:[%s336 + $0x190] sm:$0xff]
        %v420 = vld [vmem:[%s336 + $0x198] sm:$0xff]
        %v421 = vld [vmem:[%s336 + $0x1a0] sm:$0xff]
        %v422 = vld [vmem:[%s336 + $0x1a8] sm:$0xff]
        %v423 = vld [vmem:[%s336 + $0x1b0] sm:$0xff]
        %v424 = vld [vmem:[%s336 + $0x1b8] sm:$0xff]
        %v425 = vld [vmem:[%s336 + $0x1c0] sm:$0xff]
        %v426 = vld [vmem:[%s336 + $0x1c8] sm:$0xff]
        %v427 = vld [vmem:[%s336 + $0x1d0] sm:$0xff]
        %v428 = vld [vmem:[%s336 + $0x1d8] sm:$0xff]
        %v429 = vld [vmem:[%s336 + $0x1e0] sm:$0xff]
        %v430 = vld [vmem:[%s336 + $0x1e8] sm:$0xff]
        %v431 = vld [vmem:[%s336 + $0x1f0] sm:$0xff]
        %v432 = vld [vmem:[%s336 + $0x1f8] sm:$0xff]
        %v433 = vld [vmem:[%s2] sm:$0xff]
        %v434 = vld [vmem:[%s2 + $0x8] sm:$0xff]
        %436 = vset.pattern.permute.xlu0 0
        %437 = vperm.xlu0 %436, %v433
        %v438 = vpop.permute.xlu0 %437
        %441 = vset.pattern.permute.xlu0 0
        %442 = vperm.xlu0 %441, %v434
        %v443 = vpop.permute.xlu0 %442
        %v447 = vunpack.c.l.b16 %v367
        %v448 = vunpack.c.l.b16 %v368
        %v449 = vpack.c.b16 %v448, %v447
        %v514 = vunpack.c.l.b16 %v369
        %v515 = vunpack.c.h.b16 %v369
        %v516 = vunpack.c.l.b16 %v370
        %v517 = vunpack.c.h.b16 %v370
        %v518 = vunpack.c.l.b16 %v371
        %v519 = vunpack.c.h.b16 %v371
        %v520 = vunpack.c.l.b16 %v372
        %v521 = vunpack.c.h.b16 %v372
        %v522 = vunpack.c.l.b16 %v373
        %v523 = vunpack.c.h.b16 %v373
        %v524 = vunpack.c.l.b16 %v374
        %v525 = vunpack.c.h.b16 %v374
        %v526 = vunpack.c.l.b16 %v375
        %v527 = vunpack.c.h.b16 %v375
        %v528 = vunpack.c.l.b16 %v376
        %v529 = vunpack.c.h.b16 %v376
        %v530 = vunpack.c.l.b16 %v377
        %v531 = vunpack.c.h.b16 %v377
        %v532 = vunpack.c.l.b16 %v378
        %v533 = vunpack.c.h.b16 %v378
        %v534 = vunpack.c.l.b16 %v379
        %v535 = vunpack.c.h.b16 %v379
        %v536 = vunpack.c.l.b16 %v380
        %v537 = vunpack.c.h.b16 %v380
        %v538 = vunpack.c.l.b16 %v381
        %v539 = vunpack.c.h.b16 %v381
        %v540 = vunpack.c.l.b16 %v382
        %v541 = vunpack.c.h.b16 %v382
        %v542 = vunpack.c.l.b16 %v383
        %v543 = vunpack.c.h.b16 %v383
        %v544 = vunpack.c.l.b16 %v384
        %v545 = vunpack.c.h.b16 %v384
        %v546 = vunpack.c.l.b16 %v385
        %v547 = vunpack.c.h.b16 %v385
        %v548 = vunpack.c.l.b16 %v386
        %v549 = vunpack.c.h.b16 %v386
        %v550 = vunpack.c.l.b16 %v387
        %v551 = vunpack.c.h.b16 %v387
        %v552 = vunpack.c.l.b16 %v388
        %v553 = vunpack.c.h.b16 %v388
        %v554 = vunpack.c.l.b16 %v389
        %v555 = vunpack.c.h.b16 %v389
        %v556 = vunpack.c.l.b16 %v390
        %v557 = vunpack.c.h.b16 %v390
        %v558 = vunpack.c.l.b16 %v391
        %v559 = vunpack.c.h.b16 %v391
        %v560 = vunpack.c.l.b16 %v392
        %v561 = vunpack.c.h.b16 %v392
        %v562 = vunpack.c.l.b16 %v393
        %v563 = vunpack.c.h.b16 %v393
        %v564 = vunpack.c.l.b16 %v394
        %v565 = vunpack.c.h.b16 %v394
        %v566 = vunpack.c.l.b16 %v395
        %v567 = vunpack.c.h.b16 %v395
        %v568 = vunpack.c.l.b16 %v396
        %v569 = vunpack.c.h.b16 %v396
        %v570 = vunpack.c.l.b16 %v397
        %v571 = vunpack.c.h.b16 %v397
        %v572 = vunpack.c.l.b16 %v398
        %v573 = vunpack.c.h.b16 %v398
        %v574 = vunpack.c.l.b16 %v399
        %v575 = vunpack.c.h.b16 %v399
        %v576 = vunpack.c.l.b16 %v400
        %v577 = vunpack.c.h.b16 %v400
        %v578 = vunpack.c.l.b16 %v401
        %v579 = vunpack.c.h.b16 %v401
        %v580 = vunpack.c.l.b16 %v402
        %v581 = vunpack.c.h.b16 %v402
        %v582 = vunpack.c.l.b16 %v403
        %v583 = vunpack.c.h.b16 %v403
        %v584 = vunpack.c.l.b16 %v404
        %v585 = vunpack.c.h.b16 %v404
        %v586 = vunpack.c.l.b16 %v405
        %v587 = vunpack.c.h.b16 %v405
        %v588 = vunpack.c.l.b16 %v406
        %v589 = vunpack.c.h.b16 %v406
        %v590 = vunpack.c.l.b16 %v407
        %v591 = vunpack.c.h.b16 %v407
        %v592 = vunpack.c.l.b16 %v408
        %v593 = vunpack.c.h.b16 %v408
        %v594 = vunpack.c.l.b16 %v409
        %v595 = vunpack.c.h.b16 %v409
        %v596 = vunpack.c.l.b16 %v410
        %v597 = vunpack.c.h.b16 %v410
        %v598 = vunpack.c.l.b16 %v411
        %v599 = vunpack.c.h.b16 %v411
        %v600 = vunpack.c.l.b16 %v412
        %v601 = vunpack.c.h.b16 %v412
        %v602 = vunpack.c.l.b16 %v413
        %v603 = vunpack.c.h.b16 %v413
        %v604 = vunpack.c.l.b16 %v414
        %v605 = vunpack.c.h.b16 %v414
        %v606 = vunpack.c.l.b16 %v415
        %v607 = vunpack.c.h.b16 %v415
        %v608 = vunpack.c.l.b16 %v416
        %v609 = vunpack.c.h.b16 %v416
        %v610 = vunpack.c.l.b16 %v417
        %v611 = vunpack.c.h.b16 %v417
        %v612 = vunpack.c.l.b16 %v418
        %v613 = vunpack.c.h.b16 %v418
        %v614 = vunpack.c.l.b16 %v419
        %v615 = vunpack.c.h.b16 %v419
        %v616 = vunpack.c.l.b16 %v420
        %v617 = vunpack.c.h.b16 %v420
        %v618 = vunpack.c.l.b16 %v421
        %v619 = vunpack.c.h.b16 %v421
        %v620 = vunpack.c.l.b16 %v422
        %v621 = vunpack.c.h.b16 %v422
        %v622 = vunpack.c.l.b16 %v423
        %v623 = vunpack.c.h.b16 %v423
        %v624 = vunpack.c.l.b16 %v424
        %v625 = vunpack.c.h.b16 %v424
        %v626 = vunpack.c.l.b16 %v425
        %v627 = vunpack.c.h.b16 %v425
        %v628 = vunpack.c.l.b16 %v426
        %v629 = vunpack.c.h.b16 %v426
        %v630 = vunpack.c.l.b16 %v427
        %v631 = vunpack.c.h.b16 %v427
        %v632 = vunpack.c.l.b16 %v428
        %v633 = vunpack.c.h.b16 %v428
        %v634 = vunpack.c.l.b16 %v429
        %v635 = vunpack.c.h.b16 %v429
        %v636 = vunpack.c.l.b16 %v430
        %v637 = vunpack.c.h.b16 %v430
        %v638 = vunpack.c.l.b16 %v431
        %v639 = vunpack.c.h.b16 %v431
        %v640 = vunpack.c.l.b16 %v432
        %v641 = vunpack.c.h.b16 %v432
        %v642 = vpack.c.b16 %v546, %v514
        %v643 = vpack.c.b16 %v547, %v515
        %v644 = vpack.c.b16 %v548, %v516
        %v645 = vpack.c.b16 %v549, %v517
        %v646 = vpack.c.b16 %v550, %v518
        %v647 = vpack.c.b16 %v551, %v519
        %v648 = vpack.c.b16 %v552, %v520
        %v649 = vpack.c.b16 %v553, %v521
        %v650 = vpack.c.b16 %v554, %v522
        %v651 = vpack.c.b16 %v555, %v523
        %v652 = vpack.c.b16 %v556, %v524
        %v653 = vpack.c.b16 %v557, %v525
        %v654 = vpack.c.b16 %v558, %v526
        %v655 = vpack.c.b16 %v559, %v527
        %v656 = vpack.c.b16 %v560, %v528
        %v657 = vpack.c.b16 %v561, %v529
        %v658 = vpack.c.b16 %v562, %v530
        %v659 = vpack.c.b16 %v563, %v531
        %v660 = vpack.c.b16 %v564, %v532
        %v661 = vpack.c.b16 %v565, %v533
        %v662 = vpack.c.b16 %v566, %v534
        %v663 = vpack.c.b16 %v567, %v535
        %v664 = vpack.c.b16 %v568, %v536
        %v665 = vpack.c.b16 %v569, %v537
        %v666 = vpack.c.b16 %v570, %v538
        %v667 = vpack.c.b16 %v571, %v539
        %v668 = vpack.c.b16 %v572, %v540
        %v669 = vpack.c.b16 %v573, %v541
        %v670 = vpack.c.b16 %v574, %v542
        %v671 = vpack.c.b16 %v575, %v543
        %v672 = vpack.c.b16 %v576, %v544
        %v673 = vpack.c.b16 %v577, %v545
        %v674 = vpack.c.b16 %v610, %v578
        %v675 = vpack.c.b16 %v611, %v579
        %v676 = vpack.c.b16 %v612, %v580
        %v677 = vpack.c.b16 %v613, %v581
        %v678 = vpack.c.b16 %v614, %v582
        %v679 = vpack.c.b16 %v615, %v583
        %v680 = vpack.c.b16 %v616, %v584
        %v681 = vpack.c.b16 %v617, %v585
        %v682 = vpack.c.b16 %v618, %v586
        %v683 = vpack.c.b16 %v619, %v587
        %v684 = vpack.c.b16 %v620, %v588
        %v685 = vpack.c.b16 %v621, %v589
        %v686 = vpack.c.b16 %v622, %v590
        %v687 = vpack.c.b16 %v623, %v591
        %v688 = vpack.c.b16 %v624, %v592
        %v689 = vpack.c.b16 %v625, %v593
        %v690 = vpack.c.b16 %v626, %v594
        %v691 = vpack.c.b16 %v627, %v595
        %v692 = vpack.c.b16 %v628, %v596
        %v693 = vpack.c.b16 %v629, %v597
        %v694 = vpack.c.b16 %v630, %v598
        %v695 = vpack.c.b16 %v631, %v599
        %v696 = vpack.c.b16 %v632, %v600
        %v697 = vpack.c.b16 %v633, %v601
        %v698 = vpack.c.b16 %v634, %v602
        %v699 = vpack.c.b16 %v635, %v603
        %v700 = vpack.c.b16 %v636, %v604
        %v701 = vpack.c.b16 %v637, %v605
        %v702 = vpack.c.b16 %v638, %v606
        %v703 = vpack.c.b16 %v639, %v607
        %v704 = vpack.c.b16 %v640, %v608
        %v705 = vpack.c.b16 %v641, %v609
        %vm770 = vcmask 261120
        %v772 = vsel %vm770, %v449, 0
        %774 = vmatprep.subr.bf16.mxu0 %v643
        %775 = vmatpush1.bf16.msra.mxu0 %v642
        %776 = vmatprep.subr.bf16.mxu0 %v675
        %777 = vmatpush1.bf16.msra.mxu0 %v674
        %778 = vmatprep.subr.bf16.mxu0 0
        %779 = vmatpush1.bf16.msra.mxu0 0
        %780 = vmatprep.subr.bf16.mxu0 0
        %781 = vmatpush1.bf16.msra.mxu0 0
        %782 = vmatprep.subr.bf16.mxu0 0
        %783 = vmatpush1.bf16.msra.mxu0 0
        %784 = vmatprep.subr.bf16.mxu0 0
        %785 = vmatpush1.bf16.msra.mxu0 0
        %786 = vmatprep.subr.bf16.mxu0 0
        %787 = vmatpush1.bf16.msra.mxu0 0
        %788 = vmatprep.subr.bf16.mxu0 0
        %789 = vmatpush1.bf16.msra.mxu0 0
        %790 = vmatprep.subr.bf16.mxu0 0
        %791 = vmatpush1.bf16.msra.mxu0 0
        %792 = vmatprep.subr.bf16.mxu0 0
        %793 = vmatpush1.bf16.msra.mxu0 0
        %794 = vmatprep.subr.bf16.mxu0 0
        %795 = vmatpush1.bf16.msra.mxu0 0
        %796 = vmatprep.subr.bf16.mxu0 0
        %797 = vmatpush1.bf16.msra.mxu0 0
        %798 = vmatprep.subr.bf16.mxu0 0
        %799 = vmatpush1.bf16.msra.mxu0 0
        %800 = vmatprep.subr.bf16.mxu0 0
        %801 = vmatpush1.bf16.msra.mxu0 0
        %802 = vmatprep.subr.bf16.mxu0 0
        %803 = vmatpush1.bf16.msra.mxu0 0
        %804 = vmatprep.subr.bf16.mxu0 0
        %805 = vmatpush1.bf16.msra.mxu0 0
        %806 = vmatprep.mubr.bf16.mxu0 0
        %807 = vmatmul.mubr.bf16.gmra.mrb[0].mxu0 %v772
        %v808 = vpop.f32.mrb[0].mxu0
        %v809 = vadd.f32 %v438, %v808
        %v810 = vpop.f32.mrb[0].mxu0
        %v811 = vadd.f32 %v438, %v810
        %v812 = vpop.f32.mrb[0].mxu0
        %v813 = vadd.f32 %v443, %v812
        %v814 = vpop.f32.mrb[0].mxu0
        %v815 = vadd.f32 %v443, %v814
        %816 = vdwg.mxu0
        %817 = vmatprep.subr.bf16.mxu0 %v645
        %818 = vmatpush1.bf16.msra.mxu0 %v644
        %819 = vmatprep.subr.bf16.mxu0 %v677
        %820 = vmatpush1.bf16.msra.mxu0 %v676
        %821 = vmatprep.subr.bf16.mxu0 0
        %822 = vmatpush1.bf16.msra.mxu0 0
        %823 = vmatprep.subr.bf16.mxu0 0
        %824 = vmatpush1.bf16.msra.mxu0 0
        %825 = vmatprep.subr.bf16.mxu0 0
        %826 = vmatpush1.bf16.msra.mxu0 0
        %827 = vmatprep.subr.bf16.mxu0 0
        %828 = vmatpush1.bf16.msra.mxu0 0
        %829 = vmatprep.subr.bf16.mxu0 0
        %830 = vmatpush1.bf16.msra.mxu0 0
        %831 = vmatprep.subr.bf16.mxu0 0
        %832 = vmatpush1.bf16.msra.mxu0 0
        %833 = vmatprep.subr.bf16.mxu0 0
        %834 = vmatpush1.bf16.msra.mxu0 0
        %835 = vmatprep.subr.bf16.mxu0 0
        %836 = vmatpush1.bf16.msra.mxu0 0
        %837 = vmatprep.subr.bf16.mxu0 0
        %838 = vmatpush1.bf16.msra.mxu0 0
        %839 = vmatprep.subr.bf16.mxu0 0
        %840 = vmatpush1.bf16.msra.mxu0 0
        %841 = vmatprep.subr.bf16.mxu0 0
        %842 = vmatpush1.bf16.msra.mxu0 0
        %843 = vmatprep.subr.bf16.mxu0 0
        %844 = vmatpush1.bf16.msra.mxu0 0
        %845 = vmatprep.subr.bf16.mxu0 0
        %846 = vmatpush1.bf16.msra.mxu0 0
        %847 = vmatprep.subr.bf16.mxu0 0
        %848 = vmatpush1.bf16.msra.mxu0 0
        %849 = vmatprep.mubr.bf16.mxu0 0
        %850 = vmatmul.mubr.bf16.gmra.mrb[0].mxu0 %v772
        %v851 = vpop.f32.mrb[0].mxu0
        %v852 = vadd.f32 %v438, %v851
        %v853 = vpop.f32.mrb[0].mxu0
        %v854 = vadd.f32 %v438, %v853
        %v855 = vpop.f32.mrb[0].mxu0
        %v856 = vadd.f32 %v443, %v855
        %v857 = vpop.f32.mrb[0].mxu0
        %v858 = vadd.f32 %v443, %v857
        %859 = vdwg.mxu0
        %860 = vmatprep.subr.bf16.mxu0 %v647
        %861 = vmatpush1.bf16.msra.mxu0 %v646
        %862 = vmatprep.subr.bf16.mxu0 %v679
        %863 = vmatpush1.bf16.msra.mxu0 %v678
        %864 = vmatprep.subr.bf16.mxu0 0
        %865 = vmatpush1.bf16.msra.mxu0 0
        %866 = vmatprep.subr.bf16.mxu0 0
        %867 = vmatpush1.bf16.msra.mxu0 0
        %868 = vmatprep.subr.bf16.mxu0 0
        %869 = vmatpush1.bf16.msra.mxu0 0
        %870 = vmatprep.subr.bf16.mxu0 0
        %871 = vmatpush1.bf16.msra.mxu0 0
        %872 = vmatprep.subr.bf16.mxu0 0
        %873 = vmatpush1.bf16.msra.mxu0 0
        %874 = vmatprep.subr.bf16.mxu0 0
        %875 = vmatpush1.bf16.msra.mxu0 0
        %876 = vmatprep.subr.bf16.mxu0 0
        %877 = vmatpush1.bf16.msra.mxu0 0
        %878 = vmatprep.subr.bf16.mxu0 0
        %879 = vmatpush1.bf16.msra.mxu0 0
        %880 = vmatprep.subr.bf16.mxu0 0
        %881 = vmatpush1.bf16.msra.mxu0 0
        %882 = vmatprep.subr.bf16.mxu0 0
        %883 = vmatpush1.bf16.msra.mxu0 0
        %884 = vmatprep.subr.bf16.mxu0 0
        %885 = vmatpush1.bf16.msra.mxu0 0
        %886 = vmatprep.subr.bf16.mxu0 0
        %887 = vmatpush1.bf16.msra.mxu0 0
        %888 = vmatprep.subr.bf16.mxu0 0
        %889 = vmatpush1.bf16.msra.mxu0 0
        %890 = vmatprep.subr.bf16.mxu0 0
        %891 = vmatpush1.bf16.msra.mxu0 0
        %892 = vmatprep.mubr.bf16.mxu0 0
        %893 = vmatmul.mubr.bf16.gmra.mrb[0].mxu0 %v772
        %v894 = vpop.f32.mrb[0].mxu0
        %v895 = vadd.f32 %v438, %v894
        %v896 = vpop.f32.mrb[0].mxu0
        %v897 = vadd.f32 %v438, %v896
        %v898 = vpop.f32.mrb[0].mxu0
        %v899 = vadd.f32 %v443, %v898
        %v900 = vpop.f32.mrb[0].mxu0
        %v901 = vadd.f32 %v443, %v900
        %902 = vdwg.mxu0
        %903 = vmatprep.subr.bf16.mxu0 %v649
        %904 = vmatpush1.bf16.msra.mxu0 %v648
        %905 = vmatprep.subr.bf16.mxu0 %v681
        %906 = vmatpush1.bf16.msra.mxu0 %v680
        %907 = vmatprep.subr.bf16.mxu0 0
        %908 = vmatpush1.bf16.msra.mxu0 0
        %909 = vmatprep.subr.bf16.mxu0 0
        %910 = vmatpush1.bf16.msra.mxu0 0
        %911 = vmatprep.subr.bf16.mxu0 0
        %912 = vmatpush1.bf16.msra.mxu0 0
        %913 = vmatprep.subr.bf16.mxu0 0
        %914 = vmatpush1.bf16.msra.mxu0 0
        %915 = vmatprep.subr.bf16.mxu0 0
        %916 = vmatpush1.bf16.msra.mxu0 0
        %917 = vmatprep.subr.bf16.mxu0 0
        %918 = vmatpush1.bf16.msra.mxu0 0
        %919 = vmatprep.subr.bf16.mxu0 0
        %920 = vmatpush1.bf16.msra.mxu0 0
        %921 = vmatprep.subr.bf16.mxu0 0
        %922 = vmatpush1.bf16.msra.mxu0 0
        %923 = vmatprep.subr.bf16.mxu0 0
        %924 = vmatpush1.bf16.msra.mxu0 0
        %925 = vmatprep.subr.bf16.mxu0 0
        %926 = vmatpush1.bf16.msra.mxu0 0
        %927 = vmatprep.subr.bf16.mxu0 0
        %928 = vmatpush1.bf16.msra.mxu0 0
        %929 = vmatprep.subr.bf16.mxu0 0
        %930 = vmatpush1.bf16.msra.mxu0 0
        %931 = vmatprep.subr.bf16.mxu0 0
        %932 = vmatpush1.bf16.msra.mxu0 0
        %933 = vmatprep.subr.bf16.mxu0 0
        %934 = vmatpush1.bf16.msra.mxu0 0
        %935 = vmatprep.mubr.bf16.mxu0 0
        %936 = vmatmul.mubr.bf16.gmra.mrb[0].mxu0 %v772
        %v937 = vpop.f32.mrb[0].mxu0
        %v938 = vadd.f32 %v438, %v937
        %v939 = vpop.f32.mrb[0].mxu0
        %v940 = vadd.f32 %v438, %v939
        %v941 = vpop.f32.mrb[0].mxu0
        %v942 = vadd.f32 %v443, %v941
        %v943 = vpop.f32.mrb[0].mxu0
        %v944 = vadd.f32 %v443, %v943
        %945 = vdwg.mxu0
        %946 = vmatprep.subr.bf16.mxu0 %v651
        %947 = vmatpush1.bf16.msra.mxu0 %v650
        %948 = vmatprep.subr.bf16.mxu0 %v683
        %949 = vmatpush1.bf16.msra.mxu0 %v682
        %950 = vmatprep.subr.bf16.mxu0 0
        %951 = vmatpush1.bf16.msra.mxu0 0
        %952 = vmatprep.subr.bf16.mxu0 0
        %953 = vmatpush1.bf16.msra.mxu0 0
        %954 = vmatprep.subr.bf16.mxu0 0
        %955 = vmatpush1.bf16.msra.mxu0 0
        %956 = vmatprep.subr.bf16.mxu0 0
        %957 = vmatpush1.bf16.msra.mxu0 0
        %958 = vmatprep.subr.bf16.mxu0 0
        %959 = vmatpush1.bf16.msra.mxu0 0
        %960 = vmatprep.subr.bf16.mxu0 0
        %961 = vmatpush1.bf16.msra.mxu0 0
        %962 = vmatprep.subr.bf16.mxu0 0
        %963 = vmatpush1.bf16.msra.mxu0 0
        %964 = vmatprep.subr.bf16.mxu0 0
        %965 = vmatpush1.bf16.msra.mxu0 0
        %966 = vmatprep.subr.bf16.mxu0 0
        %967 = vmatpush1.bf16.msra.mxu0 0
        %968 = vmatprep.subr.bf16.mxu0 0
        %969 = vmatpush1.bf16.msra.mxu0 0
        %970 = vmatprep.subr.bf16.mxu0 0
        %971 = vmatpush1.bf16.msra.mxu0 0
        %972 = vmatprep.subr.bf16.mxu0 0
        %973 = vmatpush1.bf16.msra.mxu0 0
        %974 = vmatprep.subr.bf16.mxu0 0
        %975 = vmatpush1.bf16.msra.mxu0 0
        %976 = vmatprep.subr.bf16.mxu0 0
        %977 = vmatpush1.bf16.msra.mxu0 0
        %978 = vmatprep.mubr.bf16.mxu0 0
        %979 = vmatmul.mubr.bf16.gmra.mrb[0].mxu0 %v772
        %v980 = vpop.f32.mrb[0].mxu0
        %v981 = vadd.f32 %v438, %v980
        %v982 = vpop.f32.mrb[0].mxu0
        %v983 = vadd.f32 %v438, %v982
        %v984 = vpop.f32.mrb[0].mxu0
        %v985 = vadd.f32 %v443, %v984
        %v986 = vpop.f32.mrb[0].mxu0
        %v987 = vadd.f32 %v443, %v986
        %988 = vdwg.mxu0
        %989 = vmatprep.subr.bf16.mxu0 %v653
        %990 = vmatpush1.bf16.msra.mxu0 %v652
        %991 = vmatprep.subr.bf16.mxu0 %v685
        %992 = vmatpush1.bf16.msra.mxu0 %v684
        %993 = vmatprep.subr.bf16.mxu0 0
        %994 = vmatpush1.bf16.msra.mxu0 0
        %995 = vmatprep.subr.bf16.mxu0 0
        %996 = vmatpush1.bf16.msra.mxu0 0
        %997 = vmatprep.subr.bf16.mxu0 0
        %998 = vmatpush1.bf16.msra.mxu0 0
        %999 = vmatprep.subr.bf16.mxu0 0
        %1000 = vmatpush1.bf16.msra.mxu0 0
        %1001 = vmatprep.subr.bf16.mxu0 0
        %1002 = vmatpush1.bf16.msra.mxu0 0
        %1003 = vmatprep.subr.bf16.mxu0 0
        %1004 = vmatpush1.bf16.msra.mxu0 0
        %1005 = vmatprep.subr.bf16.mxu0 0
        %1006 = vmatpush1.bf16.msra.mxu0 0
        %1007 = vmatprep.subr.bf16.mxu0 0
        %1008 = vmatpush1.bf16.msra.mxu0 0
        %1009 = vmatprep.subr.bf16.mxu0 0
        %1010 = vmatpush1.bf16.msra.mxu0 0
        %1011 = vmatprep.subr.bf16.mxu0 0
        %1012 = vmatpush1.bf16.msra.mxu0 0
        %1013 = vmatprep.subr.bf16.mxu0 0
        %1014 = vmatpush1.bf16.msra.mxu0 0
        %1015 = vmatprep.subr.bf16.mxu0 0
        %1016 = vmatpush1.bf16.msra.mxu0 0
        %1017 = vmatprep.subr.bf16.mxu0 0
        %1018 = vmatpush1.bf16.msra.mxu0 0
        %1019 = vmatprep.subr.bf16.mxu0 0
        %1020 = vmatpush1.bf16.msra.mxu0 0
        %1021 = vmatprep.mubr.bf16.mxu0 0
        %1022 = vmatmul.mubr.bf16.gmra.mrb[0].mxu0 %v772
        %v1023 = vpop.f32.mrb[0].mxu0
        %v1024 = vadd.f32 %v438, %v1023
        %v1025 = vpop.f32.mrb[0].mxu0
        %v1026 = vadd.f32 %v438, %v1025
        %v1027 = vpop.f32.mrb[0].mxu0
        %v1028 = vadd.f32 %v443, %v1027
        %v1029 = vpop.f32.mrb[0].mxu0
        %v1030 = vadd.f32 %v443, %v1029
        %1031 = vdwg.mxu0
        %1032 = vmatprep.subr.bf16.mxu0 %v655
        %1033 = vmatpush1.bf16.msra.mxu0 %v654
        %1034 = vmatprep.subr.bf16.mxu0 %v687
        %1035 = vmatpush1.bf16.msra.mxu0 %v686
        %1036 = vmatprep.subr.bf16.mxu0 0
        %1037 = vmatpush1.bf16.msra.mxu0 0
        %1038 = vmatprep.subr.bf16.mxu0 0
        %1039 = vmatpush1.bf16.msra.mxu0 0
        %1040 = vmatprep.subr.bf16.mxu0 0
        %1041 = vmatpush1.bf16.msra.mxu0 0
        %1042 = vmatprep.subr.bf16.mxu0 0
        %1043 = vmatpush1.bf16.msra.mxu0 0
        %1044 = vmatprep.subr.bf16.mxu0 0
        %1045 = vmatpush1.bf16.msra.mxu0 0
        %1046 = vmatprep.subr.bf16.mxu0 0
        %1047 = vmatpush1.bf16.msra.mxu0 0
        %1048 = vmatprep.subr.bf16.mxu0 0
        %1049 = vmatpush1.bf16.msra.mxu0 0
        %1050 = vmatprep.subr.bf16.mxu0 0
        %1051 = vmatpush1.bf16.msra.mxu0 0
        %1052 = vmatprep.subr.bf16.mxu0 0
        %1053 = vmatpush1.bf16.msra.mxu0 0
        %1054 = vmatprep.subr.bf16.mxu0 0
        %1055 = vmatpush1.bf16.msra.mxu0 0
        %1056 = vmatprep.subr.bf16.mxu0 0
        %1057 = vmatpush1.bf16.msra.mxu0 0
        %1058 = vmatprep.subr.bf16.mxu0 0
        %1059 = vmatpush1.bf16.msra.mxu0 0
        %1060 = vmatprep.subr.bf16.mxu0 0
        %1061 = vmatpush1.bf16.msra.mxu0 0
        %1062 = vmatprep.subr.bf16.mxu0 0
        %1063 = vmatpush1.bf16.msra.mxu0 0
        %1064 = vmatprep.mubr.bf16.mxu0 0
        %1065 = vmatmul.mubr.bf16.gmra.mrb[0].mxu0 %v772
        %v1066 = vpop.f32.mrb[0].mxu0
        %v1067 = vadd.f32 %v438, %v1066
        %v1068 = vpop.f32.mrb[0].mxu0
        %v1069 = vadd.f32 %v438, %v1068
        %v1070 = vpop.f32.mrb[0].mxu0
        %v1071 = vadd.f32 %v443, %v1070
        %v1072 = vpop.f32.mrb[0].mxu0
        %v1073 = vadd.f32 %v443, %v1072
        %1074 = vdwg.mxu0
        %1075 = vmatprep.subr.bf16.mxu0 %v657
        %1076 = vmatpush1.bf16.msra.mxu0 %v656
        %1077 = vmatprep.subr.bf16.mxu0 %v689
        %1078 = vmatpush1.bf16.msra.mxu0 %v688
        %1079 = vmatprep.subr.bf16.mxu0 0
        %1080 = vmatpush1.bf16.msra.mxu0 0
        %1081 = vmatprep.subr.bf16.mxu0 0
        %1082 = vmatpush1.bf16.msra.mxu0 0
        %1083 = vmatprep.subr.bf16.mxu0 0
        %1084 = vmatpush1.bf16.msra.mxu0 0
        %1085 = vmatprep.subr.bf16.mxu0 0
        %1086 = vmatpush1.bf16.msra.mxu0 0
        %1087 = vmatprep.subr.bf16.mxu0 0
        %1088 = vmatpush1.bf16.msra.mxu0 0
        %1089 = vmatprep.subr.bf16.mxu0 0
        %1090 = vmatpush1.bf16.msra.mxu0 0
        %1091 = vmatprep.subr.bf16.mxu0 0
        %1092 = vmatpush1.bf16.msra.mxu0 0
        %1093 = vmatprep.subr.bf16.mxu0 0
        %1094 = vmatpush1.bf16.msra.mxu0 0
        %1095 = vmatprep.subr.bf16.mxu0 0
        %1096 = vmatpush1.bf16.msra.mxu0 0
        %1097 = vmatprep.subr.bf16.mxu0 0
        %1098 = vmatpush1.bf16.msra.mxu0 0
        %1099 = vmatprep.subr.bf16.mxu0 0
        %1100 = vmatpush1.bf16.msra.mxu0 0
        %1101 = vmatprep.subr.bf16.mxu0 0
        %1102 = vmatpush1.bf16.msra.mxu0 0
        %1103 = vmatprep.subr.bf16.mxu0 0
        %1104 = vmatpush1.bf16.msra.mxu0 0
        %1105 = vmatprep.subr.bf16.mxu0 0
        %1106 = vmatpush1.bf16.msra.mxu0 0
        %1107 = vmatprep.mubr.bf16.mxu0 0
        %1108 = vmatmul.mubr.bf16.gmra.mrb[0].mxu0 %v772
        %v1109 = vpop.f32.mrb[0].mxu0
        %v1110 = vadd.f32 %v438, %v1109
        %v1111 = vpop.f32.mrb[0].mxu0
        %v1112 = vadd.f32 %v438, %v1111
        %v1113 = vpop.f32.mrb[0].mxu0
        %v1114 = vadd.f32 %v443, %v1113
        %v1115 = vpop.f32.mrb[0].mxu0
        %v1116 = vadd.f32 %v443, %v1115
        %1117 = vdwg.mxu0
        %1118 = vmatprep.subr.bf16.mxu0 %v659
        %1119 = vmatpush1.bf16.msra.mxu0 %v658
        %1120 = vmatprep.subr.bf16.mxu0 %v691
        %1121 = vmatpush1.bf16.msra.mxu0 %v690
        %1122 = vmatprep.subr.bf16.mxu0 0
        %1123 = vmatpush1.bf16.msra.mxu0 0
        %1124 = vmatprep.subr.bf16.mxu0 0
        %1125 = vmatpush1.bf16.msra.mxu0 0
        %1126 = vmatprep.subr.bf16.mxu0 0
        %1127 = vmatpush1.bf16.msra.mxu0 0
        %1128 = vmatprep.subr.bf16.mxu0 0
        %1129 = vmatpush1.bf16.msra.mxu0 0
        %1130 = vmatprep.subr.bf16.mxu0 0
        %1131 = vmatpush1.bf16.msra.mxu0 0
        %1132 = vmatprep.subr.bf16.mxu0 0
        %1133 = vmatpush1.bf16.msra.mxu0 0
        %1134 = vmatprep.subr.bf16.mxu0 0
        %1135 = vmatpush1.bf16.msra.mxu0 0
        %1136 = vmatprep.subr.bf16.mxu0 0
        %1137 = vmatpush1.bf16.msra.mxu0 0
        %1138 = vmatprep.subr.bf16.mxu0 0
        %1139 = vmatpush1.bf16.msra.mxu0 0
        %1140 = vmatprep.subr.bf16.mxu0 0
        %1141 = vmatpush1.bf16.msra.mxu0 0
        %1142 = vmatprep.subr.bf16.mxu0 0
        %1143 = vmatpush1.bf16.msra.mxu0 0
        %1144 = vmatprep.subr.bf16.mxu0 0
        %1145 = vmatpush1.bf16.msra.mxu0 0
        %1146 = vmatprep.subr.bf16.mxu0 0
        %1147 = vmatpush1.bf16.msra.mxu0 0
        %1148 = vmatprep.subr.bf16.mxu0 0
        %1149 = vmatpush1.bf16.msra.mxu0 0
        %1150 = vmatprep.mubr.bf16.mxu0 0
        %1151 = vmatmul.mubr.bf16.gmra.mrb[0].mxu0 %v772
        %v1152 = vpop.f32.mrb[0].mxu0
        %v1153 = vadd.f32 %v438, %v1152
        %v1154 = vpop.f32.mrb[0].mxu0
        %v1155 = vadd.f32 %v438, %v1154
        %v1156 = vpop.f32.mrb[0].mxu0
        %v1157 = vadd.f32 %v443, %v1156
        %v1158 = vpop.f32.mrb[0].mxu0
        %v1159 = vadd.f32 %v443, %v1158
        %1160 = vdwg.mxu0
        %1161 = vmatprep.subr.bf16.mxu0 %v661
        %1162 = vmatpush1.bf16.msra.mxu0 %v660
        %1163 = vmatprep.subr.bf16.mxu0 %v693
        %1164 = vmatpush1.bf16.msra.mxu0 %v692
        %1165 = vmatprep.subr.bf16.mxu0 0
        %1166 = vmatpush1.bf16.msra.mxu0 0
        %1167 = vmatprep.subr.bf16.mxu0 0
        %1168 = vmatpush1.bf16.msra.mxu0 0
        %1169 = vmatprep.subr.bf16.mxu0 0
        %1170 = vmatpush1.bf16.msra.mxu0 0
        %1171 = vmatprep.subr.bf16.mxu0 0
        %1172 = vmatpush1.bf16.msra.mxu0 0
        %1173 = vmatprep.subr.bf16.mxu0 0
        %1174 = vmatpush1.bf16.msra.mxu0 0
        %1175 = vmatprep.subr.bf16.mxu0 0
        %1176 = vmatpush1.bf16.msra.mxu0 0
        %1177 = vmatprep.subr.bf16.mxu0 0
        %1178 = vmatpush1.bf16.msra.mxu0 0
        %1179 = vmatprep.subr.bf16.mxu0 0
        %1180 = vmatpush1.bf16.msra.mxu0 0
        %1181 = vmatprep.subr.bf16.mxu0 0
        %1182 = vmatpush1.bf16.msra.mxu0 0
        %1183 = vmatprep.subr.bf16.mxu0 0
        %1184 = vmatpush1.bf16.msra.mxu0 0
        %1185 = vmatprep.subr.bf16.mxu0 0
        %1186 = vmatpush1.bf16.msra.mxu0 0
        %1187 = vmatprep.subr.bf16.mxu0 0
        %1188 = vmatpush1.bf16.msra.mxu0 0
        %1189 = vmatprep.subr.bf16.mxu0 0
        %1190 = vmatpush1.bf16.msra.mxu0 0
        %1191 = vmatprep.subr.bf16.mxu0 0
        %1192 = vmatpush1.bf16.msra.mxu0 0
        %1193 = vmatprep.mubr.bf16.mxu0 0
        %1194 = vmatmul.mubr.bf16.gmra.mrb[0].mxu0 %v772
        %v1195 = vpop.f32.mrb[0].mxu0
        %v1196 = vadd.f32 %v438, %v1195
        %v1197 = vpop.f32.mrb[0].mxu0
        %v1198 = vadd.f32 %v438, %v1197
        %v1199 = vpop.f32.mrb[0].mxu0
        %v1200 = vadd.f32 %v443, %v1199
        %v1201 = vpop.f32.mrb[0].mxu0
        %v1202 = vadd.f32 %v443, %v1201
        %1203 = vdwg.mxu0
        %1204 = vmatprep.subr.bf16.mxu0 %v663
        %1205 = vmatpush1.bf16.msra.mxu0 %v662
        %1206 = vmatprep.subr.bf16.mxu0 %v695
        %1207 = vmatpush1.bf16.msra.mxu0 %v694
        %1208 = vmatprep.subr.bf16.mxu0 0
        %1209 = vmatpush1.bf16.msra.mxu0 0
        %1210 = vmatprep.subr.bf16.mxu0 0
        %1211 = vmatpush1.bf16.msra.mxu0 0
        %1212 = vmatprep.subr.bf16.mxu0 0
        %1213 = vmatpush1.bf16.msra.mxu0 0
        %1214 = vmatprep.subr.bf16.mxu0 0
        %1215 = vmatpush1.bf16.msra.mxu0 0
        %1216 = vmatprep.subr.bf16.mxu0 0
        %1217 = vmatpush1.bf16.msra.mxu0 0
        %1218 = vmatprep.subr.bf16.mxu0 0
        %1219 = vmatpush1.bf16.msra.mxu0 0
        %1220 = vmatprep.subr.bf16.mxu0 0
        %1221 = vmatpush1.bf16.msra.mxu0 0
        %1222 = vmatprep.subr.bf16.mxu0 0
        %1223 = vmatpush1.bf16.msra.mxu0 0
        %1224 = vmatprep.subr.bf16.mxu0 0
        %1225 = vmatpush1.bf16.msra.mxu0 0
        %1226 = vmatprep.subr.bf16.mxu0 0
        %1227 = vmatpush1.bf16.msra.mxu0 0
        %1228 = vmatprep.subr.bf16.mxu0 0
        %1229 = vmatpush1.bf16.msra.mxu0 0
        %1230 = vmatprep.subr.bf16.mxu0 0
        %1231 = vmatpush1.bf16.msra.mxu0 0
        %1232 = vmatprep.subr.bf16.mxu0 0
        %1233 = vmatpush1.bf16.msra.mxu0 0
        %1234 = vmatprep.subr.bf16.mxu0 0
        %1235 = vmatpush1.bf16.msra.mxu0 0
        %1236 = vmatprep.mubr.bf16.mxu0 0
        %1237 = vmatmul.mubr.bf16.gmra.mrb[0].mxu0 %v772
        %v1238 = vpop.f32.mrb[0].mxu0
        %v1239 = vadd.f32 %v438, %v1238
        %v1240 = vpop.f32.mrb[0].mxu0
        %v1241 = vadd.f32 %v438, %v1240
        %v1242 = vpop.f32.mrb[0].mxu0
        %v1243 = vadd.f32 %v443, %v1242
        %v1244 = vpop.f32.mrb[0].mxu0
        %v1245 = vadd.f32 %v443, %v1244
        %1246 = vdwg.mxu0
        %1247 = vmatprep.subr.bf16.mxu0 %v665
        %1248 = vmatpush1.bf16.msra.mxu0 %v664
        %1249 = vmatprep.subr.bf16.mxu0 %v697
        %1250 = vmatpush1.bf16.msra.mxu0 %v696
        %1251 = vmatprep.subr.bf16.mxu0 0
        %1252 = vmatpush1.bf16.msra.mxu0 0
        %1253 = vmatprep.subr.bf16.mxu0 0
        %1254 = vmatpush1.bf16.msra.mxu0 0
        %1255 = vmatprep.subr.bf16.mxu0 0
        %1256 = vmatpush1.bf16.msra.mxu0 0
        %1257 = vmatprep.subr.bf16.mxu0 0
        %1258 = vmatpush1.bf16.msra.mxu0 0
        %1259 = vmatprep.subr.bf16.mxu0 0
        %1260 = vmatpush1.bf16.msra.mxu0 0
        %1261 = vmatprep.subr.bf16.mxu0 0
        %1262 = vmatpush1.bf16.msra.mxu0 0
        %1263 = vmatprep.subr.bf16.mxu0 0
        %1264 = vmatpush1.bf16.msra.mxu0 0
        %1265 = vmatprep.subr.bf16.mxu0 0
        %1266 = vmatpush1.bf16.msra.mxu0 0
        %1267 = vmatprep.subr.bf16.mxu0 0
        %1268 = vmatpush1.bf16.msra.mxu0 0
        %1269 = vmatprep.subr.bf16.mxu0 0
        %1270 = vmatpush1.bf16.msra.mxu0 0
        %1271 = vmatprep.subr.bf16.mxu0 0
        %1272 = vmatpush1.bf16.msra.mxu0 0
        %1273 = vmatprep.subr.bf16.mxu0 0
        %1274 = vmatpush1.bf16.msra.mxu0 0
        %1275 = vmatprep.subr.bf16.mxu0 0
        %1276 = vmatpush1.bf16.msra.mxu0 0
        %1277 = vmatprep.subr.bf16.mxu0 0
        %1278 = vmatpush1.bf16.msra.mxu0 0
        %1279 = vmatprep.mubr.bf16.mxu0 0
        %1280 = vmatmul.mubr.bf16.gmra.mrb[0].mxu0 %v772
        %v1281 = vpop.f32.mrb[0].mxu0
        %v1282 = vadd.f32 %v438, %v1281
        %v1283 = vpop.f32.mrb[0].mxu0
        %v1284 = vadd.f32 %v438, %v1283
        %v1285 = vpop.f32.mrb[0].mxu0
        %v1286 = vadd.f32 %v443, %v1285
        %v1287 = vpop.f32.mrb[0].mxu0
        %v1288 = vadd.f32 %v443, %v1287
        %1289 = vdwg.mxu0
        %1290 = vmatprep.subr.bf16.mxu0 %v667
        %1291 = vmatpush1.bf16.msra.mxu0 %v666
        %1292 = vmatprep.subr.bf16.mxu0 %v699
        %1293 = vmatpush1.bf16.msra.mxu0 %v698
        %1294 = vmatprep.subr.bf16.mxu0 0
        %1295 = vmatpush1.bf16.msra.mxu0 0
        %1296 = vmatprep.subr.bf16.mxu0 0
        %1297 = vmatpush1.bf16.msra.mxu0 0
        %1298 = vmatprep.subr.bf16.mxu0 0
        %1299 = vmatpush1.bf16.msra.mxu0 0
        %1300 = vmatprep.subr.bf16.mxu0 0
        %1301 = vmatpush1.bf16.msra.mxu0 0
        %1302 = vmatprep.subr.bf16.mxu0 0
        %1303 = vmatpush1.bf16.msra.mxu0 0
        %1304 = vmatprep.subr.bf16.mxu0 0
        %1305 = vmatpush1.bf16.msra.mxu0 0
        %1306 = vmatprep.subr.bf16.mxu0 0
        %1307 = vmatpush1.bf16.msra.mxu0 0
        %1308 = vmatprep.subr.bf16.mxu0 0
        %1309 = vmatpush1.bf16.msra.mxu0 0
        %1310 = vmatprep.subr.bf16.mxu0 0
        %1311 = vmatpush1.bf16.msra.mxu0 0
        %1312 = vmatprep.subr.bf16.mxu0 0
        %1313 = vmatpush1.bf16.msra.mxu0 0
        %1314 = vmatprep.subr.bf16.mxu0 0
        %1315 = vmatpush1.bf16.msra.mxu0 0
        %1316 = vmatprep.subr.bf16.mxu0 0
        %1317 = vmatpush1.bf16.msra.mxu0 0
        %1318 = vmatprep.subr.bf16.mxu0 0
        %1319 = vmatpush1.bf16.msra.mxu0 0
        %1320 = vmatprep.subr.bf16.mxu0 0
        %1321 = vmatpush1.bf16.msra.mxu0 0
        %1322 = vmatprep.mubr.bf16.mxu0 0
        %1323 = vmatmul.mubr.bf16.gmra.mrb[0].mxu0 %v772
        %v1324 = vpop.f32.mrb[0].mxu0
        %v1325 = vadd.f32 %v438, %v1324
        %v1326 = vpop.f32.mrb[0].mxu0
        %v1327 = vadd.f32 %v438, %v1326
        %v1328 = vpop.f32.mrb[0].mxu0
        %v1329 = vadd.f32 %v443, %v1328
        %v1330 = vpop.f32.mrb[0].mxu0
        %v1331 = vadd.f32 %v443, %v1330
        %1332 = vdwg.mxu0
        %1333 = vmatprep.subr.bf16.mxu0 %v669
        %1334 = vmatpush1.bf16.msra.mxu0 %v668
        %1335 = vmatprep.subr.bf16.mxu0 %v701
        %1336 = vmatpush1.bf16.msra.mxu0 %v700
        %1337 = vmatprep.subr.bf16.mxu0 0
        %1338 = vmatpush1.bf16.msra.mxu0 0
        %1339 = vmatprep.subr.bf16.mxu0 0
        %1340 = vmatpush1.bf16.msra.mxu0 0
        %1341 = vmatprep.subr.bf16.mxu0 0
        %1342 = vmatpush1.bf16.msra.mxu0 0
        %1343 = vmatprep.subr.bf16.mxu0 0
        %1344 = vmatpush1.bf16.msra.mxu0 0
        %1345 = vmatprep.subr.bf16.mxu0 0
        %1346 = vmatpush1.bf16.msra.mxu0 0
        %1347 = vmatprep.subr.bf16.mxu0 0
        %1348 = vmatpush1.bf16.msra.mxu0 0
        %1349 = vmatprep.subr.bf16.mxu0 0
        %1350 = vmatpush1.bf16.msra.mxu0 0
        %1351 = vmatprep.subr.bf16.mxu0 0
        %1352 = vmatpush1.bf16.msra.mxu0 0
        %1353 = vmatprep.subr.bf16.mxu0 0
        %1354 = vmatpush1.bf16.msra.mxu0 0
        %1355 = vmatprep.subr.bf16.mxu0 0
        %1356 = vmatpush1.bf16.msra.mxu0 0
        %1357 = vmatprep.subr.bf16.mxu0 0
        %1358 = vmatpush1.bf16.msra.mxu0 0
        %1359 = vmatprep.subr.bf16.mxu0 0
        %1360 = vmatpush1.bf16.msra.mxu0 0
        %1361 = vmatprep.subr.bf16.mxu0 0
        %1362 = vmatpush1.bf16.msra.mxu0 0
        %1363 = vmatprep.subr.bf16.mxu0 0
        %1364 = vmatpush1.bf16.msra.mxu0 0
        %1365 = vmatprep.mubr.bf16.mxu0 0
        %1366 = vmatmul.mubr.bf16.gmra.mrb[0].mxu0 %v772
        %v1367 = vpop.f32.mrb[0].mxu0
        %v1368 = vadd.f32 %v438, %v1367
        %v1369 = vpop.f32.mrb[0].mxu0
        %v1370 = vadd.f32 %v438, %v1369
        %v1371 = vpop.f32.mrb[0].mxu0
        %v1372 = vadd.f32 %v443, %v1371
        %v1373 = vpop.f32.mrb[0].mxu0
        %v1374 = vadd.f32 %v443, %v1373
        %1375 = vdwg.mxu0
        %1376 = vmatprep.subr.bf16.mxu0 %v671
        %1377 = vmatpush1.bf16.msra.mxu0 %v670
        %1378 = vmatprep.subr.bf16.mxu0 %v703
        %1379 = vmatpush1.bf16.msra.mxu0 %v702
        %1380 = vmatprep.subr.bf16.mxu0 0
        %1381 = vmatpush1.bf16.msra.mxu0 0
        %1382 = vmatprep.subr.bf16.mxu0 0
        %1383 = vmatpush1.bf16.msra.mxu0 0
        %1384 = vmatprep.subr.bf16.mxu0 0
        %1385 = vmatpush1.bf16.msra.mxu0 0
        %1386 = vmatprep.subr.bf16.mxu0 0
        %1387 = vmatpush1.bf16.msra.mxu0 0
        %1388 = vmatprep.subr.bf16.mxu0 0
        %1389 = vmatpush1.bf16.msra.mxu0 0
        %1390 = vmatprep.subr.bf16.mxu0 0
        %1391 = vmatpush1.bf16.msra.mxu0 0
        %1392 = vmatprep.subr.bf16.mxu0 0
        %1393 = vmatpush1.bf16.msra.mxu0 0
        %1394 = vmatprep.subr.bf16.mxu0 0
        %1395 = vmatpush1.bf16.msra.mxu0 0
        %1396 = vmatprep.subr.bf16.mxu0 0
        %1397 = vmatpush1.bf16.msra.mxu0 0
        %1398 = vmatprep.subr.bf16.mxu0 0
        %1399 = vmatpush1.bf16.msra.mxu0 0
        %1400 = vmatprep.subr.bf16.mxu0 0
        %1401 = vmatpush1.bf16.msra.mxu0 0
        %1402 = vmatprep.subr.bf16.mxu0 0
        %1403 = vmatpush1.bf16.msra.mxu0 0
        %1404 = vmatprep.subr.bf16.mxu0 0
        %1405 = vmatpush1.bf16.msra.mxu0 0
        %1406 = vmatprep.subr.bf16.mxu0 0
        %1407 = vmatpush1.bf16.msra.mxu0 0
        %1408 = vmatprep.mubr.bf16.mxu0 0
        %1409 = vmatmul.mubr.bf16.gmra.mrb[0].mxu0 %v772
        %v1410 = vpop.f32.mrb[0].mxu0
        %v1411 = vadd.f32 %v438, %v1410
        %v1412 = vpop.f32.mrb[0].mxu0
        %v1413 = vadd.f32 %v438, %v1412
        %v1414 = vpop.f32.mrb[0].mxu0
        %v1415 = vadd.f32 %v443, %v1414
        %v1416 = vpop.f32.mrb[0].mxu0
        %v1417 = vadd.f32 %v443, %v1416
        %1418 = vdwg.mxu0
        %1419 = vmatprep.subr.bf16.mxu0 %v673
        %1420 = vmatpush1.bf16.msra.mxu0 %v672
        %1421 = vmatprep.subr.bf16.mxu0 %v705
        %1422 = vmatpush1.bf16.msra.mxu0 %v704
        %1423 = vmatprep.subr.bf16.mxu0 0
        %1424 = vmatpush1.bf16.msra.mxu0 0
        %1425 = vmatprep.subr.bf16.mxu0 0
        %1426 = vmatpush1.bf16.msra.mxu0 0
        %1427 = vmatprep.subr.bf16.mxu0 0
        %1428 = vmatpush1.bf16.msra.mxu0 0
        %1429 = vmatprep.subr.bf16.mxu0 0
        %1430 = vmatpush1.bf16.msra.mxu0 0
        %1431 = vmatprep.subr.bf16.mxu0 0
        %1432 = vmatpush1.bf16.msra.mxu0 0
        %1433 = vmatprep.subr.bf16.mxu0 0
        %1434 = vmatpush1.bf16.msra.mxu0 0
        %1435 = vmatprep.subr.bf16.mxu0 0
        %1436 = vmatpush1.bf16.msra.mxu0 0
        %1437 = vmatprep.subr.bf16.mxu0 0
        %1438 = vmatpush1.bf16.msra.mxu0 0
        %1439 = vmatprep.subr.bf16.mxu0 0
        %1440 = vmatpush1.bf16.msra.mxu0 0
        %1441 = vmatprep.subr.bf16.mxu0 0
        %1442 = vmatpush1.bf16.msra.mxu0 0
        %1443 = vmatprep.subr.bf16.mxu0 0
        %1444 = vmatpush1.bf16.msra.mxu0 0
        %1445 = vmatprep.subr.bf16.mxu0 0
        %1446 = vmatpush1.bf16.msra.mxu0 0
        %1447 = vmatprep.subr.bf16.mxu0 0
        %1448 = vmatpush1.bf16.msra.mxu0 0
        %1449 = vmatprep.subr.bf16.mxu0 0
        %1450 = vmatpush1.bf16.msra.mxu0 0
        %1451 = vmatprep.mubr.bf16.mxu0 0
        %1452 = vmatmul.mubr.bf16.gmra.mrb[0].mxu0 %v772
        %v1453 = vpop.f32.mrb[0].mxu0
        %v1454 = vadd.f32 %v438, %v1453
        %v1455 = vpop.f32.mrb[0].mxu0
        %v1456 = vadd.f32 %v438, %v1455
        %v1457 = vpop.f32.mrb[0].mxu0
        %v1458 = vadd.f32 %v443, %v1457
        %v1459 = vpop.f32.mrb[0].mxu0
        %v1460 = vadd.f32 %v443, %v1459
        %1461 = vdwg.mxu0
        %v1462 = vmax.f32 %v809, 0.0
        %v1463 = vmax.f32 %v811, 0.0
        %v1464 = vmax.f32 %v852, 0.0
        %v1465 = vmax.f32 %v854, 0.0
        %v1466 = vmax.f32 %v895, 0.0
        %v1467 = vmax.f32 %v897, 0.0
        %v1468 = vmax.f32 %v938, 0.0
        %v1469 = vmax.f32 %v940, 0.0
        %v1470 = vmax.f32 %v981, 0.0
        %v1471 = vmax.f32 %v983, 0.0
        %v1472 = vmax.f32 %v1024, 0.0
        %v1473 = vmax.f32 %v1026, 0.0
        %v1474 = vmax.f32 %v1067, 0.0
        %v1475 = vmax.f32 %v1069, 0.0
        %v1476 = vmax.f32 %v1110, 0.0
        %v1477 = vmax.f32 %v1112, 0.0
        %v1478 = vmax.f32 %v1153, 0.0
        %v1479 = vmax.f32 %v1155, 0.0
        %v1480 = vmax.f32 %v1196, 0.0
        %v1481 = vmax.f32 %v1198, 0.0
        %v1482 = vmax.f32 %v1239, 0.0
        %v1483 = vmax.f32 %v1241, 0.0
        %v1484 = vmax.f32 %v1282, 0.0
        %v1485 = vmax.f32 %v1284, 0.0
        %v1486 = vmax.f32 %v1325, 0.0
        %v1487 = vmax.f32 %v1327, 0.0
        %v1488 = vmax.f32 %v1368, 0.0
        %v1489 = vmax.f32 %v1370, 0.0
        %v1490 = vmax.f32 %v1411, 0.0
        %v1491 = vmax.f32 %v1413, 0.0
        %v1492 = vmax.f32 %v1454, 0.0
        %v1493 = vmax.f32 %v1456, 0.0
        %v1494 = vmax.f32 %v813, 0.0
        %v1495 = vmax.f32 %v815, 0.0
        %v1496 = vmax.f32 %v856, 0.0
        %v1497 = vmax.f32 %v858, 0.0
        %v1498 = vmax.f32 %v899, 0.0
        %v1499 = vmax.f32 %v901, 0.0
        %v1500 = vmax.f32 %v942, 0.0
        %v1501 = vmax.f32 %v944, 0.0
        %v1502 = vmax.f32 %v985, 0.0
        %v1503 = vmax.f32 %v987, 0.0
        %v1504 = vmax.f32 %v1028, 0.0
        %v1505 = vmax.f32 %v1030, 0.0
        %v1506 = vmax.f32 %v1071, 0.0
        %v1507 = vmax.f32 %v1073, 0.0
        %v1508 = vmax.f32 %v1114, 0.0
        %v1509 = vmax.f32 %v1116, 0.0
        %v1510 = vmax.f32 %v1157, 0.0
        %v1511 = vmax.f32 %v1159, 0.0
        %v1512 = vmax.f32 %v1200, 0.0
        %v1513 = vmax.f32 %v1202, 0.0
        %v1514 = vmax.f32 %v1243, 0.0
        %v1515 = vmax.f32 %v1245, 0.0
        %v1516 = vmax.f32 %v1286, 0.0
        %v1517 = vmax.f32 %v1288, 0.0
        %v1518 = vmax.f32 %v1329, 0.0
        %v1519 = vmax.f32 %v1331, 0.0
        %v1520 = vmax.f32 %v1372, 0.0
        %v1521 = vmax.f32 %v1374, 0.0
        %v1522 = vmax.f32 %v1415, 0.0
        %v1523 = vmax.f32 %v1417, 0.0
        %v1524 = vmax.f32 %v1458, 0.0
        %v1525 = vmax.f32 %v1460, 0.0
        %s1526 = smul.u32 %s16, 4096
        %v1527 = vlaneseq
        %v1528 = vand.u32 %v1527, 127
        %v1529 = vadd.s32 %v1528, 128
        %v1530 = vadd.s32 %v1528, 256
        %v1531 = vadd.s32 %v1528, 384
        %v1532 = vadd.s32 %v1528, 512
        %v1533 = vadd.s32 %v1528, 640
        %v1534 = vadd.s32 %v1528, 768
        %v1535 = vadd.s32 %v1528, 896
        %v1536 = vadd.s32 %v1528, 1024
        %v1537 = vadd.s32 %v1528, 1152
        %v1538 = vadd.s32 %v1528, 1280
        %v1539 = vadd.s32 %v1528, 1408
        %v1540 = vadd.s32 %v1528, 1536
        %v1541 = vadd.s32 %v1528, 1664
        %v1542 = vadd.s32 %v1528, 1792
        %v1543 = vadd.s32 %v1528, 1920
        %v1544 = vadd.s32 %v1528, 2048
        %v1545 = vadd.s32 %v1528, 2176
        %v1546 = vadd.s32 %v1528, 2304
        %v1547 = vadd.s32 %v1528, 2432
        %v1548 = vadd.s32 %v1528, 2560
        %v1549 = vadd.s32 %v1528, 2688
        %v1550 = vadd.s32 %v1528, 2816
        %v1551 = vadd.s32 %v1528, 2944
        %v1552 = vadd.s32 %v1528, 3072
        %v1553 = vadd.s32 %v1528, 3200
        %v1554 = vadd.s32 %v1528, 3328
        %v1555 = vadd.s32 %v1528, 3456
        %v1556 = vadd.s32 %v1528, 3584
        %v1557 = vadd.s32 %v1528, 3712
        %v1558 = vadd.s32 %v1528, 3840
        %v1559 = vadd.s32 %v1528, 3968
        %v1560 = vstv %s1526
        %v1561 = vadd.s32 %v1560, %v1528
        %v1562 = vadd.s32 %v1560, %v1529
        %v1563 = vadd.s32 %v1560, %v1530
        %v1564 = vadd.s32 %v1560, %v1531
        %v1565 = vadd.s32 %v1560, %v1532
        %v1566 = vadd.s32 %v1560, %v1533
        %v1567 = vadd.s32 %v1560, %v1534
        %v1568 = vadd.s32 %v1560, %v1535
        %v1569 = vadd.s32 %v1560, %v1536
        %v1570 = vadd.s32 %v1560, %v1537
        %v1571 = vadd.s32 %v1560, %v1538
        %v1572 = vadd.s32 %v1560, %v1539
        %v1573 = vadd.s32 %v1560, %v1540
        %v1574 = vadd.s32 %v1560, %v1541
        %v1575 = vadd.s32 %v1560, %v1542
        %v1576 = vadd.s32 %v1560, %v1543
        %v1577 = vadd.s32 %v1560, %v1544
        %v1578 = vadd.s32 %v1560, %v1545
        %v1579 = vadd.s32 %v1560, %v1546
        %v1580 = vadd.s32 %v1560, %v1547
        %v1581 = vadd.s32 %v1560, %v1548
        %v1582 = vadd.s32 %v1560, %v1549
        %v1583 = vadd.s32 %v1560, %v1550
        %v1584 = vadd.s32 %v1560, %v1551
        %v1585 = vadd.s32 %v1560, %v1552
        %v1586 = vadd.s32 %v1560, %v1553
        %v1587 = vadd.s32 %v1560, %v1554
        %v1588 = vadd.s32 %v1560, %v1555
        %v1589 = vadd.s32 %v1560, %v1556
        %v1590 = vadd.s32 %v1560, %v1557
        %v1591 = vadd.s32 %v1560, %v1558
        %v1592 = vadd.s32 %v1560, %v1559
        %vm1593 = vcmp.lt.s32.totalorder %v1561, 33282
        %vm1594 = vcmp.lt.s32.totalorder %v1562, 33282
        %vm1595 = vcmp.lt.s32.totalorder %v1563, 33282
        %vm1596 = vcmp.lt.s32.totalorder %v1564, 33282
        %vm1597 = vcmp.lt.s32.totalorder %v1565, 33282
        %vm1598 = vcmp.lt.s32.totalorder %v1566, 33282
        %vm1599 = vcmp.lt.s32.totalorder %v1567, 33282
        %vm1600 = vcmp.lt.s32.totalorder %v1568, 33282
        %vm1601 = vcmp.lt.s32.totalorder %v1569, 33282
        %vm1602 = vcmp.lt.s32.totalorder %v1570, 33282
        %vm1603 = vcmp.lt.s32.totalorder %v1571, 33282
        %vm1604 = vcmp.lt.s32.totalorder %v1572, 33282
        %vm1605 = vcmp.lt.s32.totalorder %v1573, 33282
        %vm1606 = vcmp.lt.s32.totalorder %v1574, 33282
        %vm1607 = vcmp.lt.s32.totalorder %v1575, 33282
        %vm1608 = vcmp.lt.s32.totalorder %v1576, 33282
        %vm1609 = vcmp.lt.s32.totalorder %v1577, 33282
        %vm1610 = vcmp.lt.s32.totalorder %v1578, 33282
        %vm1611 = vcmp.lt.s32.totalorder %v1579, 33282
        %vm1612 = vcmp.lt.s32.totalorder %v1580, 33282
        %vm1613 = vcmp.lt.s32.totalorder %v1581, 33282
        %vm1614 = vcmp.lt.s32.totalorder %v1582, 33282
        %vm1615 = vcmp.lt.s32.totalorder %v1583, 33282
        %vm1616 = vcmp.lt.s32.totalorder %v1584, 33282
        %vm1617 = vcmp.lt.s32.totalorder %v1585, 33282
        %vm1618 = vcmp.lt.s32.totalorder %v1586, 33282
        %vm1619 = vcmp.lt.s32.totalorder %v1587, 33282
        %vm1620 = vcmp.lt.s32.totalorder %v1588, 33282
        %vm1621 = vcmp.lt.s32.totalorder %v1589, 33282
        %vm1622 = vcmp.lt.s32.totalorder %v1590, 33282
        %vm1623 = vcmp.lt.s32.totalorder %v1591, 33282
        %vm1624 = vcmp.lt.s32.totalorder %v1592, 33282
        %v1625 = vsel %vm1593, %v1462, 0.0
        %v1626 = vsel %vm1594, %v1463, 0.0
        %v1627 = vsel %vm1595, %v1464, 0.0
        %v1628 = vsel %vm1596, %v1465, 0.0
        %v1629 = vsel %vm1597, %v1466, 0.0
        %v1630 = vsel %vm1598, %v1467, 0.0
        %v1631 = vsel %vm1599, %v1468, 0.0
        %v1632 = vsel %vm1600, %v1469, 0.0
        %v1633 = vsel %vm1601, %v1470, 0.0
        %v1634 = vsel %vm1602, %v1471, 0.0
        %v1635 = vsel %vm1603, %v1472, 0.0
        %v1636 = vsel %vm1604, %v1473, 0.0
        %v1637 = vsel %vm1605, %v1474, 0.0
        %v1638 = vsel %vm1606, %v1475, 0.0
        %v1639 = vsel %vm1607, %v1476, 0.0
        %v1640 = vsel %vm1608, %v1477, 0.0
        %v1641 = vsel %vm1609, %v1478, 0.0
        %v1642 = vsel %vm1610, %v1479, 0.0
        %v1643 = vsel %vm1611, %v1480, 0.0
        %v1644 = vsel %vm1612, %v1481, 0.0
        %v1645 = vsel %vm1613, %v1482, 0.0
        %v1646 = vsel %vm1614, %v1483, 0.0
        %v1647 = vsel %vm1615, %v1484, 0.0
        %v1648 = vsel %vm1616, %v1485, 0.0
        %v1649 = vsel %vm1617, %v1486, 0.0
        %v1650 = vsel %vm1618, %v1487, 0.0
        %v1651 = vsel %vm1619, %v1488, 0.0
        %v1652 = vsel %vm1620, %v1489, 0.0
        %v1653 = vsel %vm1621, %v1490, 0.0
        %v1654 = vsel %vm1622, %v1491, 0.0
        %v1655 = vsel %vm1623, %v1492, 0.0
        %v1656 = vsel %vm1624, %v1493, 0.0
        %v1657 = vsel %vm1593, %v1494, 0.0
        %v1658 = vsel %vm1594, %v1495, 0.0
        %v1659 = vsel %vm1595, %v1496, 0.0
        %v1660 = vsel %vm1596, %v1497, 0.0
        %v1661 = vsel %vm1597, %v1498, 0.0
        %v1662 = vsel %vm1598, %v1499, 0.0
        %v1663 = vsel %vm1599, %v1500, 0.0
        %v1664 = vsel %vm1600, %v1501, 0.0
        %v1665 = vsel %vm1601, %v1502, 0.0
        %v1666 = vsel %vm1602, %v1503, 0.0
        %v1667 = vsel %vm1603, %v1504, 0.0
        %v1668 = vsel %vm1604, %v1505, 0.0
        %v1669 = vsel %vm1605, %v1506, 0.0
        %v1670 = vsel %vm1606, %v1507, 0.0
        %v1671 = vsel %vm1607, %v1508, 0.0
        %v1672 = vsel %vm1608, %v1509, 0.0
        %v1673 = vsel %vm1609, %v1510, 0.0
        %v1674 = vsel %vm1610, %v1511, 0.0
        %v1675 = vsel %vm1611, %v1512, 0.0
        %v1676 = vsel %vm1612, %v1513, 0.0
        %v1677 = vsel %vm1613, %v1514, 0.0
        %v1678 = vsel %vm1614, %v1515, 0.0
        %v1679 = vsel %vm1615, %v1516, 0.0
        %v1680 = vsel %vm1616, %v1517, 0.0
        %v1681 = vsel %vm1617, %v1518, 0.0
        %v1682 = vsel %vm1618, %v1519, 0.0
        %v1683 = vsel %vm1619, %v1520, 0.0
        %v1684 = vsel %vm1620, %v1521, 0.0
        %v1685 = vsel %vm1621, %v1522, 0.0
        %v1686 = vsel %vm1622, %v1523, 0.0
        %v1687 = vsel %vm1623, %v1524, 0.0
        %v1688 = vsel %vm1624, %v1525, 0.0
        %s1689 = sshra.s32 %s1526, 7
        %s1690 = sand.u32 %s1526, 127
        %s1691 = smul.addr %s1689, 8
        %s1692 = scalar_lea.vmem %s5, %s1691
        %1693 = vst [vmem:[%s1692] sm:$0xff] %v1625
        %1694 = vst [vmem:[%s1692 + $0x8] sm:$0xff] %v1626
        %1695 = vst [vmem:[%s1692 + $0x10] sm:$0xff] %v1627
        %1696 = vst [vmem:[%s1692 + $0x18] sm:$0xff] %v1628
        %1697 = vst [vmem:[%s1692 + $0x20] sm:$0xff] %v1629
        %1698 = vst [vmem:[%s1692 + $0x28] sm:$0xff] %v1630
        %1699 = vst [vmem:[%s1692 + $0x30] sm:$0xff] %v1631
        %1700 = vst [vmem:[%s1692 + $0x38] sm:$0xff] %v1632
        %1701 = vst [vmem:[%s1692 + $0x40] sm:$0xff] %v1633
        %1702 = vst [vmem:[%s1692 + $0x48] sm:$0xff] %v1634
        %1703 = vst [vmem:[%s1692 + $0x50] sm:$0xff] %v1635
        %1704 = vst [vmem:[%s1692 + $0x58] sm:$0xff] %v1636
        %1705 = vst [vmem:[%s1692 + $0x60] sm:$0xff] %v1637
        %1706 = vst [vmem:[%s1692 + $0x68] sm:$0xff] %v1638
        %1707 = vst [vmem:[%s1692 + $0x70] sm:$0xff] %v1639
        %1708 = vst [vmem:[%s1692 + $0x78] sm:$0xff] %v1640
        %1709 = vst [vmem:[%s1692 + $0x80] sm:$0xff] %v1641
        %1710 = vst [vmem:[%s1692 + $0x88] sm:$0xff] %v1642
        %1711 = vst [vmem:[%s1692 + $0x90] sm:$0xff] %v1643
        %1712 = vst [vmem:[%s1692 + $0x98] sm:$0xff] %v1644
        %1713 = vst [vmem:[%s1692 + $0xa0] sm:$0xff] %v1645
        %1714 = vst [vmem:[%s1692 + $0xa8] sm:$0xff] %v1646
        %1715 = vst [vmem:[%s1692 + $0xb0] sm:$0xff] %v1647
        %1716 = vst [vmem:[%s1692 + $0xb8] sm:$0xff] %v1648
        %1717 = vst [vmem:[%s1692 + $0xc0] sm:$0xff] %v1649
        %1718 = vst [vmem:[%s1692 + $0xc8] sm:$0xff] %v1650
        %1719 = vst [vmem:[%s1692 + $0xd0] sm:$0xff] %v1651
        %1720 = vst [vmem:[%s1692 + $0xd8] sm:$0xff] %v1652
        %1721 = vst [vmem:[%s1692 + $0xe0] sm:$0xff] %v1653
        %1722 = vst [vmem:[%s1692 + $0xe8] sm:$0xff] %v1654
        %1723 = vst [vmem:[%s1692 + $0xf0] sm:$0xff] %v1655
        %1724 = vst [vmem:[%s1692 + $0xf8] sm:$0xff] %v1656
        %1725 = vst [vmem:[%s1692 + $0x900] sm:$0xff] %v1657
        %1726 = vst [vmem:[%s1692 + $0x908] sm:$0xff] %v1658
        %1727 = vst [vmem:[%s1692 + $0x910] sm:$0xff] %v1659
        %1728 = vst [vmem:[%s1692 + $0x918] sm:$0xff] %v1660
        %1729 = vst [vmem:[%s1692 + $0x920] sm:$0xff] %v1661
        %1730 = vst [vmem:[%s1692 + $0x928] sm:$0xff] %v1662
        %1731 = vst [vmem:[%s1692 + $0x930] sm:$0xff] %v1663
        %1732 = vst [vmem:[%s1692 + $0x938] sm:$0xff] %v1664
        %1733 = vst [vmem:[%s1692 + $0x940] sm:$0xff] %v1665
        %1734 = vst [vmem:[%s1692 + $0x948] sm:$0xff] %v1666
        %1735 = vst [vmem:[%s1692 + $0x950] sm:$0xff] %v1667
        %1736 = vst [vmem:[%s1692 + $0x958] sm:$0xff] %v1668
        %1737 = vst [vmem:[%s1692 + $0x960] sm:$0xff] %v1669
        %1738 = vst [vmem:[%s1692 + $0x968] sm:$0xff] %v1670
        %1739 = vst [vmem:[%s1692 + $0x970] sm:$0xff] %v1671
        %1740 = vst [vmem:[%s1692 + $0x978] sm:$0xff] %v1672
        %1741 = vst [vmem:[%s1692 + $0x980] sm:$0xff] %v1673
        %1742 = vst [vmem:[%s1692 + $0x988] sm:$0xff] %v1674
        %1743 = vst [vmem:[%s1692 + $0x990] sm:$0xff] %v1675
        %1744 = vst [vmem:[%s1692 + $0x998] sm:$0xff] %v1676
        %1745 = vst [vmem:[%s1692 + $0x9a0] sm:$0xff] %v1677
        %1746 = vst [vmem:[%s1692 + $0x9a8] sm:$0xff] %v1678
        %1747 = vst [vmem:[%s1692 + $0x9b0] sm:$0xff] %v1679
        %1748 = vst [vmem:[%s1692 + $0x9b8] sm:$0xff] %v1680
        %1749 = vst [vmem:[%s1692 + $0x9c0] sm:$0xff] %v1681
        %1750 = vst [vmem:[%s1692 + $0x9c8] sm:$0xff] %v1682
        %1751 = vst [vmem:[%s1692 + $0x9d0] sm:$0xff] %v1683
        %1752 = vst [vmem:[%s1692 + $0x9d8] sm:$0xff] %v1684
        %1753 = vst [vmem:[%s1692 + $0x9e0] sm:$0xff] %v1685
        %1754 = vst [vmem:[%s1692 + $0x9e8] sm:$0xff] %v1686
        %1755 = vst [vmem:[%s1692 + $0x9f0] sm:$0xff] %v1687
        %1756 = vst [vmem:[%s1692 + $0x9f8] sm:$0xff] %v1688
        %v1757 = vld [vmem:[#allocation2] sm:$0xff]
        %v1758 = vld [vmem:[#allocation2 + $0x8] sm:$0xff]
        %v1759 = vadd.f32 %v1625, %v1626
        %v1760 = vadd.f32 %v1759, %v1627
        %v1761 = vadd.f32 %v1760, %v1628
        %v1762 = vadd.f32 %v1761, %v1629
        %v1763 = vadd.f32 %v1762, %v1630
        %v1764 = vadd.f32 %v1763, %v1631
        %v1765 = vadd.f32 %v1764, %v1632
        %v1766 = vadd.f32 %v1765, %v1633
        %v1767 = vadd.f32 %v1766, %v1634
        %v1768 = vadd.f32 %v1767, %v1635
        %v1769 = vadd.f32 %v1768, %v1636
        %v1770 = vadd.f32 %v1769, %v1637
        %v1771 = vadd.f32 %v1770, %v1638
        %v1772 = vadd.f32 %v1771, %v1639
        %v1773 = vadd.f32 %v1772, %v1640
        %v1774 = vadd.f32 %v1773, %v1641
        %v1775 = vadd.f32 %v1774, %v1642
        %v1776 = vadd.f32 %v1775, %v1643
        %v1777 = vadd.f32 %v1776, %v1644
        %v1778 = vadd.f32 %v1777, %v1645
        %v1779 = vadd.f32 %v1778, %v1646
        %v1780 = vadd.f32 %v1779, %v1647
        %v1781 = vadd.f32 %v1780, %v1648
        %v1782 = vadd.f32 %v1781, %v1649
        %v1783 = vadd.f32 %v1782, %v1650
        %v1784 = vadd.f32 %v1783, %v1651
        %v1785 = vadd.f32 %v1784, %v1652
        %v1786 = vadd.f32 %v1785, %v1653
        %v1787 = vadd.f32 %v1786, %v1654
        %v1788 = vadd.f32 %v1787, %v1655
        %v1789 = vadd.f32 %v1788, %v1656
        %1790 = vadd.xlane.f32.xlu0 %v1789
        %v1791 = vpop.xlane.xlu0 %1790
        %v1792 = vadd.f32 %v1657, %v1658
        %v1793 = vadd.f32 %v1792, %v1659
        %v1794 = vadd.f32 %v1793, %v1660
        %v1795 = vadd.f32 %v1794, %v1661
        %v1796 = vadd.f32 %v1795, %v1662
        %v1797 = vadd.f32 %v1796, %v1663
        %v1798 = vadd.f32 %v1797, %v1664
        %v1799 = vadd.f32 %v1798, %v1665
        %v1800 = vadd.f32 %v1799, %v1666
        %v1801 = vadd.f32 %v1800, %v1667
        %v1802 = vadd.f32 %v1801, %v1668
        %v1803 = vadd.f32 %v1802, %v1669
        %v1804 = vadd.f32 %v1803, %v1670
        %v1805 = vadd.f32 %v1804, %v1671
        %v1806 = vadd.f32 %v1805, %v1672
        %v1807 = vadd.f32 %v1806, %v1673
        %v1808 = vadd.f32 %v1807, %v1674
        %v1809 = vadd.f32 %v1808, %v1675
        %v1810 = vadd.f32 %v1809, %v1676
        %v1811 = vadd.f32 %v1810, %v1677
        %v1812 = vadd.f32 %v1811, %v1678
        %v1813 = vadd.f32 %v1812, %v1679
        %v1814 = vadd.f32 %v1813, %v1680
        %v1815 = vadd.f32 %v1814, %v1681
        %v1816 = vadd.f32 %v1815, %v1682
        %v1817 = vadd.f32 %v1816, %v1683
        %v1818 = vadd.f32 %v1817, %v1684
        %v1819 = vadd.f32 %v1818, %v1685
        %v1820 = vadd.f32 %v1819, %v1686
        %v1821 = vadd.f32 %v1820, %v1687
        %v1822 = vadd.f32 %v1821, %v1688
        %1823 = vadd.xlane.f32.xlu0 %v1822
        %v1824 = vpop.xlane.xlu0 %1823
        %v1825 = vadd.f32 %v1757, %v1791
        %v1826 = vadd.f32 %v1758, %v1824
        %vm1827 = vcmask 7168
        %1828 = vst.msk [vmem:[#allocation2] sm:$0xff] %vm1827, %v1825
        %1829 = vst.msk [vmem:[#allocation2 + $0x8] sm:$0xff] %vm1827, %v1826
        %v1830 = vld [vmem:[#allocation3] sm:$0xff]
        %v1831 = vld [vmem:[#allocation3 + $0x8] sm:$0xff]
        %v1832 = vmul.f32 %v1625, %v1625
        %v1833 = vmul.f32 %v1626, %v1626
        %v1834 = vmul.f32 %v1627, %v1627
        %v1835 = vmul.f32 %v1628, %v1628
        %v1836 = vmul.f32 %v1629, %v1629
        %v1837 = vmul.f32 %v1630, %v1630
        %v1838 = vmul.f32 %v1631, %v1631
        %v1839 = vmul.f32 %v1632, %v1632
        %v1840 = vmul.f32 %v1633, %v1633
        %v1841 = vmul.f32 %v1634, %v1634
        %v1842 = vmul.f32 %v1635, %v1635
        %v1843 = vmul.f32 %v1636, %v1636
        %v1844 = vmul.f32 %v1637, %v1637
        %v1845 = vmul.f32 %v1638, %v1638
        %v1846 = vmul.f32 %v1639, %v1639
        %v1847 = vmul.f32 %v1640, %v1640
        %v1848 = vmul.f32 %v1641, %v1641
        %v1849 = vmul.f32 %v1642, %v1642
        %v1850 = vmul.f32 %v1643, %v1643
        %v1851 = vmul.f32 %v1644, %v1644
        %v1852 = vmul.f32 %v1645, %v1645
        %v1853 = vmul.f32 %v1646, %v1646
        %v1854 = vmul.f32 %v1647, %v1647
        %v1855 = vmul.f32 %v1648, %v1648
        %v1856 = vmul.f32 %v1649, %v1649
        %v1857 = vmul.f32 %v1650, %v1650
        %v1858 = vmul.f32 %v1651, %v1651
        %v1859 = vmul.f32 %v1652, %v1652
        %v1860 = vmul.f32 %v1653, %v1653
        %v1861 = vmul.f32 %v1654, %v1654
        %v1862 = vmul.f32 %v1655, %v1655
        %v1863 = vmul.f32 %v1656, %v1656
        %v1864 = vmul.f32 %v1657, %v1657
        %v1865 = vmul.f32 %v1658, %v1658
        %v1866 = vmul.f32 %v1659, %v1659
        %v1867 = vmul.f32 %v1660, %v1660
        %v1868 = vmul.f32 %v1661, %v1661
        %v1869 = vmul.f32 %v1662, %v1662
        %v1870 = vmul.f32 %v1663, %v1663
        %v1871 = vmul.f32 %v1664, %v1664
        %v1872 = vmul.f32 %v1665, %v1665
        %v1873 = vmul.f32 %v1666, %v1666
        %v1874 = vmul.f32 %v1667, %v1667
        %v1875 = vmul.f32 %v1668, %v1668
        %v1876 = vmul.f32 %v1669, %v1669
        %v1877 = vmul.f32 %v1670, %v1670
        %v1878 = vmul.f32 %v1671, %v1671
        %v1879 = vmul.f32 %v1672, %v1672
        %v1880 = vmul.f32 %v1673, %v1673
        %v1881 = vmul.f32 %v1674, %v1674
        %v1882 = vmul.f32 %v1675, %v1675
        %v1883 = vmul.f32 %v1676, %v1676
        %v1884 = vmul.f32 %v1677, %v1677
        %v1885 = vmul.f32 %v1678, %v1678
        %v1886 = vmul.f32 %v1679, %v1679
        %v1887 = vmul.f32 %v1680, %v1680
        %v1888 = vmul.f32 %v1681, %v1681
        %v1889 = vmul.f32 %v1682, %v1682
        %v1890 = vmul.f32 %v1683, %v1683
        %v1891 = vmul.f32 %v1684, %v1684
        %v1892 = vmul.f32 %v1685, %v1685
        %v1893 = vmul.f32 %v1686, %v1686
        %v1894 = vmul.f32 %v1687, %v1687
        %v1895 = vmul.f32 %v1688, %v1688
        %v1896 = vadd.f32 %v1832, %v1833
        %v1897 = vadd.f32 %v1896, %v1834
        %v1898 = vadd.f32 %v1897, %v1835
        %v1899 = vadd.f32 %v1898, %v1836
        %v1900 = vadd.f32 %v1899, %v1837
        %v1901 = vadd.f32 %v1900, %v1838
        %v1902 = vadd.f32 %v1901, %v1839
        %v1903 = vadd.f32 %v1902, %v1840
        %v1904 = vadd.f32 %v1903, %v1841
        %v1905 = vadd.f32 %v1904, %v1842
        %v1906 = vadd.f32 %v1905, %v1843
        %v1907 = vadd.f32 %v1906, %v1844
        %v1908 = vadd.f32 %v1907, %v1845
        %v1909 = vadd.f32 %v1908, %v1846
        %v1910 = vadd.f32 %v1909, %v1847
        %v1911 = vadd.f32 %v1910, %v1848
        %v1912 = vadd.f32 %v1911, %v1849
        %v1913 = vadd.f32 %v1912, %v1850
        %v1914 = vadd.f32 %v1913, %v1851
        %v1915 = vadd.f32 %v1914, %v1852
        %v1916 = vadd.f32 %v1915, %v1853
        %v1917 = vadd.f32 %v1916, %v1854
        %v1918 = vadd.f32 %v1917, %v1855
        %v1919 = vadd.f32 %v1918, %v1856
        %v1920 = vadd.f32 %v1919, %v1857
        %v1921 = vadd.f32 %v1920, %v1858
        %v1922 = vadd.f32 %v1921, %v1859
        %v1923 = vadd.f32 %v1922, %v1860
        %v1924 = vadd.f32 %v1923, %v1861
        %v1925 = vadd.f32 %v1924, %v1862
        %v1926 = vadd.f32 %v1925, %v1863
        %1927 = vadd.xlane.f32.xlu0 %v1926
        %v1928 = vpop.xlane.xlu0 %1927
        %v1929 = vadd.f32 %v1864, %v1865
        %v1930 = vadd.f32 %v1929, %v1866
        %v1931 = vadd.f32 %v1930, %v1867
        %v1932 = vadd.f32 %v1931, %v1868
        %v1933 = vadd.f32 %v1932, %v1869
        %v1934 = vadd.f32 %v1933, %v1870
        %v1935 = vadd.f32 %v1934, %v1871
        %v1936 = vadd.f32 %v1935, %v1872
        %v1937 = vadd.f32 %v1936, %v1873
        %v1938 = vadd.f32 %v1937, %v1874
        %v1939 = vadd.f32 %v1938, %v1875
        %v1940 = vadd.f32 %v1939, %v1876
        %v1941 = vadd.f32 %v1940, %v1877
        %v1942 = vadd.f32 %v1941, %v1878
        %v1943 = vadd.f32 %v1942, %v1879
        %v1944 = vadd.f32 %v1943, %v1880
        %v1945 = vadd.f32 %v1944, %v1881
        %v1946 = vadd.f32 %v1945, %v1882
        %v1947 = vadd.f32 %v1946, %v1883
        %v1948 = vadd.f32 %v1947, %v1884
        %v1949 = vadd.f32 %v1948, %v1885
        %v1950 = vadd.f32 %v1949, %v1886
        %v1951 = vadd.f32 %v1950, %v1887
        %v1952 = vadd.f32 %v1951, %v1888
        %v1953 = vadd.f32 %v1952, %v1889
        %v1954 = vadd.f32 %v1953, %v1890
        %v1955 = vadd.f32 %v1954, %v1891
        %v1956 = vadd.f32 %v1955, %v1892
        %v1957 = vadd.f32 %v1956, %v1893
        %v1958 = vadd.f32 %v1957, %v1894
        %v1959 = vadd.f32 %v1958, %v1895
        %1960 = vadd.xlane.f32.xlu0 %v1959
        %v1961 = vpop.xlane.xlu0 %1960
        %v1962 = vadd.f32 %v1830, %v1928
        %v1963 = vadd.f32 %v1831, %v1961
        %1964 = vst.msk [vmem:[#allocation3] sm:$0xff] %vm1827, %v1962
        %1965 = vst.msk [vmem:[#allocation3 + $0x8] sm:$0xff] %vm1827, %v1963
        %p1966 = scmp.eq.s32.totalorder %s16, 8
        // Predicated region
        $region68: #{my_cnn_forward.4} parent=58 // pred_check
          %p1967 = pneg %p1966
        $region69: #{my_cnn_forward.4} parent=58 // pred_check_branch
          %1969 = sbr.rel (%p1967) target = $region71
        $region70: #{my_cnn_forward.4} parent=58 // pred_region
          %v1970 = vld [vmem:[#allocation2] sm:$0xff]
          %v1971 = vld [vmem:[#allocation2 + $0x8] sm:$0xff]
          %v1972 = vrcp.pop 33282.0
          %v1973 = vmul.f32 %v1970, %v1972
          %v1974 = vmul.f32 %v1971, %v1972
          %v1975 = vld [vmem:[#allocation3] sm:$0xff]
          %v1976 = vld [vmem:[#allocation3 + $0x8] sm:$0xff]
          %v1977 = vmul.f32 %v1975, %v1972
          %v1978 = vmul.f32 %v1976, %v1972
          %v1979 = vmul.f32 %v1973, %v1973
          %v1980 = vmul.f32 %v1974, %v1974
          %v1981 = vsub.f32 %v1977, %v1979
          %v1982 = vsub.f32 %v1978, %v1980
          %v1983 = vadd.f32 %v1981, 1e-05
          %v1984 = vadd.f32 %v1982, 1e-05
          %v1985 = vrsqrt.pop %v1983
          %v1986 = vrsqrt.pop %v1984
          %v1987 = vld [vmem:[%s3] sm:$0xff]
          %v1988 = vld [vmem:[%s3 + $0x8] sm:$0xff]
          %v1989 = vmul.f32 %v1985, %v1987
          %v1990 = vmul.f32 %v1986, %v1988
          %v1991 = vld [vmem:[%s4] sm:$0xff]
          %v1992 = vld [vmem:[%s4 + $0x8] sm:$0xff]
          %v1993 = vmul.f32 %v1973, %v1989
          %v1994 = vmul.f32 %v1974, %v1990
          %v1995 = vsub.f32 %v1991, %v1993
          %v1996 = vsub.f32 %v1992, %v1994
          loop: start=0, step=1, limit=9
          $region72: #{my_cnn_forward.4} parent=70 // loop_pre_header
            _
          $region73: #{my_cnn_forward.4} parent=70 // loop_header
            %s1998 = sphi 0, %s2002
            %p1999 = scmp.ge.s32.totalorder %s1998, 9
          $region74: #{my_cnn_forward.4} parent=70 // loop_header_branch
            %2001 = sbr.rel (%p1999) target = $region78
          $region75: #{my_cnn_forward.4} parent=70 // loop_body
            %s2003 = smul.u32 %s1998, 4096
            %s2004 = sshra.s32 %s2003, 7
            %s2005 = sand.u32 %s2003, 127
            %s2006 = smul.addr %s2004, 8
            %s2007 = scalar_lea.vmem %s5, %s2006
            %v2008 = vld [vmem:[%s2007] sm:$0xff]
            %v2009 = vld [vmem:[%s2007 + $0x8] sm:$0xff]
            %v2010 = vld [vmem:[%s2007 + $0x10] sm:$0xff]
            %v2011 = vld [vmem:[%s2007 + $0x18] sm:$0xff]
            %v2012 = vld [vmem:[%s2007 + $0x20] sm:$0xff]
            %v2013 = vld [vmem:[%s2007 + $0x28] sm:$0xff]
            %v2014 = vld [vmem:[%s2007 + $0x30] sm:$0xff]
            %v2015 = vld [vmem:[%s2007 + $0x38] sm:$0xff]
            %v2016 = vld [vmem:[%s2007 + $0x40] sm:$0xff]
            %v2017 = vld [vmem:[%s2007 + $0x48] sm:$0xff]
            %v2018 = vld [vmem:[%s2007 + $0x50] sm:$0xff]
            %v2019 = vld [vmem:[%s2007 + $0x58] sm:$0xff]
            %v2020 = vld [vmem:[%s2007 + $0x60] sm:$0xff]
            %v2021 = vld [vmem:[%s2007 + $0x68] sm:$0xff]
            %v2022 = vld [vmem:[%s2007 + $0x70] sm:$0xff]
            %v2023 = vld [vmem:[%s2007 + $0x78] sm:$0xff]
            %v2024 = vld [vmem:[%s2007 + $0x80] sm:$0xff]
            %v2025 = vld [vmem:[%s2007 + $0x88] sm:$0xff]
            %v2026 = vld [vmem:[%s2007 + $0x90] sm:$0xff]
            %v2027 = vld [vmem:[%s2007 + $0x98] sm:$0xff]
            %v2028 = vld [vmem:[%s2007 + $0xa0] sm:$0xff]
            %v2029 = vld [vmem:[%s2007 + $0xa8] sm:$0xff]
            %v2030 = vld [vmem:[%s2007 + $0xb0] sm:$0xff]
            %v2031 = vld [vmem:[%s2007 + $0xb8] sm:$0xff]
            %v2032 = vld [vmem:[%s2007 + $0xc0] sm:$0xff]
            %v2033 = vld [vmem:[%s2007 + $0xc8] sm:$0xff]
            %v2034 = vld [vmem:[%s2007 + $0xd0] sm:$0xff]
            %v2035 = vld [vmem:[%s2007 + $0xd8] sm:$0xff]
            %v2036 = vld [vmem:[%s2007 + $0xe0] sm:$0xff]
            %v2037 = vld [vmem:[%s2007 + $0xe8] sm:$0xff]
            %v2038 = vld [vmem:[%s2007 + $0xf0] sm:$0xff]
            %v2039 = vld [vmem:[%s2007 + $0xf8] sm:$0xff]
            %v2040 = vld [vmem:[%s2007 + $0x900] sm:$0xff]
            %v2041 = vld [vmem:[%s2007 + $0x908] sm:$0xff]
            %v2042 = vld [vmem:[%s2007 + $0x910] sm:$0xff]
            %v2043 = vld [vmem:[%s2007 + $0x918] sm:$0xff]
            %v2044 = vld [vmem:[%s2007 + $0x920] sm:$0xff]
            %v2045 = vld [vmem:[%s2007 + $0x928] sm:$0xff]
            %v2046 = vld [vmem:[%s2007 + $0x930] sm:$0xff]
            %v2047 = vld [vmem:[%s2007 + $0x938] sm:$0xff]
            %v2048 = vld [vmem:[%s2007 + $0x940] sm:$0xff]
            %v2049 = vld [vmem:[%s2007 + $0x948] sm:$0xff]
            %v2050 = vld [vmem:[%s2007 + $0x950] sm:$0xff]
            %v2051 = vld [vmem:[%s2007 + $0x958] sm:$0xff]
            %v2052 = vld [vmem:[%s2007 + $0x960] sm:$0xff]
            %v2053 = vld [vmem:[%s2007 + $0x968] sm:$0xff]
            %v2054 = vld [vmem:[%s2007 + $0x970] sm:$0xff]
            %v2055 = vld [vmem:[%s2007 + $0x978] sm:$0xff]
            %v2056 = vld [vmem:[%s2007 + $0x980] sm:$0xff]
            %v2057 = vld [vmem:[%s2007 + $0x988] sm:$0xff]
            %v2058 = vld [vmem:[%s2007 + $0x990] sm:$0xff]
            %v2059 = vld [vmem:[%s2007 + $0x998] sm:$0xff]
            %v2060 = vld [vmem:[%s2007 + $0x9a0] sm:$0xff]
            %v2061 = vld [vmem:[%s2007 + $0x9a8] sm:$0xff]
            %v2062 = vld [vmem:[%s2007 + $0x9b0] sm:$0xff]
            %v2063 = vld [vmem:[%s2007 + $0x9b8] sm:$0xff]
            %v2064 = vld [vmem:[%s2007 + $0x9c0] sm:$0xff]
            %v2065 = vld [vmem:[%s2007 + $0x9c8] sm:$0xff]
            %v2066 = vld [vmem:[%s2007 + $0x9d0] sm:$0xff]
            %v2067 = vld [vmem:[%s2007 + $0x9d8] sm:$0xff]
            %v2068 = vld [vmem:[%s2007 + $0x9e0] sm:$0xff]
            %v2069 = vld [vmem:[%s2007 + $0x9e8] sm:$0xff]
            %v2070 = vld [vmem:[%s2007 + $0x9f0] sm:$0xff]
            %v2071 = vld [vmem:[%s2007 + $0x9f8] sm:$0xff]
            %2073 = vset.pattern.permute.xlu0 0
            %2074 = vperm.xlu0 %2073, %v1989
            %v2075 = vpop.permute.xlu0 %2074
            %2078 = vset.pattern.permute.xlu0 0
            %2079 = vperm.xlu0 %2078, %v1990
            %v2080 = vpop.permute.xlu0 %2079
            %v2082 = vmul.f32 %v2008, %v2075
            %v2083 = vmul.f32 %v2009, %v2075
            %v2084 = vmul.f32 %v2010, %v2075
            %v2085 = vmul.f32 %v2011, %v2075
            %v2086 = vmul.f32 %v2012, %v2075
            %v2087 = vmul.f32 %v2013, %v2075
            %v2088 = vmul.f32 %v2014, %v2075
            %v2089 = vmul.f32 %v2015, %v2075
            %v2090 = vmul.f32 %v2016, %v2075
            %v2091 = vmul.f32 %v2017, %v2075
            %v2092 = vmul.f32 %v2018, %v2075
            %v2093 = vmul.f32 %v2019, %v2075
            %v2094 = vmul.f32 %v2020, %v2075
            %v2095 = vmul.f32 %v2021, %v2075
            %v2096 = vmul.f32 %v2022, %v2075
            %v2097 = vmul.f32 %v2023, %v2075
            %v2098 = vmul.f32 %v2024, %v2075
            %v2099 = vmul.f32 %v2025, %v2075
            %v2100 = vmul.f32 %v2026, %v2075
            %v2101 = vmul.f32 %v2027, %v2075
            %v2102 = vmul.f32 %v2028, %v2075
            %v2103 = vmul.f32 %v2029, %v2075
            %v2104 = vmul.f32 %v2030, %v2075
            %v2105 = vmul.f32 %v2031, %v2075
            %v2106 = vmul.f32 %v2032, %v2075
            %v2107 = vmul.f32 %v2033, %v2075
            %v2108 = vmul.f32 %v2034, %v2075
            %v2109 = vmul.f32 %v2035, %v2075
            %v2110 = vmul.f32 %v2036, %v2075
            %v2111 = vmul.f32 %v2037, %v2075
            %v2112 = vmul.f32 %v2038, %v2075
            %v2113 = vmul.f32 %v2039, %v2075
            %v2114 = vmul.f32 %v2040, %v2080
            %v2115 = vmul.f32 %v2041, %v2080
            %v2116 = vmul.f32 %v2042, %v2080
            %v2117 = vmul.f32 %v2043, %v2080
            %v2118 = vmul.f32 %v2044, %v2080
            %v2119 = vmul.f32 %v2045, %v2080
            %v2120 = vmul.f32 %v2046, %v2080
            %v2121 = vmul.f32 %v2047, %v2080
            %v2122 = vmul.f32 %v2048, %v2080
            %v2123 = vmul.f32 %v2049, %v2080
            %v2124 = vmul.f32 %v2050, %v2080
            %v2125 = vmul.f32 %v2051, %v2080
            %v2126 = vmul.f32 %v2052, %v2080
            %v2127 = vmul.f32 %v2053, %v2080
            %v2128 = vmul.f32 %v2054, %v2080
            %v2129 = vmul.f32 %v2055, %v2080
            %v2130 = vmul.f32 %v2056, %v2080
            %v2131 = vmul.f32 %v2057, %v2080
            %v2132 = vmul.f32 %v2058, %v2080
            %v2133 = vmul.f32 %v2059, %v2080
            %v2134 = vmul.f32 %v2060, %v2080
            %v2135 = vmul.f32 %v2061, %v2080
            %v2136 = vmul.f32 %v2062, %v2080
            %v2137 = vmul.f32 %v2063, %v2080
            %v2138 = vmul.f32 %v2064, %v2080
            %v2139 = vmul.f32 %v2065, %v2080
            %v2140 = vmul.f32 %v2066, %v2080
            %v2141 = vmul.f32 %v2067, %v2080
            %v2142 = vmul.f32 %v2068, %v2080
            %v2143 = vmul.f32 %v2069, %v2080
            %v2144 = vmul.f32 %v2070, %v2080
            %v2145 = vmul.f32 %v2071, %v2080
            %2147 = vset.pattern.permute.xlu0 0
            %2148 = vperm.xlu0 %2147, %v1995
            %v2149 = vpop.permute.xlu0 %2148
            %2152 = vset.pattern.permute.xlu0 0
            %2153 = vperm.xlu0 %2152, %v1996
            %v2154 = vpop.permute.xlu0 %2153
            %v2156 = vadd.f32 %v2082, %v2149
            %v2157 = vadd.f32 %v2083, %v2149
            %v2158 = vadd.f32 %v2084, %v2149
            %v2159 = vadd.f32 %v2085, %v2149
            %v2160 = vadd.f32 %v2086, %v2149
            %v2161 = vadd.f32 %v2087, %v2149
            %v2162 = vadd.f32 %v2088, %v2149
            %v2163 = vadd.f32 %v2089, %v2149
            %v2164 = vadd.f32 %v2090, %v2149
            %v2165 = vadd.f32 %v2091, %v2149
            %v2166 = vadd.f32 %v2092, %v2149
            %v2167 = vadd.f32 %v2093, %v2149
            %v2168 = vadd.f32 %v2094, %v2149
            %v2169 = vadd.f32 %v2095, %v2149
            %v2170 = vadd.f32 %v2096, %v2149
            %v2171 = vadd.f32 %v2097, %v2149
            %v2172 = vadd.f32 %v2098, %v2149
            %v2173 = vadd.f32 %v2099, %v2149
            %v2174 = vadd.f32 %v2100, %v2149
            %v2175 = vadd.f32 %v2101, %v2149
            %v2176 = vadd.f32 %v2102, %v2149
            %v2177 = vadd.f32 %v2103, %v2149
            %v2178 = vadd.f32 %v2104, %v2149
            %v2179 = vadd.f32 %v2105, %v2149
            %v2180 = vadd.f32 %v2106, %v2149
            %v2181 = vadd.f32 %v2107, %v2149
            %v2182 = vadd.f32 %v2108, %v2149
            %v2183 = vadd.f32 %v2109, %v2149
            %v2184 = vadd.f32 %v2110, %v2149
            %v2185 = vadd.f32 %v2111, %v2149
            %v2186 = vadd.f32 %v2112, %v2149
            %v2187 = vadd.f32 %v2113, %v2149
            %v2188 = vadd.f32 %v2114, %v2154
            %v2189 = vadd.f32 %v2115, %v2154
            %v2190 = vadd.f32 %v2116, %v2154
            %v2191 = vadd.f32 %v2117, %v2154
            %v2192 = vadd.f32 %v2118, %v2154
            %v2193 = vadd.f32 %v2119, %v2154
            %v2194 = vadd.f32 %v2120, %v2154
            %v2195 = vadd.f32 %v2121, %v2154
            %v2196 = vadd.f32 %v2122, %v2154
            %v2197 = vadd.f32 %v2123, %v2154
            %v2198 = vadd.f32 %v2124, %v2154
            %v2199 = vadd.f32 %v2125, %v2154
            %v2200 = vadd.f32 %v2126, %v2154
            %v2201 = vadd.f32 %v2127, %v2154
            %v2202 = vadd.f32 %v2128, %v2154
            %v2203 = vadd.f32 %v2129, %v2154
            %v2204 = vadd.f32 %v2130, %v2154
            %v2205 = vadd.f32 %v2131, %v2154
            %v2206 = vadd.f32 %v2132, %v2154
            %v2207 = vadd.f32 %v2133, %v2154
            %v2208 = vadd.f32 %v2134, %v2154
            %v2209 = vadd.f32 %v2135, %v2154
            %v2210 = vadd.f32 %v2136, %v2154
            %v2211 = vadd.f32 %v2137, %v2154
            %v2212 = vadd.f32 %v2138, %v2154
            %v2213 = vadd.f32 %v2139, %v2154
            %v2214 = vadd.f32 %v2140, %v2154
            %v2215 = vadd.f32 %v2141, %v2154
            %v2216 = vadd.f32 %v2142, %v2154
            %v2217 = vadd.f32 %v2143, %v2154
            %v2218 = vadd.f32 %v2144, %v2154
            %v2219 = vadd.f32 %v2145, %v2154
            %2220 = vst [vmem:[%s2007] sm:$0xff] %v2156
            %2221 = vst [vmem:[%s2007 + $0x8] sm:$0xff] %v2157
            %2222 = vst [vmem:[%s2007 + $0x10] sm:$0xff] %v2158
            %2223 = vst [vmem:[%s2007 + $0x18] sm:$0xff] %v2159
            %2224 = vst [vmem:[%s2007 + $0x20] sm:$0xff] %v2160
            %2225 = vst [vmem:[%s2007 + $0x28] sm:$0xff] %v2161
            %2226 = vst [vmem:[%s2007 + $0x30] sm:$0xff] %v2162
            %2227 = vst [vmem:[%s2007 + $0x38] sm:$0xff] %v2163
            %2228 = vst [vmem:[%s2007 + $0x40] sm:$0xff] %v2164
            %2229 = vst [vmem:[%s2007 + $0x48] sm:$0xff] %v2165
            %2230 = vst [vmem:[%s2007 + $0x50] sm:$0xff] %v2166
            %2231 = vst [vmem:[%s2007 + $0x58] sm:$0xff] %v2167
            %2232 = vst [vmem:[%s2007 + $0x60] sm:$0xff] %v2168
            %2233 = vst [vmem:[%s2007 + $0x68] sm:$0xff] %v2169
            %2234 = vst [vmem:[%s2007 + $0x70] sm:$0xff] %v2170
            %2235 = vst [vmem:[%s2007 + $0x78] sm:$0xff] %v2171
            %2236 = vst [vmem:[%s2007 + $0x80] sm:$0xff] %v2172
            %2237 = vst [vmem:[%s2007 + $0x88] sm:$0xff] %v2173
            %2238 = vst [vmem:[%s2007 + $0x90] sm:$0xff] %v2174
            %2239 = vst [vmem:[%s2007 + $0x98] sm:$0xff] %v2175
            %2240 = vst [vmem:[%s2007 + $0xa0] sm:$0xff] %v2176
            %2241 = vst [vmem:[%s2007 + $0xa8] sm:$0xff] %v2177
            %2242 = vst [vmem:[%s2007 + $0xb0] sm:$0xff] %v2178
            %2243 = vst [vmem:[%s2007 + $0xb8] sm:$0xff] %v2179
            %2244 = vst [vmem:[%s2007 + $0xc0] sm:$0xff] %v2180
            %2245 = vst [vmem:[%s2007 + $0xc8] sm:$0xff] %v2181
            %2246 = vst [vmem:[%s2007 + $0xd0] sm:$0xff] %v2182
            %2247 = vst [vmem:[%s2007 + $0xd8] sm:$0xff] %v2183
            %2248 = vst [vmem:[%s2007 + $0xe0] sm:$0xff] %v2184
            %2249 = vst [vmem:[%s2007 + $0xe8] sm:$0xff] %v2185
            %2250 = vst [vmem:[%s2007 + $0xf0] sm:$0xff] %v2186
            %2251 = vst [vmem:[%s2007 + $0xf8] sm:$0xff] %v2187
            %2252 = vst [vmem:[%s2007 + $0x900] sm:$0xff] %v2188
            %2253 = vst [vmem:[%s2007 + $0x908] sm:$0xff] %v2189
            %2254 = vst [vmem:[%s2007 + $0x910] sm:$0xff] %v2190
            %2255 = vst [vmem:[%s2007 + $0x918] sm:$0xff] %v2191
            %2256 = vst [vmem:[%s2007 + $0x920] sm:$0xff] %v2192
            %2257 = vst [vmem:[%s2007 + $0x928] sm:$0xff] %v2193
            %2258 = vst [vmem:[%s2007 + $0x930] sm:$0xff] %v2194
            %2259 = vst [vmem:[%s2007 + $0x938] sm:$0xff] %v2195
            %2260 = vst [vmem:[%s2007 + $0x940] sm:$0xff] %v2196
            %2261 = vst [vmem:[%s2007 + $0x948] sm:$0xff] %v2197
            %2262 = vst [vmem:[%s2007 + $0x950] sm:$0xff] %v2198
            %2263 = vst [vmem:[%s2007 + $0x958] sm:$0xff] %v2199
            %2264 = vst [vmem:[%s2007 + $0x960] sm:$0xff] %v2200
            %2265 = vst [vmem:[%s2007 + $0x968] sm:$0xff] %v2201
            %2266 = vst [vmem:[%s2007 + $0x970] sm:$0xff] %v2202
            %2267 = vst [vmem:[%s2007 + $0x978] sm:$0xff] %v2203
            %2268 = vst [vmem:[%s2007 + $0x980] sm:$0xff] %v2204
            %2269 = vst [vmem:[%s2007 + $0x988] sm:$0xff] %v2205
            %2270 = vst [vmem:[%s2007 + $0x990] sm:$0xff] %v2206
            %2271 = vst [vmem:[%s2007 + $0x998] sm:$0xff] %v2207
            %2272 = vst [vmem:[%s2007 + $0x9a0] sm:$0xff] %v2208
            %2273 = vst [vmem:[%s2007 + $0x9a8] sm:$0xff] %v2209
            %2274 = vst [vmem:[%s2007 + $0x9b0] sm:$0xff] %v2210
            %2275 = vst [vmem:[%s2007 + $0x9b8] sm:$0xff] %v2211
            %2276 = vst [vmem:[%s2007 + $0x9c0] sm:$0xff] %v2212
            %2277 = vst [vmem:[%s2007 + $0x9c8] sm:$0xff] %v2213
            %2278 = vst [vmem:[%s2007 + $0x9d0] sm:$0xff] %v2214
            %2279 = vst [vmem:[%s2007 + $0x9d8] sm:$0xff] %v2215
            %2280 = vst [vmem:[%s2007 + $0x9e0] sm:$0xff] %v2216
            %2281 = vst [vmem:[%s2007 + $0x9e8] sm:$0xff] %v2217
            %2282 = vst [vmem:[%s2007 + $0x9f0] sm:$0xff] %v2218
            %2283 = vst [vmem:[%s2007 + $0x9f8] sm:$0xff] %v2219
          $region76: #{my_cnn_forward.4} parent=70 // loop_footer
            %s2002 = sadd.s32 1, %s1998
          $region77: #{my_cnn_forward.4} parent=70 // loop_footer_branch
            %1997 = sbr.rel target = $region73
          $region78: #{my_cnn_forward.4} parent=70 // loop_exit
            _
        $region71: #{my_cnn_forward.4} parent=58 // pred_fallthru
          _
        // Predicated region
        $region79: #{my_cnn_forward.4} parent=58 // pred_check
          %p2284 = pneg %p139
        $region80: #{my_cnn_forward.4} parent=58 // pred_check_branch
          %2286 = sbr.rel (%p2284) target = $region82
        $region81: #{my_cnn_forward.4} parent=58 // pred_region
          _
        $region82: #{my_cnn_forward.4} parent=58 // pred_fallthru
          _
        // Predicated region
        $region83: #{my_cnn_forward.4} parent=58 // pred_check
          %p2287 = pneg %p139
        $region84: #{my_cnn_forward.4} parent=58 // pred_check_branch
          %2289 = sbr.rel (%p2287) target = $region86
        $region85: #{my_cnn_forward.4} parent=58 // pred_region
          _
        $region86: #{my_cnn_forward.4} parent=58 // pred_fallthru
          _
      $region59: #{my_cnn_forward.4} parent=5 // pred_fallthru
        _
      %p2290 = scmp.le.s32.totalorder 2, %s11
      // Predicated region
      $region87: #{my_cnn_forward.4} parent=5 // pred_check
        %p2291 = pneg %p2290
      $region88: #{my_cnn_forward.4} parent=5 // pred_check_branch
        %2293 = sbr.rel (%p2291) target = $region90
      $region89: #{my_cnn_forward.4} parent=5 // pred_region
        %s2294 = ssub.s32 %s11, 2
      $region90: #{my_cnn_forward.4} parent=5 // pred_fallthru
        _
    $region6: #{my_cnn_forward.4} parent=1 // loop_footer
      %s15 = sadd.s32 1, %s11
    $region7: #{my_cnn_forward.4} parent=1 // loop_footer_branch
      %10 = sbr.rel target = $region3
    $region8: #{my_cnn_forward.4} parent=1 // loop_exit
      _

// kernel: my_cnn_forward.5
$region0: #{my_cnn_forward.5}
  #allocation0 [shape = 'u32[]', space=smem, size = 0x4, offset = 0x4, fixed_abs, tag = 'smem constant byte address 0x4 - core index']
  #allocation1 [shape = 'u32[144,128]{1,0:T(1,128)}', space=vmem, size = 0x12000, scoped, tag = 'internal scratch']
  #allocation2 [shape = 'f32[32,1]{1,0:T(8,128)}', space=vmem, size = 0x4000, scoped, tag = 'scratch operand']
  #allocation3 [shape = 'f32[32,1]{1,0:T(8,128)}', space=vmem, size = 0x4000, scoped, tag = 'scratch operand']
  %s0 = inlined_call_operand.vmem [shape: bf16[144,896], index: 0, kind: input, shape index: {}]
  %s1 = inlined_call_operand.vmem [shape: bf16[32,144], index: 1, kind: input, shape index: {}]
  %s2 = inlined_call_operand.vmem [shape: f32[32,1], index: 2, kind: input, shape index: {}]
  %s3 = inlined_call_operand.vmem [shape: f32[32,1], index: 3, kind: input, shape index: {}]
  %s4 = inlined_call_operand.vmem [shape: f32[32,1], index: 4, kind: input, shape index: {}]
  %s5 = inlined_call_operand.vmem [shape: f32[32,896], index: 5, kind: output, shape index: {}]
  %s6 = sld [smem:[#allocation0]]
  $region38: #{my_cnn_forward.5} parent=0
    _
  %s8 = ssub.s32 1, %s6
  %s9 = scalar_select 0, %s8, %s6
  // Predicated region
  $region2: #{my_cnn_forward.5} parent=0 // pred_check
    _
  $region3: #{my_cnn_forward.5} parent=0 // pred_check_branch
    %11 = sbr.rel (0) target = $region5
  $region4: #{my_cnn_forward.5} parent=0 // pred_region
    _
  $region5: #{my_cnn_forward.5} parent=0 // pred_fallthru
    _
  // Predicated region
  $region6: #{my_cnn_forward.5} parent=0 // pred_check
    _
  $region7: #{my_cnn_forward.5} parent=0 // pred_check_branch
    %13 = sbr.rel (0) target = $region9
  $region8: #{my_cnn_forward.5} parent=0 // pred_region
    _
  $region9: #{my_cnn_forward.5} parent=0 // pred_fallthru
    _
  // Predicated region
  $region10: #{my_cnn_forward.5} parent=0 // pred_check
    _
  $region11: #{my_cnn_forward.5} parent=0 // pred_check_branch
    %15 = sbr.rel (0) target = $region13
  $region12: #{my_cnn_forward.5} parent=0 // pred_region
    _
  $region13: #{my_cnn_forward.5} parent=0 // pred_fallthru
    _
  // Predicated region
  $region14: #{my_cnn_forward.5} parent=0 // pred_check
    _
  $region15: #{my_cnn_forward.5} parent=0 // pred_check_branch
    %17 = sbr.rel (0) target = $region17
  $region16: #{my_cnn_forward.5} parent=0 // pred_region
    _
  $region17: #{my_cnn_forward.5} parent=0 // pred_fallthru
    _
  // Predicated region
  $region18: #{my_cnn_forward.5} parent=0 // pred_check
    _
  $region19: #{my_cnn_forward.5} parent=0 // pred_check_branch
    %19 = sbr.rel (0) target = $region21
  $region20: #{my_cnn_forward.5} parent=0 // pred_region
    _
  $region21: #{my_cnn_forward.5} parent=0 // pred_fallthru
    _
  %p21 = scmp.eq.s32.totalorder 0, 0
  // Predicated region
  $region22: #{my_cnn_forward.5} parent=0 // pred_check
    %p22 = pneg %p21
  $region23: #{my_cnn_forward.5} parent=0 // pred_check_branch
    %24 = sbr.rel (%p22) target = $region25
  $region24: #{my_cnn_forward.5} parent=0 // pred_region
    %vm25 = vcmask 7168
    %26 = vst.msk [vmem:[#allocation2] sm:$0xff] %vm25, 0.0
    %27 = vst.msk [vmem:[#allocation2 + $0x8] sm:$0xff] %vm25, 0.0
    %28 = vst.msk [vmem:[#allocation2 + $0x10] sm:$0xff] %vm25, 0.0
    %29 = vst.msk [vmem:[#allocation2 + $0x18] sm:$0xff] %vm25, 0.0
    %30 = vst.msk [vmem:[#allocation3] sm:$0xff] %vm25, 0.0
    %31 = vst.msk [vmem:[#allocation3 + $0x8] sm:$0xff] %vm25, 0.0
    %32 = vst.msk [vmem:[#allocation3 + $0x10] sm:$0xff] %vm25, 0.0
    %33 = vst.msk [vmem:[#allocation3 + $0x18] sm:$0xff] %vm25, 0.0
  $region25: #{my_cnn_forward.5} parent=0 // pred_fallthru
    _
  %v34 = vld [vmem:[%s1] sm:$0xff]
  %v35 = vld [vmem:[%s1 + $0x8] sm:$0xff]
  %v36 = vld [vmem:[%s1 + $0x10] sm:$0xff]
  %v37 = vld [vmem:[%s1 + $0x18] sm:$0xff]
  %v38 = vld [vmem:[%s0] sm:$0xff]
  %v39 = vld [vmem:[%s0 + $0x8] sm:$0xff]
  %v40 = vld [vmem:[%s0 + $0x10] sm:$0xff]
  %v41 = vld [vmem:[%s0 + $0x18] sm:$0xf]
  %v42 = vld [vmem:[%s0 + $0x1c] sm:$0xff]
  %v43 = vld [vmem:[%s0 + $0x24] sm:$0xff]
  %v44 = vld [vmem:[%s0 + $0x2c] sm:$0xff]
  %v45 = vld [vmem:[%s0 + $0x34] sm:$0xf]
  %v46 = vld [vmem:[%s0 + $0x38] sm:$0xff]
  %v47 = vld [vmem:[%s0 + $0x40] sm:$0xff]
  %v48 = vld [vmem:[%s0 + $0x48] sm:$0xff]
  %v49 = vld [vmem:[%s0 + $0x50] sm:$0xf]
  %v50 = vld [vmem:[%s0 + $0x54] sm:$0xff]
  %v51 = vld [vmem:[%s0 + $0x5c] sm:$0xff]
  %v52 = vld [vmem:[%s0 + $0x64] sm:$0xff]
  %v53 = vld [vmem:[%s0 + $0x6c] sm:$0xf]
  %v54 = vld [vmem:[%s0 + $0x70] sm:$0xff]
  %v55 = vld [vmem:[%s0 + $0x78] sm:$0xff]
  %v56 = vld [vmem:[%s0 + $0x80] sm:$0xff]
  %v57 = vld [vmem:[%s0 + $0x88] sm:$0xf]
  %v58 = vld [vmem:[%s0 + $0x8c] sm:$0xff]
  %v59 = vld [vmem:[%s0 + $0x94] sm:$0xff]
  %v60 = vld [vmem:[%s0 + $0x9c] sm:$0xff]
  %v61 = vld [vmem:[%s0 + $0xa4] sm:$0xf]
  %v62 = vld [vmem:[%s0 + $0xa8] sm:$0xff]
  %v63 = vld [vmem:[%s0 + $0xb0] sm:$0xff]
  %v64 = vld [vmem:[%s0 + $0xb8] sm:$0xff]
  %v65 = vld [vmem:[%s0 + $0xc0] sm:$0xf]
  %v66 = vld [vmem:[%s0 + $0xc4] sm:$0xff]
  %v67 = vld [vmem:[%s0 + $0xcc] sm:$0xff]
  %v68 = vld [vmem:[%s0 + $0xd4] sm:$0xff]
  %v69 = vld [vmem:[%s0 + $0xdc] sm:$0xf]
  %v70 = vld [vmem:[%s0 + $0xe0] sm:$0xff]
  %v71 = vld [vmem:[%s0 + $0xe8] sm:$0xff]
  %v72 = vld [vmem:[%s0 + $0xf0] sm:$0xff]
  %v73 = vld [vmem:[%s0 + $0xf8] sm:$0xf]
  %v74 = vld [vmem:[%s0 + $0xfc] sm:$0xff]
  %v75 = vld [vmem:[%s0 + $0x104] sm:$0xff]
  %v76 = vld [vmem:[%s0 + $0x10c] sm:$0xff]
  %v77 = vld [vmem:[%s0 + $0x114] sm:$0xf]
  %v78 = vld [vmem:[%s0 + $0x118] sm:$0xff]
  %v79 = vld [vmem:[%s0 + $0x120] sm:$0xff]
  %v80 = vld [vmem:[%s0 + $0x128] sm:$0xff]
  %v81 = vld [vmem:[%s0 + $0x130] sm:$0xf]
  %v82 = vld [vmem:[%s0 + $0x134] sm:$0xff]
  %v83 = vld [vmem:[%s0 + $0x13c] sm:$0xff]
  %v84 = vld [vmem:[%s0 + $0x144] sm:$0xff]
  %v85 = vld [vmem:[%s0 + $0x14c] sm:$0xf]
  %v86 = vld [vmem:[%s0 + $0x150] sm:$0xff]
  %v87 = vld [vmem:[%s0 + $0x158] sm:$0xff]
  %v88 = vld [vmem:[%s0 + $0x160] sm:$0xff]
  %v89 = vld [vmem:[%s0 + $0x168] sm:$0xf]
  %v90 = vld [vmem:[%s0 + $0x16c] sm:$0xff]
  %v91 = vld [vmem:[%s0 + $0x174] sm:$0xff]
  %v92 = vld [vmem:[%s0 + $0x17c] sm:$0xff]
  %v93 = vld [vmem:[%s0 + $0x184] sm:$0xf]
  %v94 = vld [vmem:[%s0 + $0x188] sm:$0xff]
  %v95 = vld [vmem:[%s0 + $0x190] sm:$0xff]
  %v96 = vld [vmem:[%s0 + $0x198] sm:$0xff]
  %v97 = vld [vmem:[%s0 + $0x1a0] sm:$0xf]
  %v98 = vld [vmem:[%s0 + $0x1a4] sm:$0xff]
  %v99 = vld [vmem:[%s0 + $0x1ac] sm:$0xff]
  %v100 = vld [vmem:[%s0 + $0x1b4] sm:$0xff]
  %v101 = vld [vmem:[%s0 + $0x1bc] sm:$0xf]
  %v102 = vld [vmem:[%s0 + $0x1c0] sm:$0xff]
  %v103 = vld [vmem:[%s0 + $0x1c8] sm:$0xff]
  %v104 = vld [vmem:[%s0 + $0x1d0] sm:$0xff]
  %v105 = vld [vmem:[%s0 + $0x1d8] sm:$0xf]
  %v106 = vld [vmem:[%s0 + $0x1dc] sm:$0xff]
  %v107 = vld [vmem:[%s0 + $0x1e4] sm:$0xff]
  %v108 = vld [vmem:[%s0 + $0x1ec] sm:$0xff]
  %v109 = vld [vmem:[%s0 + $0x1f4] sm:$0xf]
  %v110 = vld [vmem:[%s2] sm:$0xff]
  %v111 = vld [vmem:[%s2 + $0x8] sm:$0xff]
  %v112 = vld [vmem:[%s2 + $0x10] sm:$0xff]
  %v113 = vld [vmem:[%s2 + $0x18] sm:$0xff]
  %115 = vset.pattern.permute.xlu0 0
  %116 = vperm.xlu0 %115, %v110
  %v117 = vpop.permute.xlu0 %116
  %120 = vset.pattern.permute.xlu0 0
  %121 = vperm.xlu0 %120, %v111
  %v122 = vpop.permute.xlu0 %121
  %125 = vset.pattern.permute.xlu0 0
  %126 = vperm.xlu0 %125, %v112
  %v127 = vpop.permute.xlu0 %126
  %130 = vset.pattern.permute.xlu0 0
  %131 = vperm.xlu0 %130, %v113
  %v132 = vpop.permute.xlu0 %131
  %v138 = vunpack.c.l.b16 %v34
  %v139 = vunpack.c.h.b16 %v34
  %v140 = vunpack.c.l.b16 %v35
  %v141 = vunpack.c.h.b16 %v35
  %v142 = vunpack.c.l.b16 %v36
  %v143 = vunpack.c.h.b16 %v36
  %v144 = vunpack.c.l.b16 %v37
  %v145 = vunpack.c.h.b16 %v37
  %v146 = vpack.c.b16 %v140, %v138
  %v147 = vpack.c.b16 %v141, %v139
  %v148 = vpack.c.b16 %v144, %v142
  %v149 = vpack.c.b16 %v145, %v143
  %v224 = vunpack.c.l.b16 %v38
  %v225 = vunpack.c.h.b16 %v38
  %v226 = vunpack.c.l.b16 %v39
  %v227 = vunpack.c.h.b16 %v39
  %v228 = vunpack.c.l.b16 %v40
  %v229 = vunpack.c.h.b16 %v40
  %v230 = vunpack.c.l.b16 %v41
  %v231 = vunpack.c.l.b16 %v42
  %v232 = vunpack.c.h.b16 %v42
  %v233 = vunpack.c.l.b16 %v43
  %v234 = vunpack.c.h.b16 %v43
  %v235 = vunpack.c.l.b16 %v44
  %v236 = vunpack.c.h.b16 %v44
  %v237 = vunpack.c.l.b16 %v45
  %v238 = vunpack.c.l.b16 %v46
  %v239 = vunpack.c.h.b16 %v46
  %v240 = vunpack.c.l.b16 %v47
  %v241 = vunpack.c.h.b16 %v47
  %v242 = vunpack.c.l.b16 %v48
  %v243 = vunpack.c.h.b16 %v48
  %v244 = vunpack.c.l.b16 %v49
  %v245 = vunpack.c.l.b16 %v50
  %v246 = vunpack.c.h.b16 %v50
  %v247 = vunpack.c.l.b16 %v51
  %v248 = vunpack.c.h.b16 %v51
  %v249 = vunpack.c.l.b16 %v52
  %v250 = vunpack.c.h.b16 %v52
  %v251 = vunpack.c.l.b16 %v53
  %v252 = vunpack.c.l.b16 %v54
  %v253 = vunpack.c.h.b16 %v54
  %v254 = vunpack.c.l.b16 %v55
  %v255 = vunpack.c.h.b16 %v55
  %v256 = vunpack.c.l.b16 %v56
  %v257 = vunpack.c.h.b16 %v56
  %v258 = vunpack.c.l.b16 %v57
  %v259 = vunpack.c.l.b16 %v58
  %v260 = vunpack.c.h.b16 %v58
  %v261 = vunpack.c.l.b16 %v59
  %v262 = vunpack.c.h.b16 %v59
  %v263 = vunpack.c.l.b16 %v60
  %v264 = vunpack.c.h.b16 %v60
  %v265 = vunpack.c.l.b16 %v61
  %v266 = vunpack.c.l.b16 %v62
  %v267 = vunpack.c.h.b16 %v62
  %v268 = vunpack.c.l.b16 %v63
  %v269 = vunpack.c.h.b16 %v63
  %v270 = vunpack.c.l.b16 %v64
  %v271 = vunpack.c.h.b16 %v64
  %v272 = vunpack.c.l.b16 %v65
  %v273 = vunpack.c.l.b16 %v66
  %v274 = vunpack.c.h.b16 %v66
  %v275 = vunpack.c.l.b16 %v67
  %v276 = vunpack.c.h.b16 %v67
  %v277 = vunpack.c.l.b16 %v68
  %v278 = vunpack.c.h.b16 %v68
  %v279 = vunpack.c.l.b16 %v69
  %v280 = vunpack.c.l.b16 %v70
  %v281 = vunpack.c.h.b16 %v70
  %v282 = vunpack.c.l.b16 %v71
  %v283 = vunpack.c.h.b16 %v71
  %v284 = vunpack.c.l.b16 %v72
  %v285 = vunpack.c.h.b16 %v72
  %v286 = vunpack.c.l.b16 %v73
  %v287 = vunpack.c.l.b16 %v74
  %v288 = vunpack.c.h.b16 %v74
  %v289 = vunpack.c.l.b16 %v75
  %v290 = vunpack.c.h.b16 %v75
  %v291 = vunpack.c.l.b16 %v76
  %v292 = vunpack.c.h.b16 %v76
  %v293 = vunpack.c.l.b16 %v77
  %v294 = vunpack.c.l.b16 %v78
  %v295 = vunpack.c.h.b16 %v78
  %v296 = vunpack.c.l.b16 %v79
  %v297 = vunpack.c.h.b16 %v79
  %v298 = vunpack.c.l.b16 %v80
  %v299 = vunpack.c.h.b16 %v80
  %v300 = vunpack.c.l.b16 %v81
  %v301 = vunpack.c.l.b16 %v82
  %v302 = vunpack.c.h.b16 %v82
  %v303 = vunpack.c.l.b16 %v83
  %v304 = vunpack.c.h.b16 %v83
  %v305 = vunpack.c.l.b16 %v84
  %v306 = vunpack.c.h.b16 %v84
  %v307 = vunpack.c.l.b16 %v85
  %v308 = vunpack.c.l.b16 %v86
  %v309 = vunpack.c.h.b16 %v86
  %v310 = vunpack.c.l.b16 %v87
  %v311 = vunpack.c.h.b16 %v87
  %v312 = vunpack.c.l.b16 %v88
  %v313 = vunpack.c.h.b16 %v88
  %v314 = vunpack.c.l.b16 %v89
  %v315 = vunpack.c.l.b16 %v90
  %v316 = vunpack.c.h.b16 %v90
  %v317 = vunpack.c.l.b16 %v91
  %v318 = vunpack.c.h.b16 %v91
  %v319 = vunpack.c.l.b16 %v92
  %v320 = vunpack.c.h.b16 %v92
  %v321 = vunpack.c.l.b16 %v93
  %v322 = vunpack.c.l.b16 %v94
  %v323 = vunpack.c.h.b16 %v94
  %v324 = vunpack.c.l.b16 %v95
  %v325 = vunpack.c.h.b16 %v95
  %v326 = vunpack.c.l.b16 %v96
  %v327 = vunpack.c.h.b16 %v96
  %v328 = vunpack.c.l.b16 %v97
  %v329 = vunpack.c.l.b16 %v98
  %v330 = vunpack.c.h.b16 %v98
  %v331 = vunpack.c.l.b16 %v99
  %v332 = vunpack.c.h.b16 %v99
  %v333 = vunpack.c.l.b16 %v100
  %v334 = vunpack.c.h.b16 %v100
  %v335 = vunpack.c.l.b16 %v101
  %v336 = vunpack.c.l.b16 %v102
  %v337 = vunpack.c.h.b16 %v102
  %v338 = vunpack.c.l.b16 %v103
  %v339 = vunpack.c.h.b16 %v103
  %v340 = vunpack.c.l.b16 %v104
  %v341 = vunpack.c.h.b16 %v104
  %v342 = vunpack.c.l.b16 %v105
  %v343 = vunpack.c.l.b16 %v106
  %v344 = vunpack.c.h.b16 %v106
  %v345 = vunpack.c.l.b16 %v107
  %v346 = vunpack.c.h.b16 %v107
  %v347 = vunpack.c.l.b16 %v108
  %v348 = vunpack.c.h.b16 %v108
  %v349 = vunpack.c.l.b16 %v109
  %v350 = vpack.c.b16 %v231, %v224
  %v351 = vpack.c.b16 %v232, %v225
  %v352 = vpack.c.b16 %v233, %v226
  %v353 = vpack.c.b16 %v234, %v227
  %v354 = vpack.c.b16 %v235, %v228
  %v355 = vpack.c.b16 %v236, %v229
  %v356 = vpack.c.b16 %v237, %v230
  %v357 = vpack.c.b16 %v245, %v238
  %v358 = vpack.c.b16 %v246, %v239
  %v359 = vpack.c.b16 %v247, %v240
  %v360 = vpack.c.b16 %v248, %v241
  %v361 = vpack.c.b16 %v249, %v242
  %v362 = vpack.c.b16 %v250, %v243
  %v363 = vpack.c.b16 %v251, %v244
  %v364 = vpack.c.b16 %v259, %v252
  %v365 = vpack.c.b16 %v260, %v253
  %v366 = vpack.c.b16 %v261, %v254
  %v367 = vpack.c.b16 %v262, %v255
  %v368 = vpack.c.b16 %v263, %v256
  %v369 = vpack.c.b16 %v264, %v257
  %v370 = vpack.c.b16 %v265, %v258
  %v371 = vpack.c.b16 %v273, %v266
  %v372 = vpack.c.b16 %v274, %v267
  %v373 = vpack.c.b16 %v275, %v268
  %v374 = vpack.c.b16 %v276, %v269
  %v375 = vpack.c.b16 %v277, %v270
  %v376 = vpack.c.b16 %v278, %v271
  %v377 = vpack.c.b16 %v279, %v272
  %v378 = vpack.c.b16 %v287, %v280
  %v379 = vpack.c.b16 %v288, %v281
  %v380 = vpack.c.b16 %v289, %v282
  %v381 = vpack.c.b16 %v290, %v283
  %v382 = vpack.c.b16 %v291, %v284
  %v383 = vpack.c.b16 %v292, %v285
  %v384 = vpack.c.b16 %v293, %v286
  %v385 = vpack.c.b16 %v301, %v294
  %v386 = vpack.c.b16 %v302, %v295
  %v387 = vpack.c.b16 %v303, %v296
  %v388 = vpack.c.b16 %v304, %v297
  %v389 = vpack.c.b16 %v305, %v298
  %v390 = vpack.c.b16 %v306, %v299
  %v391 = vpack.c.b16 %v307, %v300
  %v392 = vpack.c.b16 %v315, %v308
  %v393 = vpack.c.b16 %v316, %v309
  %v394 = vpack.c.b16 %v317, %v310
  %v395 = vpack.c.b16 %v318, %v311
  %v396 = vpack.c.b16 %v319, %v312
  %v397 = vpack.c.b16 %v320, %v313
  %v398 = vpack.c.b16 %v321, %v314
  %v399 = vpack.c.b16 %v329, %v322
  %v400 = vpack.c.b16 %v330, %v323
  %v401 = vpack.c.b16 %v331, %v324
  %v402 = vpack.c.b16 %v332, %v325
  %v403 = vpack.c.b16 %v333, %v326
  %v404 = vpack.c.b16 %v334, %v327
  %v405 = vpack.c.b16 %v335, %v328
  %v406 = vpack.c.b16 %v343, %v336
  %v407 = vpack.c.b16 %v344, %v337
  %v408 = vpack.c.b16 %v345, %v338
  %v409 = vpack.c.b16 %v346, %v339
  %v410 = vpack.c.b16 %v347, %v340
  %v411 = vpack.c.b16 %v348, %v341
  %v412 = vpack.c.b16 %v349, %v342
  %vm476 = vcmask 130048
  %v478 = vsel %vm476, %v147, 0
  %v481 = vsel %vm476, %v149, 0
  %483 = vmatprep.subr.bf16.mxu0 %v351
  %484 = vmatpush1.bf16.msra.mxu0 %v350
  %485 = vmatprep.subr.bf16.mxu0 %v358
  %486 = vmatpush1.bf16.msra.mxu0 %v357
  %487 = vmatprep.subr.bf16.mxu0 %v365
  %488 = vmatpush1.bf16.msra.mxu0 %v364
  %489 = vmatprep.subr.bf16.mxu0 %v372
  %490 = vmatpush1.bf16.msra.mxu0 %v371
  %491 = vmatprep.subr.bf16.mxu0 %v379
  %492 = vmatpush1.bf16.msra.mxu0 %v378
  %493 = vmatprep.subr.bf16.mxu0 %v386
  %494 = vmatpush1.bf16.msra.mxu0 %v385
  %495 = vmatprep.subr.bf16.mxu0 %v393
  %496 = vmatpush1.bf16.msra.mxu0 %v392
  %497 = vmatprep.subr.bf16.mxu0 %v400
  %498 = vmatpush1.bf16.msra.mxu0 %v399
  %499 = vmatprep.subr.bf16.mxu0 %v407
  %500 = vmatpush1.bf16.msra.mxu0 %v406
  %501 = vmatprep.subr.bf16.mxu0 0
  %502 = vmatpush1.bf16.msra.mxu0 0
  %503 = vmatprep.subr.bf16.mxu0 0
  %504 = vmatpush1.bf16.msra.mxu0 0
  %505 = vmatprep.subr.bf16.mxu0 0
  %506 = vmatpush1.bf16.msra.mxu0 0
  %507 = vmatprep.subr.bf16.mxu0 0
  %508 = vmatpush1.bf16.msra.mxu0 0
  %509 = vmatprep.subr.bf16.mxu0 0
  %510 = vmatpush1.bf16.msra.mxu0 0
  %511 = vmatprep.subr.bf16.mxu0 0
  %512 = vmatpush1.bf16.msra.mxu0 0
  %513 = vmatprep.subr.bf16.mxu0 0
  %514 = vmatpush1.bf16.msra.mxu0 0
  %515 = vmatprep.mubr.bf16.mxu0 %v478
  %516 = vmatmul.mubr.bf16.gmra.mrb[0].mxu0 %v146
  %v517 = vpop.f32.mrb[0].mxu0
  %v518 = vadd.f32 %v117, %v517
  %v519 = vpop.f32.mrb[0].mxu0
  %v520 = vadd.f32 %v117, %v519
  %v521 = vpop.f32.mrb[0].mxu0
  %v522 = vadd.f32 %v122, %v521
  %v523 = vpop.f32.mrb[0].mxu0
  %v524 = vadd.f32 %v122, %v523
  %525 = vmatprep.mubr.bf16.mxu0 %v481
  %526 = vmatmul.mubr.bf16.gmra.mrb[0].mxu0 %v148
  %v527 = vpop.f32.mrb[0].mxu0
  %v528 = vadd.f32 %v127, %v527
  %v529 = vpop.f32.mrb[0].mxu0
  %v530 = vadd.f32 %v127, %v529
  %v531 = vpop.f32.mrb[0].mxu0
  %v532 = vadd.f32 %v132, %v531
  %v533 = vpop.f32.mrb[0].mxu0
  %v534 = vadd.f32 %v132, %v533
  %535 = vdwg.mxu0
  %536 = vmatprep.subr.bf16.mxu0 %v353
  %537 = vmatpush1.bf16.msra.mxu0 %v352
  %538 = vmatprep.subr.bf16.mxu0 %v360
  %539 = vmatpush1.bf16.msra.mxu0 %v359
  %540 = vmatprep.subr.bf16.mxu0 %v367
  %541 = vmatpush1.bf16.msra.mxu0 %v366
  %542 = vmatprep.subr.bf16.mxu0 %v374
  %543 = vmatpush1.bf16.msra.mxu0 %v373
  %544 = vmatprep.subr.bf16.mxu0 %v381
  %545 = vmatpush1.bf16.msra.mxu0 %v380
  %546 = vmatprep.subr.bf16.mxu0 %v388
  %547 = vmatpush1.bf16.msra.mxu0 %v387
  %548 = vmatprep.subr.bf16.mxu0 %v395
  %549 = vmatpush1.bf16.msra.mxu0 %v394
  %550 = vmatprep.subr.bf16.mxu0 %v402
  %551 = vmatpush1.bf16.msra.mxu0 %v401
  %552 = vmatprep.subr.bf16.mxu0 %v409
  %553 = vmatpush1.bf16.msra.mxu0 %v408
  %554 = vmatprep.subr.bf16.mxu0 0
  %555 = vmatpush1.bf16.msra.mxu0 0
  %556 = vmatprep.subr.bf16.mxu0 0
  %557 = vmatpush1.bf16.msra.mxu0 0
  %558 = vmatprep.subr.bf16.mxu0 0
  %559 = vmatpush1.bf16.msra.mxu0 0
  %560 = vmatprep.subr.bf16.mxu0 0
  %561 = vmatpush1.bf16.msra.mxu0 0
  %562 = vmatprep.subr.bf16.mxu0 0
  %563 = vmatpush1.bf16.msra.mxu0 0
  %564 = vmatprep.subr.bf16.mxu0 0
  %565 = vmatpush1.bf16.msra.mxu0 0
  %566 = vmatprep.subr.bf16.mxu0 0
  %567 = vmatpush1.bf16.msra.mxu0 0
  %568 = vmatprep.mubr.bf16.mxu0 %v478
  %569 = vmatmul.mubr.bf16.gmra.mrb[0].mxu0 %v146
  %v570 = vpop.f32.mrb[0].mxu0
  %v571 = vadd.f32 %v117, %v570
  %v572 = vpop.f32.mrb[0].mxu0
  %v573 = vadd.f32 %v117, %v572
  %v574 = vpop.f32.mrb[0].mxu0
  %v575 = vadd.f32 %v122, %v574
  %v576 = vpop.f32.mrb[0].mxu0
  %v577 = vadd.f32 %v122, %v576
  %578 = vmatprep.mubr.bf16.mxu0 %v481
  %579 = vmatmul.mubr.bf16.gmra.mrb[0].mxu0 %v148
  %v580 = vpop.f32.mrb[0].mxu0
  %v581 = vadd.f32 %v127, %v580
  %v582 = vpop.f32.mrb[0].mxu0
  %v583 = vadd.f32 %v127, %v582
  %v584 = vpop.f32.mrb[0].mxu0
  %v585 = vadd.f32 %v132, %v584
  %v586 = vpop.f32.mrb[0].mxu0
  %v587 = vadd.f32 %v132, %v586
  %588 = vdwg.mxu0
  %589 = vmatprep.subr.bf16.mxu0 %v355
  %590 = vmatpush1.bf16.msra.mxu0 %v354
  %591 = vmatprep.subr.bf16.mxu0 %v362
  %592 = vmatpush1.bf16.msra.mxu0 %v361
  %593 = vmatprep.subr.bf16.mxu0 %v369
  %594 = vmatpush1.bf16.msra.mxu0 %v368
  %595 = vmatprep.subr.bf16.mxu0 %v376
  %596 = vmatpush1.bf16.msra.mxu0 %v375
  %597 = vmatprep.subr.bf16.mxu0 %v383
  %598 = vmatpush1.bf16.msra.mxu0 %v382
  %599 = vmatprep.subr.bf16.mxu0 %v390
  %600 = vmatpush1.bf16.msra.mxu0 %v389
  %601 = vmatprep.subr.bf16.mxu0 %v397
  %602 = vmatpush1.bf16.msra.mxu0 %v396
  %603 = vmatprep.subr.bf16.mxu0 %v404
  %604 = vmatpush1.bf16.msra.mxu0 %v403
  %605 = vmatprep.subr.bf16.mxu0 %v411
  %606 = vmatpush1.bf16.msra.mxu0 %v410
  %607 = vmatprep.subr.bf16.mxu0 0
  %608 = vmatpush1.bf16.msra.mxu0 0
  %609 = vmatprep.subr.bf16.mxu0 0
  %610 = vmatpush1.bf16.msra.mxu0 0
  %611 = vmatprep.subr.bf16.mxu0 0
  %612 = vmatpush1.bf16.msra.mxu0 0
  %613 = vmatprep.subr.bf16.mxu0 0
  %614 = vmatpush1.bf16.msra.mxu0 0
  %615 = vmatprep.subr.bf16.mxu0 0
  %616 = vmatpush1.bf16.msra.mxu0 0
  %617 = vmatprep.subr.bf16.mxu0 0
  %618 = vmatpush1.bf16.msra.mxu0 0
  %619 = vmatprep.subr.bf16.mxu0 0
  %620 = vmatpush1.bf16.msra.mxu0 0
  %621 = vmatprep.mubr.bf16.mxu0 %v478
  %622 = vmatmul.mubr.bf16.gmra.mrb[0].mxu0 %v146
  %v623 = vpop.f32.mrb[0].mxu0
  %v624 = vadd.f32 %v117, %v623
  %v625 = vpop.f32.mrb[0].mxu0
  %v626 = vadd.f32 %v117, %v625
  %v627 = vpop.f32.mrb[0].mxu0
  %v628 = vadd.f32 %v122, %v627
  %v629 = vpop.f32.mrb[0].mxu0
  %v630 = vadd.f32 %v122, %v629
  %631 = vmatprep.mubr.bf16.mxu0 %v481
  %632 = vmatmul.mubr.bf16.gmra.mrb[0].mxu0 %v148
  %v633 = vpop.f32.mrb[0].mxu0
  %v634 = vadd.f32 %v127, %v633
  %v635 = vpop.f32.mrb[0].mxu0
  %v636 = vadd.f32 %v127, %v635
  %v637 = vpop.f32.mrb[0].mxu0
  %v638 = vadd.f32 %v132, %v637
  %v639 = vpop.f32.mrb[0].mxu0
  %v640 = vadd.f32 %v132, %v639
  %641 = vdwg.mxu0
  %642 = vmatprep.subr.bf16.mxu0 0
  %643 = vmatpush1.bf16.msra.mxu0 %v356
  %644 = vmatprep.subr.bf16.mxu0 0
  %645 = vmatpush1.bf16.msra.mxu0 %v363
  %646 = vmatprep.subr.bf16.mxu0 0
  %647 = vmatpush1.bf16.msra.mxu0 %v370
  %648 = vmatprep.subr.bf16.mxu0 0
  %649 = vmatpush1.bf16.msra.mxu0 %v377
  %650 = vmatprep.subr.bf16.mxu0 0
  %651 = vmatpush1.bf16.msra.mxu0 %v384
  %652 = vmatprep.subr.bf16.mxu0 0
  %653 = vmatpush1.bf16.msra.mxu0 %v391
  %654 = vmatprep.subr.bf16.mxu0 0
  %655 = vmatpush1.bf16.msra.mxu0 %v398
  %656 = vmatprep.subr.bf16.mxu0 0
  %657 = vmatpush1.bf16.msra.mxu0 %v405
  %658 = vmatprep.subr.bf16.mxu0 0
  %659 = vmatpush1.bf16.msra.mxu0 %v412
  %660 = vmatprep.subr.bf16.mxu0 0
  %661 = vmatpush1.bf16.msra.mxu0 0
  %662 = vmatprep.subr.bf16.mxu0 0
  %663 = vmatpush1.bf16.msra.mxu0 0
  %664 = vmatprep.subr.bf16.mxu0 0
  %665 = vmatpush1.bf16.msra.mxu0 0
  %666 = vmatprep.subr.bf16.mxu0 0
  %667 = vmatpush1.bf16.msra.mxu0 0
  %668 = vmatprep.subr.bf16.mxu0 0
  %669 = vmatpush1.bf16.msra.mxu0 0
  %670 = vmatprep.subr.bf16.mxu0 0
  %671 = vmatpush1.bf16.msra.mxu0 0
  %672 = vmatprep.subr.bf16.mxu0 0
  %673 = vmatpush1.bf16.msra.mxu0 0
  %674 = vmatprep.mubr.bf16.mxu0 %v478
  %675 = vmatmul.mubr.bf16.gmra.mrb[0].mxu0 %v146
  %v676 = vpop.f32.mrb[0].mxu0
  %v677 = vadd.f32 %v117, %v676
  %v678 = vpop.f32.mrb[0].mxu0
  %v679 = vpop.f32.mrb[0].mxu0
  %v680 = vadd.f32 %v122, %v679
  %v681 = vpop.f32.mrb[0].mxu0
  %682 = vmatprep.mubr.bf16.mxu0 %v481
  %683 = vmatmul.mubr.bf16.gmra.mrb[0].mxu0 %v148
  %v684 = vpop.f32.mrb[0].mxu0
  %v685 = vadd.f32 %v127, %v684
  %v686 = vpop.f32.mrb[0].mxu0
  %v687 = vpop.f32.mrb[0].mxu0
  %v688 = vadd.f32 %v132, %v687
  %v689 = vpop.f32.mrb[0].mxu0
  %690 = vdwg.mxu0
  %v691 = vmax.f32 %v518, 0.0
  %v692 = vmax.f32 %v520, 0.0
  %v693 = vmax.f32 %v571, 0.0
  %v694 = vmax.f32 %v573, 0.0
  %v695 = vmax.f32 %v624, 0.0
  %v696 = vmax.f32 %v626, 0.0
  %v697 = vmax.f32 %v677, 0.0
  %v698 = vmax.f32 %v522, 0.0
  %v699 = vmax.f32 %v524, 0.0
  %v700 = vmax.f32 %v575, 0.0
  %v701 = vmax.f32 %v577, 0.0
  %v702 = vmax.f32 %v628, 0.0
  %v703 = vmax.f32 %v630, 0.0
  %v704 = vmax.f32 %v680, 0.0
  %v705 = vmax.f32 %v528, 0.0
  %v706 = vmax.f32 %v530, 0.0
  %v707 = vmax.f32 %v581, 0.0
  %v708 = vmax.f32 %v583, 0.0
  %v709 = vmax.f32 %v634, 0.0
  %v710 = vmax.f32 %v636, 0.0
  %v711 = vmax.f32 %v685, 0.0
  %v712 = vmax.f32 %v532, 0.0
  %v713 = vmax.f32 %v534, 0.0
  %v714 = vmax.f32 %v585, 0.0
  %v715 = vmax.f32 %v587, 0.0
  %v716 = vmax.f32 %v638, 0.0
  %v717 = vmax.f32 %v640, 0.0
  %v718 = vmax.f32 %v688, 0.0
  %s719 = smul.u32 0, 896
  %v720 = vlaneseq
  %v721 = vand.u32 %v720, 127
  %v722 = vadd.s32 %v721, 128
  %v723 = vadd.s32 %v721, 256
  %v724 = vadd.s32 %v721, 384
  %v725 = vadd.s32 %v721, 512
  %v726 = vadd.s32 %v721, 640
  %v727 = vadd.s32 %v721, 768
  %v728 = vstv %s719
  %v729 = vadd.s32 %v728, %v721
  %v730 = vadd.s32 %v728, %v722
  %v731 = vadd.s32 %v728, %v723
  %v732 = vadd.s32 %v728, %v724
  %v733 = vadd.s32 %v728, %v725
  %v734 = vadd.s32 %v728, %v726
  %v735 = vadd.s32 %v728, %v727
  %vm736 = vcmp.lt.s32.totalorder %v729, 882
  %vm737 = vcmp.lt.s32.totalorder %v730, 882
  %vm738 = vcmp.lt.s32.totalorder %v731, 882
  %vm739 = vcmp.lt.s32.totalorder %v732, 882
  %vm740 = vcmp.lt.s32.totalorder %v733, 882
  %vm741 = vcmp.lt.s32.totalorder %v734, 882
  %vm742 = vcmp.lt.s32.totalorder %v735, 882
  %v743 = vsel %vm736, %v691, 0.0
  %v744 = vsel %vm737, %v692, 0.0
  %v745 = vsel %vm738, %v693, 0.0
  %v746 = vsel %vm739, %v694, 0.0
  %v747 = vsel %vm740, %v695, 0.0
  %v748 = vsel %vm741, %v696, 0.0
  %v749 = vsel %vm742, %v697, 0.0
  %v750 = vsel %vm736, %v698, 0.0
  %v751 = vsel %vm737, %v699, 0.0
  %v752 = vsel %vm738, %v700, 0.0
  %v753 = vsel %vm739, %v701, 0.0
  %v754 = vsel %vm740, %v702, 0.0
  %v755 = vsel %vm741, %v703, 0.0
  %v756 = vsel %vm742, %v704, 0.0
  %v757 = vsel %vm736, %v705, 0.0
  %v758 = vsel %vm737, %v706, 0.0
  %v759 = vsel %vm738, %v707, 0.0
  %v760 = vsel %vm739, %v708, 0.0
  %v761 = vsel %vm740, %v709, 0.0
  %v762 = vsel %vm741, %v710, 0.0
  %v763 = vsel %vm742, %v711, 0.0
  %v764 = vsel %vm736, %v712, 0.0
  %v765 = vsel %vm737, %v713, 0.0
  %v766 = vsel %vm738, %v714, 0.0
  %v767 = vsel %vm739, %v715, 0.0
  %v768 = vsel %vm740, %v716, 0.0
  %v769 = vsel %vm741, %v717, 0.0
  %v770 = vsel %vm742, %v718, 0.0
  %s771 = sshra.s32 %s719, 7
  %s772 = sand.u32 %s719, 127
  %s773 = smul.addr %s771, 8
  %s774 = scalar_lea.vmem %s5, %s773
  %775 = vst [vmem:[%s774] sm:$0xff] %v743
  %776 = vst [vmem:[%s774 + $0x8] sm:$0xff] %v744
  %777 = vst [vmem:[%s774 + $0x10] sm:$0xff] %v745
  %778 = vst [vmem:[%s774 + $0x18] sm:$0xff] %v746
  %779 = vst [vmem:[%s774 + $0x20] sm:$0xff] %v747
  %780 = vst [vmem:[%s774 + $0x28] sm:$0xff] %v748
  %781 = vst [vmem:[%s774 + $0x30] sm:$0xff] %v749
  %782 = vst [vmem:[%s774 + $0x38] sm:$0xff] %v750
  %783 = vst [vmem:[%s774 + $0x40] sm:$0xff] %v751
  %784 = vst [vmem:[%s774 + $0x48] sm:$0xff] %v752
  %785 = vst [vmem:[%s774 + $0x50] sm:$0xff] %v753
  %786 = vst [vmem:[%s774 + $0x58] sm:$0xff] %v754
  %787 = vst [vmem:[%s774 + $0x60] sm:$0xff] %v755
  %788 = vst [vmem:[%s774 + $0x68] sm:$0xff] %v756
  %789 = vst [vmem:[%s774 + $0x70] sm:$0xff] %v757
  %790 = vst [vmem:[%s774 + $0x78] sm:$0xff] %v758
  %791 = vst [vmem:[%s774 + $0x80] sm:$0xff] %v759
  %792 = vst [vmem:[%s774 + $0x88] sm:$0xff] %v760
  %793 = vst [vmem:[%s774 + $0x90] sm:$0xff] %v761
  %794 = vst [vmem:[%s774 + $0x98] sm:$0xff] %v762
  %795 = vst [vmem:[%s774 + $0xa0] sm:$0xff] %v763
  %796 = vst [vmem:[%s774 + $0xa8] sm:$0xff] %v764
  %797 = vst [vmem:[%s774 + $0xb0] sm:$0xff] %v765
  %798 = vst [vmem:[%s774 + $0xb8] sm:$0xff] %v766
  %799 = vst [vmem:[%s774 + $0xc0] sm:$0xff] %v767
  %800 = vst [vmem:[%s774 + $0xc8] sm:$0xff] %v768
  %801 = vst [vmem:[%s774 + $0xd0] sm:$0xff] %v769
  %802 = vst [vmem:[%s774 + $0xd8] sm:$0xff] %v770
  %v803 = vld [vmem:[#allocation2] sm:$0xff]
  %v804 = vld [vmem:[#allocation2 + $0x8] sm:$0xff]
  %v805 = vld [vmem:[#allocation2 + $0x10] sm:$0xff]
  %v806 = vld [vmem:[#allocation2 + $0x18] sm:$0xff]
  %v807 = vadd.f32 %v743, %v744
  %v808 = vadd.f32 %v807, %v745
  %v809 = vadd.f32 %v808, %v746
  %v810 = vadd.f32 %v809, %v747
  %v811 = vadd.f32 %v810, %v748
  %v812 = vadd.f32 %v811, %v749
  %813 = vadd.xlane.f32.xlu0 %v812
  %v814 = vpop.xlane.xlu0 %813
  %v815 = vadd.f32 %v750, %v751
  %v816 = vadd.f32 %v815, %v752
  %v817 = vadd.f32 %v816, %v753
  %v818 = vadd.f32 %v817, %v754
  %v819 = vadd.f32 %v818, %v755
  %v820 = vadd.f32 %v819, %v756
  %821 = vadd.xlane.f32.xlu0 %v820
  %v822 = vpop.xlane.xlu0 %821
  %v823 = vadd.f32 %v757, %v758
  %v824 = vadd.f32 %v823, %v759
  %v825 = vadd.f32 %v824, %v760
  %v826 = vadd.f32 %v825, %v761
  %v827 = vadd.f32 %v826, %v762
  %v828 = vadd.f32 %v827, %v763
  %829 = vadd.xlane.f32.xlu0 %v828
  %v830 = vpop.xlane.xlu0 %829
  %v831 = vadd.f32 %v764, %v765
  %v832 = vadd.f32 %v831, %v766
  %v833 = vadd.f32 %v832, %v767
  %v834 = vadd.f32 %v833, %v768
  %v835 = vadd.f32 %v834, %v769
  %v836 = vadd.f32 %v835, %v770
  %837 = vadd.xlane.f32.xlu0 %v836
  %v838 = vpop.xlane.xlu0 %837
  %v839 = vadd.f32 %v803, %v814
  %v840 = vadd.f32 %v804, %v822
  %v841 = vadd.f32 %v805, %v830
  %v842 = vadd.f32 %v806, %v838
  %vm843 = vcmask 7168
  %844 = vst.msk [vmem:[#allocation2] sm:$0xff] %vm843, %v839
  %845 = vst.msk [vmem:[#allocation2 + $0x8] sm:$0xff] %vm843, %v840
  %846 = vst.msk [vmem:[#allocation2 + $0x10] sm:$0xff] %vm843, %v841
  %847 = vst.msk [vmem:[#allocation2 + $0x18] sm:$0xff] %vm843, %v842
  %v848 = vld [vmem:[#allocation3] sm:$0xff]
  %v849 = vld [vmem:[#allocation3 + $0x8] sm:$0xff]
  %v850 = vld [vmem:[#allocation3 + $0x10] sm:$0xff]
  %v851 = vld [vmem:[#allocation3 + $0x18] sm:$0xff]
  %v852 = vmul.f32 %v743, %v743
  %v853 = vmul.f32 %v744, %v744
  %v854 = vmul.f32 %v745, %v745
  %v855 = vmul.f32 %v746, %v746
  %v856 = vmul.f32 %v747, %v747
  %v857 = vmul.f32 %v748, %v748
  %v858 = vmul.f32 %v749, %v749
  %v859 = vmul.f32 %v750, %v750
  %v860 = vmul.f32 %v751, %v751
  %v861 = vmul.f32 %v752, %v752
  %v862 = vmul.f32 %v753, %v753
  %v863 = vmul.f32 %v754, %v754
  %v864 = vmul.f32 %v755, %v755
  %v865 = vmul.f32 %v756, %v756
  %v866 = vmul.f32 %v757, %v757
  %v867 = vmul.f32 %v758, %v758
  %v868 = vmul.f32 %v759, %v759
  %v869 = vmul.f32 %v760, %v760
  %v870 = vmul.f32 %v761, %v761
  %v871 = vmul.f32 %v762, %v762
  %v872 = vmul.f32 %v763, %v763
  %v873 = vmul.f32 %v764, %v764
  %v874 = vmul.f32 %v765, %v765
  %v875 = vmul.f32 %v766, %v766
  %v876 = vmul.f32 %v767, %v767
  %v877 = vmul.f32 %v768, %v768
  %v878 = vmul.f32 %v769, %v769
  %v879 = vmul.f32 %v770, %v770
  %v880 = vadd.f32 %v852, %v853
  %v881 = vadd.f32 %v880, %v854
  %v882 = vadd.f32 %v881, %v855
  %v883 = vadd.f32 %v882, %v856
  %v884 = vadd.f32 %v883, %v857
  %v885 = vadd.f32 %v884, %v858
  %886 = vadd.xlane.f32.xlu0 %v885
  %v887 = vpop.xlane.xlu0 %886
  %v888 = vadd.f32 %v859, %v860
  %v889 = vadd.f32 %v888, %v861
  %v890 = vadd.f32 %v889, %v862
  %v891 = vadd.f32 %v890, %v863
  %v892 = vadd.f32 %v891, %v864
  %v893 = vadd.f32 %v892, %v865
  %894 = vadd.xlane.f32.xlu0 %v893
  %v895 = vpop.xlane.xlu0 %894
  %v896 = vadd.f32 %v866, %v867
  %v897 = vadd.f32 %v896, %v868
  %v898 = vadd.f32 %v897, %v869
  %v899 = vadd.f32 %v898, %v870
  %v900 = vadd.f32 %v899, %v871
  %v901 = vadd.f32 %v900, %v872
  %902 = vadd.xlane.f32.xlu0 %v901
  %v903 = vpop.xlane.xlu0 %902
  %v904 = vadd.f32 %v873, %v874
  %v905 = vadd.f32 %v904, %v875
  %v906 = vadd.f32 %v905, %v876
  %v907 = vadd.f32 %v906, %v877
  %v908 = vadd.f32 %v907, %v878
  %v909 = vadd.f32 %v908, %v879
  %910 = vadd.xlane.f32.xlu0 %v909
  %v911 = vpop.xlane.xlu0 %910
  %v912 = vadd.f32 %v848, %v887
  %v913 = vadd.f32 %v849, %v895
  %v914 = vadd.f32 %v850, %v903
  %v915 = vadd.f32 %v851, %v911
  %916 = vst.msk [vmem:[#allocation3] sm:$0xff] %vm843, %v912
  %917 = vst.msk [vmem:[#allocation3 + $0x8] sm:$0xff] %vm843, %v913
  %918 = vst.msk [vmem:[#allocation3 + $0x10] sm:$0xff] %vm843, %v914
  %919 = vst.msk [vmem:[#allocation3 + $0x18] sm:$0xff] %vm843, %v915
  // Predicated region
  $region26: #{my_cnn_forward.5} parent=0 // pred_check
    %p920 = pneg %p21
  $region27: #{my_cnn_forward.5} parent=0 // pred_check_branch
    %922 = sbr.rel (%p920) target = $region29
  $region28: #{my_cnn_forward.5} parent=0 // pred_region
    %v923 = vld [vmem:[#allocation2] sm:$0xff]
    %v924 = vld [vmem:[#allocation2 + $0x8] sm:$0xff]
    %v925 = vld [vmem:[#allocation2 + $0x10] sm:$0xff]
    %v926 = vld [vmem:[#allocation2 + $0x18] sm:$0xff]
    %v927 = vrcp.pop 882.0
    %v928 = vmul.f32 %v923, %v927
    %v929 = vmul.f32 %v924, %v927
    %v930 = vmul.f32 %v925, %v927
    %v931 = vmul.f32 %v926, %v927
    %v932 = vld [vmem:[#allocation3] sm:$0xff]
    %v933 = vld [vmem:[#allocation3 + $0x8] sm:$0xff]
    %v934 = vld [vmem:[#allocation3 + $0x10] sm:$0xff]
    %v935 = vld [vmem:[#allocation3 + $0x18] sm:$0xff]
    %v936 = vmul.f32 %v932, %v927
    %v937 = vmul.f32 %v933, %v927
    %v938 = vmul.f32 %v934, %v927
    %v939 = vmul.f32 %v935, %v927
    %v940 = vmul.f32 %v928, %v928
    %v941 = vmul.f32 %v929, %v929
    %v942 = vmul.f32 %v930, %v930
    %v943 = vmul.f32 %v931, %v931
    %v944 = vsub.f32 %v936, %v940
    %v945 = vsub.f32 %v937, %v941
    %v946 = vsub.f32 %v938, %v942
    %v947 = vsub.f32 %v939, %v943
    %v948 = vadd.f32 %v944, 1e-05
    %v949 = vadd.f32 %v945, 1e-05
    %v950 = vadd.f32 %v946, 1e-05
    %v951 = vadd.f32 %v947, 1e-05
    %v952 = vrsqrt.pop %v948
    %v953 = vrsqrt.pop %v949
    %v954 = vrsqrt.pop %v950
    %v955 = vrsqrt.pop %v951
    %v956 = vld [vmem:[%s3] sm:$0xff]
    %v957 = vld [vmem:[%s3 + $0x8] sm:$0xff]
    %v958 = vld [vmem:[%s3 + $0x10] sm:$0xff]
    %v959 = vld [vmem:[%s3 + $0x18] sm:$0xff]
    %v960 = vmul.f32 %v952, %v956
    %v961 = vmul.f32 %v953, %v957
    %v962 = vmul.f32 %v954, %v958
    %v963 = vmul.f32 %v955, %v959
    %v964 = vld [vmem:[%s4] sm:$0xff]
    %v965 = vld [vmem:[%s4 + $0x8] sm:$0xff]
    %v966 = vld [vmem:[%s4 + $0x10] sm:$0xff]
    %v967 = vld [vmem:[%s4 + $0x18] sm:$0xff]
    %v968 = vmul.f32 %v928, %v960
    %v969 = vmul.f32 %v929, %v961
    %v970 = vmul.f32 %v930, %v962
    %v971 = vmul.f32 %v931, %v963
    %v972 = vsub.f32 %v964, %v968
    %v973 = vsub.f32 %v965, %v969
    %v974 = vsub.f32 %v966, %v970
    %v975 = vsub.f32 %v967, %v971
    %v976 = vld [vmem:[%s5] sm:$0xff]
    %v977 = vld [vmem:[%s5 + $0x8] sm:$0xff]
    %v978 = vld [vmem:[%s5 + $0x10] sm:$0xff]
    %v979 = vld [vmem:[%s5 + $0x18] sm:$0xff]
    %v980 = vld [vmem:[%s5 + $0x20] sm:$0xff]
    %v981 = vld [vmem:[%s5 + $0x28] sm:$0xff]
    %v982 = vld [vmem:[%s5 + $0x30] sm:$0xff]
    %v983 = vld [vmem:[%s5 + $0x38] sm:$0xff]
    %v984 = vld [vmem:[%s5 + $0x40] sm:$0xff]
    %v985 = vld [vmem:[%s5 + $0x48] sm:$0xff]
    %v986 = vld [vmem:[%s5 + $0x50] sm:$0xff]
    %v987 = vld [vmem:[%s5 + $0x58] sm:$0xff]
    %v988 = vld [vmem:[%s5 + $0x60] sm:$0xff]
    %v989 = vld [vmem:[%s5 + $0x68] sm:$0xff]
    %v990 = vld [vmem:[%s5 + $0x70] sm:$0xff]
    %v991 = vld [vmem:[%s5 + $0x78] sm:$0xff]
    %v992 = vld [vmem:[%s5 + $0x80] sm:$0xff]
    %v993 = vld [vmem:[%s5 + $0x88] sm:$0xff]
    %v994 = vld [vmem:[%s5 + $0x90] sm:$0xff]
    %v995 = vld [vmem:[%s5 + $0x98] sm:$0xff]
    %v996 = vld [vmem:[%s5 + $0xa0] sm:$0xff]
    %v997 = vld [vmem:[%s5 + $0xa8] sm:$0xff]
    %v998 = vld [vmem:[%s5 + $0xb0] sm:$0xff]
    %v999 = vld [vmem:[%s5 + $0xb8] sm:$0xff]
    %v1000 = vld [vmem:[%s5 + $0xc0] sm:$0xff]
    %v1001 = vld [vmem:[%s5 + $0xc8] sm:$0xff]
    %v1002 = vld [vmem:[%s5 + $0xd0] sm:$0xff]
    %v1003 = vld [vmem:[%s5 + $0xd8] sm:$0xff]
    %1005 = vset.pattern.permute.xlu0 0
    %1006 = vperm.xlu0 %1005, %v960
    %v1007 = vpop.permute.xlu0 %1006
    %1010 = vset.pattern.permute.xlu0 0
    %1011 = vperm.xlu0 %1010, %v961
    %v1012 = vpop.permute.xlu0 %1011
    %1015 = vset.pattern.permute.xlu0 0
    %1016 = vperm.xlu0 %1015, %v962
    %v1017 = vpop.permute.xlu0 %1016
    %1020 = vset.pattern.permute.xlu0 0
    %1021 = vperm.xlu0 %1020, %v963
    %v1022 = vpop.permute.xlu0 %1021
    %v1024 = vmul.f32 %v976, %v1007
    %v1025 = vmul.f32 %v977, %v1007
    %v1026 = vmul.f32 %v978, %v1007
    %v1027 = vmul.f32 %v979, %v1007
    %v1028 = vmul.f32 %v980, %v1007
    %v1029 = vmul.f32 %v981, %v1007
    %v1030 = vmul.f32 %v982, %v1007
    %v1031 = vmul.f32 %v983, %v1012
    %v1032 = vmul.f32 %v984, %v1012
    %v1033 = vmul.f32 %v985, %v1012
    %v1034 = vmul.f32 %v986, %v1012
    %v1035 = vmul.f32 %v987, %v1012
    %v1036 = vmul.f32 %v988, %v1012
    %v1037 = vmul.f32 %v989, %v1012
    %v1038 = vmul.f32 %v990, %v1017
    %v1039 = vmul.f32 %v991, %v1017
    %v1040 = vmul.f32 %v992, %v1017
    %v1041 = vmul.f32 %v993, %v1017
    %v1042 = vmul.f32 %v994, %v1017
    %v1043 = vmul.f32 %v995, %v1017
    %v1044 = vmul.f32 %v996, %v1017
    %v1045 = vmul.f32 %v997, %v1022
    %v1046 = vmul.f32 %v998, %v1022
    %v1047 = vmul.f32 %v999, %v1022
    %v1048 = vmul.f32 %v1000, %v1022
    %v1049 = vmul.f32 %v1001, %v1022
    %v1050 = vmul.f32 %v1002, %v1022
    %v1051 = vmul.f32 %v1003, %v1022
    %1053 = vset.pattern.permute.xlu0 0
    %1054 = vperm.xlu0 %1053, %v972
    %v1055 = vpop.permute.xlu0 %1054
    %1058 = vset.pattern.permute.xlu0 0
    %1059 = vperm.xlu0 %1058, %v973
    %v1060 = vpop.permute.xlu0 %1059
    %1063 = vset.pattern.permute.xlu0 0
    %1064 = vperm.xlu0 %1063, %v974
    %v1065 = vpop.permute.xlu0 %1064
    %1068 = vset.pattern.permute.xlu0 0
    %1069 = vperm.xlu0 %1068, %v975
    %v1070 = vpop.permute.xlu0 %1069
    %v1072 = vadd.f32 %v1024, %v1055
    %v1073 = vadd.f32 %v1025, %v1055
    %v1074 = vadd.f32 %v1026, %v1055
    %v1075 = vadd.f32 %v1027, %v1055
    %v1076 = vadd.f32 %v1028, %v1055
    %v1077 = vadd.f32 %v1029, %v1055
    %v1078 = vadd.f32 %v1030, %v1055
    %v1079 = vadd.f32 %v1031, %v1060
    %v1080 = vadd.f32 %v1032, %v1060
    %v1081 = vadd.f32 %v1033, %v1060
    %v1082 = vadd.f32 %v1034, %v1060
    %v1083 = vadd.f32 %v1035, %v1060
    %v1084 = vadd.f32 %v1036, %v1060
    %v1085 = vadd.f32 %v1037, %v1060
    %v1086 = vadd.f32 %v1038, %v1065
    %v1087 = vadd.f32 %v1039, %v1065
    %v1088 = vadd.f32 %v1040, %v1065
    %v1089 = vadd.f32 %v1041, %v1065
    %v1090 = vadd.f32 %v1042, %v1065
    %v1091 = vadd.f32 %v1043, %v1065
    %v1092 = vadd.f32 %v1044, %v1065
    %v1093 = vadd.f32 %v1045, %v1070
    %v1094 = vadd.f32 %v1046, %v1070
    %v1095 = vadd.f32 %v1047, %v1070
    %v1096 = vadd.f32 %v1048, %v1070
    %v1097 = vadd.f32 %v1049, %v1070
    %v1098 = vadd.f32 %v1050, %v1070
    %v1099 = vadd.f32 %v1051, %v1070
    %1100 = vst [vmem:[%s5] sm:$0xff] %v1072
    %1101 = vst [vmem:[%s5 + $0x8] sm:$0xff] %v1073
    %1102 = vst [vmem:[%s5 + $0x10] sm:$0xff] %v1074
    %1103 = vst [vmem:[%s5 + $0x18] sm:$0xff] %v1075
    %1104 = vst [vmem:[%s5 + $0x20] sm:$0xff] %v1076
    %1105 = vst [vmem:[%s5 + $0x28] sm:$0xff] %v1077
    %1106 = vst [vmem:[%s5 + $0x30] sm:$0xff] %v1078
    %1107 = vst [vmem:[%s5 + $0x38] sm:$0xff] %v1079
    %1108 = vst [vmem:[%s5 + $0x40] sm:$0xff] %v1080
    %1109 = vst [vmem:[%s5 + $0x48] sm:$0xff] %v1081
    %1110 = vst [vmem:[%s5 + $0x50] sm:$0xff] %v1082
    %1111 = vst [vmem:[%s5 + $0x58] sm:$0xff] %v1083
    %1112 = vst [vmem:[%s5 + $0x60] sm:$0xff] %v1084
    %1113 = vst [vmem:[%s5 + $0x68] sm:$0xff] %v1085
    %1114 = vst [vmem:[%s5 + $0x70] sm:$0xff] %v1086
    %1115 = vst [vmem:[%s5 + $0x78] sm:$0xff] %v1087
    %1116 = vst [vmem:[%s5 + $0x80] sm:$0xff] %v1088
    %1117 = vst [vmem:[%s5 + $0x88] sm:$0xff] %v1089
    %1118 = vst [vmem:[%s5 + $0x90] sm:$0xff] %v1090
    %1119 = vst [vmem:[%s5 + $0x98] sm:$0xff] %v1091
    %1120 = vst [vmem:[%s5 + $0xa0] sm:$0xff] %v1092
    %1121 = vst [vmem:[%s5 + $0xa8] sm:$0xff] %v1093
    %1122 = vst [vmem:[%s5 + $0xb0] sm:$0xff] %v1094
    %1123 = vst [vmem:[%s5 + $0xb8] sm:$0xff] %v1095
    %1124 = vst [vmem:[%s5 + $0xc0] sm:$0xff] %v1096
    %1125 = vst [vmem:[%s5 + $0xc8] sm:$0xff] %v1097
    %1126 = vst [vmem:[%s5 + $0xd0] sm:$0xff] %v1098
    %1127 = vst [vmem:[%s5 + $0xd8] sm:$0xff] %v1099
  $region29: #{my_cnn_forward.5} parent=0 // pred_fallthru
    _
  // Predicated region
  $region30: #{my_cnn_forward.5} parent=0 // pred_check
    _
  $region31: #{my_cnn_forward.5} parent=0 // pred_check_branch
    %1129 = sbr.rel (0) target = $region33
  $region32: #{my_cnn_forward.5} parent=0 // pred_region
    _
  $region33: #{my_cnn_forward.5} parent=0 // pred_fallthru
    _
  // Predicated region
  $region34: #{my_cnn_forward.5} parent=0 // pred_check
    _
  $region35: #{my_cnn_forward.5} parent=0 // pred_check_branch
    %1131 = sbr.rel (0) target = $region37
  $region36: #{my_cnn_forward.5} parent=0 // pred_region
    _
  $region37: #{my_cnn_forward.5} parent=0 // pred_fallthru
    _

// kernel: my_cnn_forward.6
$region0: #{my_cnn_forward.6}
  #allocation0 [shape = 'u32[]', space=smem, size = 0x4, offset = 0x4, fixed_abs, tag = 'smem constant byte address 0x4 - core index']
  #allocation1 [shape = 'u32[144,128]{1,0:T(1,128)}', space=vmem, size = 0x12000, scoped, tag = 'internal scratch']
  #allocation2 [shape = 'f32[64,1]{1,0:T(8,128)}', space=vmem, size = 0x8000, scoped, tag = 'scratch operand']
  #allocation3 [shape = 'f32[64,1]{1,0:T(8,128)}', space=vmem, size = 0x8000, scoped, tag = 'scratch operand']
  %s0 = inlined_call_operand.vmem [shape: bf16[288,128], index: 0, kind: input, shape index: {}]
  %s1 = inlined_call_operand.vmem [shape: bf16[64,288], index: 1, kind: input, shape index: {}]
  %s2 = inlined_call_operand.vmem [shape: f32[64,1], index: 2, kind: input, shape index: {}]
  %s3 = inlined_call_operand.vmem [shape: f32[64,1], index: 3, kind: input, shape index: {}]
  %s4 = inlined_call_operand.vmem [shape: f32[64,1], index: 4, kind: input, shape index: {}]
  %s5 = inlined_call_operand.vmem [shape: f32[64,128], index: 5, kind: output, shape index: {}]
  %s6 = sld [smem:[#allocation0]]
  $region38: #{my_cnn_forward.6} parent=0
    _
  %s8 = ssub.s32 1, %s6
  %s9 = scalar_select 0, %s8, %s6
  // Predicated region
  $region2: #{my_cnn_forward.6} parent=0 // pred_check
    _
  $region3: #{my_cnn_forward.6} parent=0 // pred_check_branch
    %11 = sbr.rel (0) target = $region5
  $region4: #{my_cnn_forward.6} parent=0 // pred_region
    _
  $region5: #{my_cnn_forward.6} parent=0 // pred_fallthru
    _
  // Predicated region
  $region6: #{my_cnn_forward.6} parent=0 // pred_check
    _
  $region7: #{my_cnn_forward.6} parent=0 // pred_check_branch
    %13 = sbr.rel (0) target = $region9
  $region8: #{my_cnn_forward.6} parent=0 // pred_region
    _
  $region9: #{my_cnn_forward.6} parent=0 // pred_fallthru
    _
  // Predicated region
  $region10: #{my_cnn_forward.6} parent=0 // pred_check
    _
  $region11: #{my_cnn_forward.6} parent=0 // pred_check_branch
    %15 = sbr.rel (0) target = $region13
  $region12: #{my_cnn_forward.6} parent=0 // pred_region
    _
  $region13: #{my_cnn_forward.6} parent=0 // pred_fallthru
    _
  // Predicated region
  $region14: #{my_cnn_forward.6} parent=0 // pred_check
    _
  $region15: #{my_cnn_forward.6} parent=0 // pred_check_branch
    %17 = sbr.rel (0) target = $region17
  $region16: #{my_cnn_forward.6} parent=0 // pred_region
    _
  $region17: #{my_cnn_forward.6} parent=0 // pred_fallthru
    _
  // Predicated region
  $region18: #{my_cnn_forward.6} parent=0 // pred_check
    _
  $region19: #{my_cnn_forward.6} parent=0 // pred_check_branch
    %19 = sbr.rel (0) target = $region21
  $region20: #{my_cnn_forward.6} parent=0 // pred_region
    _
  $region21: #{my_cnn_forward.6} parent=0 // pred_fallthru
    _
  %p21 = scmp.eq.s32.totalorder 0, 0
  // Predicated region
  $region22: #{my_cnn_forward.6} parent=0 // pred_check
    %p22 = pneg %p21
  $region23: #{my_cnn_forward.6} parent=0 // pred_check_branch
    %24 = sbr.rel (%p22) target = $region25
  $region24: #{my_cnn_forward.6} parent=0 // pred_region
    %vm25 = vcmask 7168
    %26 = vst.msk [vmem:[#allocation2] sm:$0xff] %vm25, 0.0
    %27 = vst.msk [vmem:[#allocation2 + $0x8] sm:$0xff] %vm25, 0.0
    %28 = vst.msk [vmem:[#allocation2 + $0x10] sm:$0xff] %vm25, 0.0
    %29 = vst.msk [vmem:[#allocation2 + $0x18] sm:$0xff] %vm25, 0.0
    %30 = vst.msk [vmem:[#allocation2 + $0x20] sm:$0xff] %vm25, 0.0
    %31 = vst.msk [vmem:[#allocation2 + $0x28] sm:$0xff] %vm25, 0.0
    %32 = vst.msk [vmem:[#allocation2 + $0x30] sm:$0xff] %vm25, 0.0
    %33 = vst.msk [vmem:[#allocation2 + $0x38] sm:$0xff] %vm25, 0.0
    %34 = vst.msk [vmem:[#allocation3] sm:$0xff] %vm25, 0.0
    %35 = vst.msk [vmem:[#allocation3 + $0x8] sm:$0xff] %vm25, 0.0
    %36 = vst.msk [vmem:[#allocation3 + $0x10] sm:$0xff] %vm25, 0.0
    %37 = vst.msk [vmem:[#allocation3 + $0x18] sm:$0xff] %vm25, 0.0
    %38 = vst.msk [vmem:[#allocation3 + $0x20] sm:$0xff] %vm25, 0.0
    %39 = vst.msk [vmem:[#allocation3 + $0x28] sm:$0xff] %vm25, 0.0
    %40 = vst.msk [vmem:[#allocation3 + $0x30] sm:$0xff] %vm25, 0.0
    %41 = vst.msk [vmem:[#allocation3 + $0x38] sm:$0xff] %vm25, 0.0
  $region25: #{my_cnn_forward.6} parent=0 // pred_fallthru
    _
  %v42 = vld [vmem:[%s1] sm:$0xff]
  %v43 = vld [vmem:[%s1 + $0x8] sm:$0xf]
  %v44 = vld [vmem:[%s1 + $0xc] sm:$0xff]
  %v45 = vld [vmem:[%s1 + $0x14] sm:$0xf]
  %v46 = vld [vmem:[%s1 + $0x18] sm:$0xff]
  %v47 = vld [vmem:[%s1 + $0x20] sm:$0xf]
  %v48 = vld [vmem:[%s1 + $0x24] sm:$0xff]
  %v49 = vld [vmem:[%s1 + $0x2c] sm:$0xf]
  %v50 = vld [vmem:[%s1 + $0x30] sm:$0xff]
  %v51 = vld [vmem:[%s1 + $0x38] sm:$0xf]
  %v52 = vld [vmem:[%s1 + $0x3c] sm:$0xff]
  %v53 = vld [vmem:[%s1 + $0x44] sm:$0xf]
  %v54 = vld [vmem:[%s1 + $0x48] sm:$0xff]
  %v55 = vld [vmem:[%s1 + $0x50] sm:$0xf]
  %v56 = vld [vmem:[%s1 + $0x54] sm:$0xff]
  %v57 = vld [vmem:[%s1 + $0x5c] sm:$0xf]
  %v58 = vld [vmem:[%s0] sm:$0xf]
  %v59 = vld [vmem:[%s0 + $0x4] sm:$0xf]
  %v60 = vld [vmem:[%s0 + $0x8] sm:$0xf]
  %v61 = vld [vmem:[%s0 + $0xc] sm:$0xf]
  %v62 = vld [vmem:[%s0 + $0x10] sm:$0xf]
  %v63 = vld [vmem:[%s0 + $0x14] sm:$0xf]
  %v64 = vld [vmem:[%s0 + $0x18] sm:$0xf]
  %v65 = vld [vmem:[%s0 + $0x1c] sm:$0xf]
  %v66 = vld [vmem:[%s0 + $0x20] sm:$0xf]
  %v67 = vld [vmem:[%s0 + $0x24] sm:$0xf]
  %v68 = vld [vmem:[%s0 + $0x28] sm:$0xf]
  %v69 = vld [vmem:[%s0 + $0x2c] sm:$0xf]
  %v70 = vld [vmem:[%s0 + $0x30] sm:$0xf]
  %v71 = vld [vmem:[%s0 + $0x34] sm:$0xf]
  %v72 = vld [vmem:[%s0 + $0x38] sm:$0xf]
  %v73 = vld [vmem:[%s0 + $0x3c] sm:$0xf]
  %v74 = vld [vmem:[%s0 + $0x40] sm:$0xf]
  %v75 = vld [vmem:[%s0 + $0x44] sm:$0xf]
  %v76 = vld [vmem:[%s0 + $0x48] sm:$0xf]
  %v77 = vld [vmem:[%s0 + $0x4c] sm:$0xf]
  %v78 = vld [vmem:[%s0 + $0x50] sm:$0xf]
  %v79 = vld [vmem:[%s0 + $0x54] sm:$0xf]
  %v80 = vld [vmem:[%s0 + $0x58] sm:$0xf]
  %v81 = vld [vmem:[%s0 + $0x5c] sm:$0xf]
  %v82 = vld [vmem:[%s0 + $0x60] sm:$0xf]
  %v83 = vld [vmem:[%s0 + $0x64] sm:$0xf]
  %v84 = vld [vmem:[%s0 + $0x68] sm:$0xf]
  %v85 = vld [vmem:[%s0 + $0x6c] sm:$0xf]
  %v86 = vld [vmem:[%s0 + $0x70] sm:$0xf]
  %v87 = vld [vmem:[%s0 + $0x74] sm:$0xf]
  %v88 = vld [vmem:[%s0 + $0x78] sm:$0xf]
  %v89 = vld [vmem:[%s0 + $0x7c] sm:$0xf]
  %v90 = vld [vmem:[%s0 + $0x80] sm:$0xf]
  %v91 = vld [vmem:[%s0 + $0x84] sm:$0xf]
  %v92 = vld [vmem:[%s0 + $0x88] sm:$0xf]
  %v93 = vld [vmem:[%s0 + $0x8c] sm:$0xf]
  %v94 = vld [vmem:[%s2] sm:$0xff]
  %v95 = vld [vmem:[%s2 + $0x8] sm:$0xff]
  %v96 = vld [vmem:[%s2 + $0x10] sm:$0xff]
  %v97 = vld [vmem:[%s2 + $0x18] sm:$0xff]
  %v98 = vld [vmem:[%s2 + $0x20] sm:$0xff]
  %v99 = vld [vmem:[%s2 + $0x28] sm:$0xff]
  %v100 = vld [vmem:[%s2 + $0x30] sm:$0xff]
  %v101 = vld [vmem:[%s2 + $0x38] sm:$0xff]
  %103 = vset.pattern.permute.xlu0 0
  %104 = vperm.xlu0 %103, %v94
  %v105 = vpop.permute.xlu0 %104
  %108 = vset.pattern.permute.xlu0 0
  %109 = vperm.xlu0 %108, %v95
  %v110 = vpop.permute.xlu0 %109
  %113 = vset.pattern.permute.xlu0 0
  %114 = vperm.xlu0 %113, %v96
  %v115 = vpop.permute.xlu0 %114
  %118 = vset.pattern.permute.xlu0 0
  %119 = vperm.xlu0 %118, %v97
  %v120 = vpop.permute.xlu0 %119
  %123 = vset.pattern.permute.xlu0 0
  %124 = vperm.xlu0 %123, %v98
  %v125 = vpop.permute.xlu0 %124
  %128 = vset.pattern.permute.xlu0 0
  %129 = vperm.xlu0 %128, %v99
  %v130 = vpop.permute.xlu0 %129
  %133 = vset.pattern.permute.xlu0 0
  %134 = vperm.xlu0 %133, %v100
  %v135 = vpop.permute.xlu0 %134
  %138 = vset.pattern.permute.xlu0 0
  %139 = vperm.xlu0 %138, %v101
  %v140 = vpop.permute.xlu0 %139
  %v158 = vunpack.c.l.b16 %v42
  %v159 = vunpack.c.h.b16 %v42
  %v160 = vunpack.c.l.b16 %v43
  %v161 = vunpack.c.l.b16 %v44
  %v162 = vunpack.c.h.b16 %v44
  %v163 = vunpack.c.l.b16 %v45
  %v164 = vunpack.c.l.b16 %v46
  %v165 = vunpack.c.h.b16 %v46
  %v166 = vunpack.c.l.b16 %v47
  %v167 = vunpack.c.l.b16 %v48
  %v168 = vunpack.c.h.b16 %v48
  %v169 = vunpack.c.l.b16 %v49
  %v170 = vunpack.c.l.b16 %v50
  %v171 = vunpack.c.h.b16 %v50
  %v172 = vunpack.c.l.b16 %v51
  %v173 = vunpack.c.l.b16 %v52
  %v174 = vunpack.c.h.b16 %v52
  %v175 = vunpack.c.l.b16 %v53
  %v176 = vunpack.c.l.b16 %v54
  %v177 = vunpack.c.h.b16 %v54
  %v178 = vunpack.c.l.b16 %v55
  %v179 = vunpack.c.l.b16 %v56
  %v180 = vunpack.c.h.b16 %v56
  %v181 = vunpack.c.l.b16 %v57
  %v182 = vpack.c.b16 %v161, %v158
  %v183 = vpack.c.b16 %v162, %v159
  %v184 = vpack.c.b16 %v163, %v160
  %v185 = vpack.c.b16 %v167, %v164
  %v186 = vpack.c.b16 %v168, %v165
  %v187 = vpack.c.b16 %v169, %v166
  %v188 = vpack.c.b16 %v173, %v170
  %v189 = vpack.c.b16 %v174, %v171
  %v190 = vpack.c.b16 %v175, %v172
  %v191 = vpack.c.b16 %v179, %v176
  %v192 = vpack.c.b16 %v180, %v177
  %v193 = vpack.c.b16 %v181, %v178
  %v238 = vunpack.c.l.b16 %v58
  %v239 = vunpack.c.l.b16 %v59
  %v240 = vunpack.c.l.b16 %v60
  %v241 = vunpack.c.l.b16 %v61
  %v242 = vunpack.c.l.b16 %v62
  %v243 = vunpack.c.l.b16 %v63
  %v244 = vunpack.c.l.b16 %v64
  %v245 = vunpack.c.l.b16 %v65
  %v246 = vunpack.c.l.b16 %v66
  %v247 = vunpack.c.l.b16 %v67
  %v248 = vunpack.c.l.b16 %v68
  %v249 = vunpack.c.l.b16 %v69
  %v250 = vunpack.c.l.b16 %v70
  %v251 = vunpack.c.l.b16 %v71
  %v252 = vunpack.c.l.b16 %v72
  %v253 = vunpack.c.l.b16 %v73
  %v254 = vunpack.c.l.b16 %v74
  %v255 = vunpack.c.l.b16 %v75
  %v256 = vunpack.c.l.b16 %v76
  %v257 = vunpack.c.l.b16 %v77
  %v258 = vunpack.c.l.b16 %v78
  %v259 = vunpack.c.l.b16 %v79
  %v260 = vunpack.c.l.b16 %v80
  %v261 = vunpack.c.l.b16 %v81
  %v262 = vunpack.c.l.b16 %v82
  %v263 = vunpack.c.l.b16 %v83
  %v264 = vunpack.c.l.b16 %v84
  %v265 = vunpack.c.l.b16 %v85
  %v266 = vunpack.c.l.b16 %v86
  %v267 = vunpack.c.l.b16 %v87
  %v268 = vunpack.c.l.b16 %v88
  %v269 = vunpack.c.l.b16 %v89
  %v270 = vunpack.c.l.b16 %v90
  %v271 = vunpack.c.l.b16 %v91
  %v272 = vunpack.c.l.b16 %v92
  %v273 = vunpack.c.l.b16 %v93
  %v274 = vpack.c.b16 %v239, %v238
  %v275 = vpack.c.b16 %v241, %v240
  %v276 = vpack.c.b16 %v243, %v242
  %v277 = vpack.c.b16 %v245, %v244
  %v278 = vpack.c.b16 %v247, %v246
  %v279 = vpack.c.b16 %v249, %v248
  %v280 = vpack.c.b16 %v251, %v250
  %v281 = vpack.c.b16 %v253, %v252
  %v282 = vpack.c.b16 %v255, %v254
  %v283 = vpack.c.b16 %v257, %v256
  %v284 = vpack.c.b16 %v259, %v258
  %v285 = vpack.c.b16 %v261, %v260
  %v286 = vpack.c.b16 %v263, %v262
  %v287 = vpack.c.b16 %v265, %v264
  %v288 = vpack.c.b16 %v267, %v266
  %v289 = vpack.c.b16 %v269, %v268
  %v290 = vpack.c.b16 %v271, %v270
  %v291 = vpack.c.b16 %v273, %v272
  %vm310 = vcmask 261120
  %v312 = vsel %vm310, %v184, 0
  %v315 = vsel %vm310, %v187, 0
  %v318 = vsel %vm310, %v190, 0
  %v321 = vsel %vm310, %v193, 0
  %323 = vmatprep.subr.bf16.mxu0 0
  %324 = vmatpush1.bf16.msra.mxu0 %v274
  %325 = vmatprep.subr.bf16.mxu0 0
  %326 = vmatpush1.bf16.msra.mxu0 %v275
  %327 = vmatprep.subr.bf16.mxu0 0
  %328 = vmatpush1.bf16.msra.mxu0 %v276
  %329 = vmatprep.subr.bf16.mxu0 0
  %330 = vmatpush1.bf16.msra.mxu0 %v277
  %331 = vmatprep.subr.bf16.mxu0 0
  %332 = vmatpush1.bf16.msra.mxu0 %v278
  %333 = vmatprep.subr.bf16.mxu0 0
  %334 = vmatpush1.bf16.msra.mxu0 %v279
  %335 = vmatprep.subr.bf16.mxu0 0
  %336 = vmatpush1.bf16.msra.mxu0 %v280
  %337 = vmatprep.subr.bf16.mxu0 0
  %338 = vmatpush1.bf16.msra.mxu0 %v281
  %339 = vmatprep.subr.bf16.mxu0 0
  %340 = vmatpush1.bf16.msra.mxu0 %v282
  %341 = vmatprep.subr.bf16.mxu0 0
  %342 = vmatpush1.bf16.msra.mxu0 %v283
  %343 = vmatprep.subr.bf16.mxu0 0
  %344 = vmatpush1.bf16.msra.mxu0 %v284
  %345 = vmatprep.subr.bf16.mxu0 0
  %346 = vmatpush1.bf16.msra.mxu0 %v285
  %347 = vmatprep.subr.bf16.mxu0 0
  %348 = vmatpush1.bf16.msra.mxu0 %v286
  %349 = vmatprep.subr.bf16.mxu0 0
  %350 = vmatpush1.bf16.msra.mxu0 %v287
  %351 = vmatprep.subr.bf16.mxu0 0
  %352 = vmatpush1.bf16.msra.mxu0 %v288
  %353 = vmatprep.subr.bf16.mxu0 0
  %354 = vmatpush1.bf16.msra.mxu0 %v289
  %355 = vmatprep.mubr.bf16.mxu0 %v183
  %356 = vmatmul.mubr.bf16.gmra.mrb[0].mxu0 %v182
  %v357 = vpop.f32.mrb[0].mxu0
  %v358 = vadd.f32 %v105, %v357
  %v359 = vpop.f32.mrb[0].mxu0
  %v360 = vpop.f32.mrb[0].mxu0
  %v361 = vadd.f32 %v110, %v360
  %v362 = vpop.f32.mrb[0].mxu0
  %363 = vmatprep.mubr.bf16.mxu0 %v186
  %364 = vmatmul.mubr.bf16.gmra.mrb[0].mxu0 %v185
  %v365 = vpop.f32.mrb[0].mxu0
  %v366 = vadd.f32 %v115, %v365
  %v367 = vpop.f32.mrb[0].mxu0
  %v368 = vpop.f32.mrb[0].mxu0
  %v369 = vadd.f32 %v120, %v368
  %v370 = vpop.f32.mrb[0].mxu0
  %371 = vmatprep.mubr.bf16.mxu0 %v189
  %372 = vmatmul.mubr.bf16.gmra.mrb[0].mxu0 %v188
  %v373 = vpop.f32.mrb[0].mxu0
  %v374 = vadd.f32 %v125, %v373
  %v375 = vpop.f32.mrb[0].mxu0
  %v376 = vpop.f32.mrb[0].mxu0
  %v377 = vadd.f32 %v130, %v376
  %v378 = vpop.f32.mrb[0].mxu0
  %379 = vmatprep.mubr.bf16.mxu0 %v192
  %380 = vmatmul.mubr.bf16.gmra.mrb[0].mxu0 %v191
  %v381 = vpop.f32.mrb[0].mxu0
  %v382 = vadd.f32 %v135, %v381
  %v383 = vpop.f32.mrb[0].mxu0
  %v384 = vpop.f32.mrb[0].mxu0
  %v385 = vadd.f32 %v140, %v384
  %v386 = vpop.f32.mrb[0].mxu0
  %387 = vdwg.mxu0
  %388 = vmatprep.subr.bf16.mxu0 0
  %389 = vmatpush1.bf16.msra.mxu0 %v290
  %390 = vmatprep.subr.bf16.mxu0 0
  %391 = vmatpush1.bf16.msra.mxu0 %v291
  %392 = vmatprep.subr.bf16.mxu0 0
  %393 = vmatpush1.bf16.msra.mxu0 0
  %394 = vmatprep.subr.bf16.mxu0 0
  %395 = vmatpush1.bf16.msra.mxu0 0
  %396 = vmatprep.subr.bf16.mxu0 0
  %397 = vmatpush1.bf16.msra.mxu0 0
  %398 = vmatprep.subr.bf16.mxu0 0
  %399 = vmatpush1.bf16.msra.mxu0 0
  %400 = vmatprep.subr.bf16.mxu0 0
  %401 = vmatpush1.bf16.msra.mxu0 0
  %402 = vmatprep.subr.bf16.mxu0 0
  %403 = vmatpush1.bf16.msra.mxu0 0
  %404 = vmatprep.subr.bf16.mxu0 0
  %405 = vmatpush1.bf16.msra.mxu0 0
  %406 = vmatprep.subr.bf16.mxu0 0
  %407 = vmatpush1.bf16.msra.mxu0 0
  %408 = vmatprep.subr.bf16.mxu0 0
  %409 = vmatpush1.bf16.msra.mxu0 0
  %410 = vmatprep.subr.bf16.mxu0 0
  %411 = vmatpush1.bf16.msra.mxu0 0
  %412 = vmatprep.subr.bf16.mxu0 0
  %413 = vmatpush1.bf16.msra.mxu0 0
  %414 = vmatprep.subr.bf16.mxu0 0
  %415 = vmatpush1.bf16.msra.mxu0 0
  %416 = vmatprep.subr.bf16.mxu0 0
  %417 = vmatpush1.bf16.msra.mxu0 0
  %418 = vmatprep.subr.bf16.mxu0 0
  %419 = vmatpush1.bf16.msra.mxu0 0
  %420 = vmatprep.mubr.bf16.mxu0 0
  %421 = vmatmul.mubr.bf16.gmra.mrb[0].mxu0 %v312
  %v422 = vpop.f32.mrb[0].mxu0
  %v423 = vadd.f32 %v358, %v422
  %v424 = vpop.f32.mrb[0].mxu0
  %v425 = vpop.f32.mrb[0].mxu0
  %v426 = vadd.f32 %v361, %v425
  %v427 = vpop.f32.mrb[0].mxu0
  %428 = vmatprep.mubr.bf16.mxu0 0
  %429 = vmatmul.mubr.bf16.gmra.mrb[0].mxu0 %v315
  %v430 = vpop.f32.mrb[0].mxu0
  %v431 = vadd.f32 %v366, %v430
  %v432 = vpop.f32.mrb[0].mxu0
  %v433 = vpop.f32.mrb[0].mxu0
  %v434 = vadd.f32 %v369, %v433
  %v435 = vpop.f32.mrb[0].mxu0
  %436 = vmatprep.mubr.bf16.mxu0 0
  %437 = vmatmul.mubr.bf16.gmra.mrb[0].mxu0 %v318
  %v438 = vpop.f32.mrb[0].mxu0
  %v439 = vadd.f32 %v374, %v438
  %v440 = vpop.f32.mrb[0].mxu0
  %v441 = vpop.f32.mrb[0].mxu0
  %v442 = vadd.f32 %v377, %v441
  %v443 = vpop.f32.mrb[0].mxu0
  %444 = vmatprep.mubr.bf16.mxu0 0
  %445 = vmatmul.mubr.bf16.gmra.mrb[0].mxu0 %v321
  %v446 = vpop.f32.mrb[0].mxu0
  %v447 = vadd.f32 %v382, %v446
  %v448 = vpop.f32.mrb[0].mxu0
  %v449 = vpop.f32.mrb[0].mxu0
  %v450 = vadd.f32 %v385, %v449
  %v451 = vpop.f32.mrb[0].mxu0
  %452 = vdwg.mxu0
  %v453 = vmax.f32 %v423, 0.0
  %v454 = vmax.f32 %v426, 0.0
  %v455 = vmax.f32 %v431, 0.0
  %v456 = vmax.f32 %v434, 0.0
  %v457 = vmax.f32 %v439, 0.0
  %v458 = vmax.f32 %v442, 0.0
  %v459 = vmax.f32 %v447, 0.0
  %v460 = vmax.f32 %v450, 0.0
  %s461 = smul.u32 0, 128
  %v462 = vlaneseq
  %v463 = vand.u32 %v462, 127
  %v464 = vstv %s461
  %v465 = vadd.s32 %v464, %v463
  %vm466 = vcmp.lt.s32.totalorder %v465, 18
  %v467 = vsel %vm466, %v453, 0.0
  %v468 = vsel %vm466, %v454, 0.0
  %v469 = vsel %vm466, %v455, 0.0
  %v470 = vsel %vm466, %v456, 0.0
  %v471 = vsel %vm466, %v457, 0.0
  %v472 = vsel %vm466, %v458, 0.0
  %v473 = vsel %vm466, %v459, 0.0
  %v474 = vsel %vm466, %v460, 0.0
  %s475 = sshra.s32 %s461, 7
  %s476 = sand.u32 %s461, 127
  %s477 = scalar_lea.vmem %s5, %s475
  %478 = vst [vmem:[%s477] sm:$0xff] %v467
  %479 = vst [vmem:[%s477 + $0x8] sm:$0xff] %v468
  %480 = vst [vmem:[%s477 + $0x10] sm:$0xff] %v469
  %481 = vst [vmem:[%s477 + $0x18] sm:$0xff] %v470
  %482 = vst [vmem:[%s477 + $0x20] sm:$0xff] %v471
  %483 = vst [vmem:[%s477 + $0x28] sm:$0xff] %v472
  %484 = vst [vmem:[%s477 + $0x30] sm:$0xff] %v473
  %485 = vst [vmem:[%s477 + $0x38] sm:$0xff] %v474
  %v486 = vld [vmem:[#allocation2] sm:$0xff]
  %v487 = vld [vmem:[#allocation2 + $0x8] sm:$0xff]
  %v488 = vld [vmem:[#allocation2 + $0x10] sm:$0xff]
  %v489 = vld [vmem:[#allocation2 + $0x18] sm:$0xff]
  %v490 = vld [vmem:[#allocation2 + $0x20] sm:$0xff]
  %v491 = vld [vmem:[#allocation2 + $0x28] sm:$0xff]
  %v492 = vld [vmem:[#allocation2 + $0x30] sm:$0xff]
  %v493 = vld [vmem:[#allocation2 + $0x38] sm:$0xff]
  %494 = vadd.xlane.f32.xlu0 %v467
  %v495 = vpop.xlane.xlu0 %494
  %496 = vadd.xlane.f32.xlu0 %v468
  %v497 = vpop.xlane.xlu0 %496
  %498 = vadd.xlane.f32.xlu0 %v469
  %v499 = vpop.xlane.xlu0 %498
  %500 = vadd.xlane.f32.xlu0 %v470
  %v501 = vpop.xlane.xlu0 %500
  %502 = vadd.xlane.f32.xlu0 %v471
  %v503 = vpop.xlane.xlu0 %502
  %504 = vadd.xlane.f32.xlu0 %v472
  %v505 = vpop.xlane.xlu0 %504
  %506 = vadd.xlane.f32.xlu0 %v473
  %v507 = vpop.xlane.xlu0 %506
  %508 = vadd.xlane.f32.xlu0 %v474
  %v509 = vpop.xlane.xlu0 %508
  %v510 = vadd.f32 %v486, %v495
  %v511 = vadd.f32 %v487, %v497
  %v512 = vadd.f32 %v488, %v499
  %v513 = vadd.f32 %v489, %v501
  %v514 = vadd.f32 %v490, %v503
  %v515 = vadd.f32 %v491, %v505
  %v516 = vadd.f32 %v492, %v507
  %v517 = vadd.f32 %v493, %v509
  %vm518 = vcmask 7168
  %519 = vst.msk [vmem:[#allocation2] sm:$0xff] %vm518, %v510
  %520 = vst.msk [vmem:[#allocation2 + $0x8] sm:$0xff] %vm518, %v511
  %521 = vst.msk [vmem:[#allocation2 + $0x10] sm:$0xff] %vm518, %v512
  %522 = vst.msk [vmem:[#allocation2 + $0x18] sm:$0xff] %vm518, %v513
  %523 = vst.msk [vmem:[#allocation2 + $0x20] sm:$0xff] %vm518, %v514
  %524 = vst.msk [vmem:[#allocation2 + $0x28] sm:$0xff] %vm518, %v515
  %525 = vst.msk [vmem:[#allocation2 + $0x30] sm:$0xff] %vm518, %v516
  %526 = vst.msk [vmem:[#allocation2 + $0x38] sm:$0xff] %vm518, %v517
  %v527 = vld [vmem:[#allocation3] sm:$0xff]
  %v528 = vld [vmem:[#allocation3 + $0x8] sm:$0xff]
  %v529 = vld [vmem:[#allocation3 + $0x10] sm:$0xff]
  %v530 = vld [vmem:[#allocation3 + $0x18] sm:$0xff]
  %v531 = vld [vmem:[#allocation3 + $0x20] sm:$0xff]
  %v532 = vld [vmem:[#allocation3 + $0x28] sm:$0xff]
  %v533 = vld [vmem:[#allocation3 + $0x30] sm:$0xff]
  %v534 = vld [vmem:[#allocation3 + $0x38] sm:$0xff]
  %v535 = vmul.f32 %v467, %v467
  %v536 = vmul.f32 %v468, %v468
  %v537 = vmul.f32 %v469, %v469
  %v538 = vmul.f32 %v470, %v470
  %v539 = vmul.f32 %v471, %v471
  %v540 = vmul.f32 %v472, %v472
  %v541 = vmul.f32 %v473, %v473
  %v542 = vmul.f32 %v474, %v474
  %543 = vadd.xlane.f32.xlu0 %v535
  %v544 = vpop.xlane.xlu0 %543
  %545 = vadd.xlane.f32.xlu0 %v536
  %v546 = vpop.xlane.xlu0 %545
  %547 = vadd.xlane.f32.xlu0 %v537
  %v548 = vpop.xlane.xlu0 %547
  %549 = vadd.xlane.f32.xlu0 %v538
  %v550 = vpop.xlane.xlu0 %549
  %551 = vadd.xlane.f32.xlu0 %v539
  %v552 = vpop.xlane.xlu0 %551
  %553 = vadd.xlane.f32.xlu0 %v540
  %v554 = vpop.xlane.xlu0 %553
  %555 = vadd.xlane.f32.xlu0 %v541
  %v556 = vpop.xlane.xlu0 %555
  %557 = vadd.xlane.f32.xlu0 %v542
  %v558 = vpop.xlane.xlu0 %557
  %v559 = vadd.f32 %v527, %v544
  %v560 = vadd.f32 %v528, %v546
  %v561 = vadd.f32 %v529, %v548
  %v562 = vadd.f32 %v530, %v550
  %v563 = vadd.f32 %v531, %v552
  %v564 = vadd.f32 %v532, %v554
  %v565 = vadd.f32 %v533, %v556
  %v566 = vadd.f32 %v534, %v558
  %567 = vst.msk [vmem:[#allocation3] sm:$0xff] %vm518, %v559
  %568 = vst.msk [vmem:[#allocation3 + $0x8] sm:$0xff] %vm518, %v560
  %569 = vst.msk [vmem:[#allocation3 + $0x10] sm:$0xff] %vm518, %v561
  %570 = vst.msk [vmem:[#allocation3 + $0x18] sm:$0xff] %vm518, %v562
  %571 = vst.msk [vmem:[#allocation3 + $0x20] sm:$0xff] %vm518, %v563
  %572 = vst.msk [vmem:[#allocation3 + $0x28] sm:$0xff] %vm518, %v564
  %573 = vst.msk [vmem:[#allocation3 + $0x30] sm:$0xff] %vm518, %v565
  %574 = vst.msk [vmem:[#allocation3 + $0x38] sm:$0xff] %vm518, %v566
  // Predicated region
  $region26: #{my_cnn_forward.6} parent=0 // pred_check
    %p575 = pneg %p21
  $region27: #{my_cnn_forward.6} parent=0 // pred_check_branch
    %577 = sbr.rel (%p575) target = $region29
  $region28: #{my_cnn_forward.6} parent=0 // pred_region
    %v578 = vld [vmem:[#allocation2] sm:$0xff]
    %v579 = vld [vmem:[#allocation2 + $0x8] sm:$0xff]
    %v580 = vld [vmem:[#allocation2 + $0x10] sm:$0xff]
    %v581 = vld [vmem:[#allocation2 + $0x18] sm:$0xff]
    %v582 = vld [vmem:[#allocation2 + $0x20] sm:$0xff]
    %v583 = vld [vmem:[#allocation2 + $0x28] sm:$0xff]
    %v584 = vld [vmem:[#allocation2 + $0x30] sm:$0xff]
    %v585 = vld [vmem:[#allocation2 + $0x38] sm:$0xff]
    %v586 = vrcp.pop 18.0
    %v587 = vmul.f32 %v578, %v586
    %v588 = vmul.f32 %v579, %v586
    %v589 = vmul.f32 %v580, %v586
    %v590 = vmul.f32 %v581, %v586
    %v591 = vmul.f32 %v582, %v586
    %v592 = vmul.f32 %v583, %v586
    %v593 = vmul.f32 %v584, %v586
    %v594 = vmul.f32 %v585, %v586
    %v595 = vld [vmem:[#allocation3] sm:$0xff]
    %v596 = vld [vmem:[#allocation3 + $0x8] sm:$0xff]
    %v597 = vld [vmem:[#allocation3 + $0x10] sm:$0xff]
    %v598 = vld [vmem:[#allocation3 + $0x18] sm:$0xff]
    %v599 = vld [vmem:[#allocation3 + $0x20] sm:$0xff]
    %v600 = vld [vmem:[#allocation3 + $0x28] sm:$0xff]
    %v601 = vld [vmem:[#allocation3 + $0x30] sm:$0xff]
    %v602 = vld [vmem:[#allocation3 + $0x38] sm:$0xff]
    %v603 = vmul.f32 %v595, %v586
    %v604 = vmul.f32 %v596, %v586
    %v605 = vmul.f32 %v597, %v586
    %v606 = vmul.f32 %v598, %v586
    %v607 = vmul.f32 %v599, %v586
    %v608 = vmul.f32 %v600, %v586
    %v609 = vmul.f32 %v601, %v586
    %v610 = vmul.f32 %v602, %v586
    %v611 = vmul.f32 %v587, %v587
    %v612 = vmul.f32 %v588, %v588
    %v613 = vmul.f32 %v589, %v589
    %v614 = vmul.f32 %v590, %v590
    %v615 = vmul.f32 %v591, %v591
    %v616 = vmul.f32 %v592, %v592
    %v617 = vmul.f32 %v593, %v593
    %v618 = vmul.f32 %v594, %v594
    %v619 = vsub.f32 %v603, %v611
    %v620 = vsub.f32 %v604, %v612
    %v621 = vsub.f32 %v605, %v613
    %v622 = vsub.f32 %v606, %v614
    %v623 = vsub.f32 %v607, %v615
    %v624 = vsub.f32 %v608, %v616
    %v625 = vsub.f32 %v609, %v617
    %v626 = vsub.f32 %v610, %v618
    %v627 = vadd.f32 %v619, 1e-05
    %v628 = vadd.f32 %v620, 1e-05
    %v629 = vadd.f32 %v621, 1e-05
    %v630 = vadd.f32 %v622, 1e-05
    %v631 = vadd.f32 %v623, 1e-05
    %v632 = vadd.f32 %v624, 1e-05
    %v633 = vadd.f32 %v625, 1e-05
    %v634 = vadd.f32 %v626, 1e-05
    %v635 = vrsqrt.pop %v627
    %v636 = vrsqrt.pop %v628
    %v637 = vrsqrt.pop %v629
    %v638 = vrsqrt.pop %v630
    %v639 = vrsqrt.pop %v631
    %v640 = vrsqrt.pop %v632
    %v641 = vrsqrt.pop %v633
    %v642 = vrsqrt.pop %v634
    %v643 = vld [vmem:[%s3] sm:$0xff]
    %v644 = vld [vmem:[%s3 + $0x8] sm:$0xff]
    %v645 = vld [vmem:[%s3 + $0x10] sm:$0xff]
    %v646 = vld [vmem:[%s3 + $0x18] sm:$0xff]
    %v647 = vld [vmem:[%s3 + $0x20] sm:$0xff]
    %v648 = vld [vmem:[%s3 + $0x28] sm:$0xff]
    %v649 = vld [vmem:[%s3 + $0x30] sm:$0xff]
    %v650 = vld [vmem:[%s3 + $0x38] sm:$0xff]
    %v651 = vmul.f32 %v635, %v643
    %v652 = vmul.f32 %v636, %v644
    %v653 = vmul.f32 %v637, %v645
    %v654 = vmul.f32 %v638, %v646
    %v655 = vmul.f32 %v639, %v647
    %v656 = vmul.f32 %v640, %v648
    %v657 = vmul.f32 %v641, %v649
    %v658 = vmul.f32 %v642, %v650
    %v659 = vld [vmem:[%s4] sm:$0xff]
    %v660 = vld [vmem:[%s4 + $0x8] sm:$0xff]
    %v661 = vld [vmem:[%s4 + $0x10] sm:$0xff]
    %v662 = vld [vmem:[%s4 + $0x18] sm:$0xff]
    %v663 = vld [vmem:[%s4 + $0x20] sm:$0xff]
    %v664 = vld [vmem:[%s4 + $0x28] sm:$0xff]
    %v665 = vld [vmem:[%s4 + $0x30] sm:$0xff]
    %v666 = vld [vmem:[%s4 + $0x38] sm:$0xff]
    %v667 = vmul.f32 %v587, %v651
    %v668 = vmul.f32 %v588, %v652
    %v669 = vmul.f32 %v589, %v653
    %v670 = vmul.f32 %v590, %v654
    %v671 = vmul.f32 %v591, %v655
    %v672 = vmul.f32 %v592, %v656
    %v673 = vmul.f32 %v593, %v657
    %v674 = vmul.f32 %v594, %v658
    %v675 = vsub.f32 %v659, %v667
    %v676 = vsub.f32 %v660, %v668
    %v677 = vsub.f32 %v661, %v669
    %v678 = vsub.f32 %v662, %v670
    %v679 = vsub.f32 %v663, %v671
    %v680 = vsub.f32 %v664, %v672
    %v681 = vsub.f32 %v665, %v673
    %v682 = vsub.f32 %v666, %v674
    %v683 = vld [vmem:[%s5] sm:$0xff]
    %v684 = vld [vmem:[%s5 + $0x8] sm:$0xff]
    %v685 = vld [vmem:[%s5 + $0x10] sm:$0xff]
    %v686 = vld [vmem:[%s5 + $0x18] sm:$0xff]
    %v687 = vld [vmem:[%s5 + $0x20] sm:$0xff]
    %v688 = vld [vmem:[%s5 + $0x28] sm:$0xff]
    %v689 = vld [vmem:[%s5 + $0x30] sm:$0xff]
    %v690 = vld [vmem:[%s5 + $0x38] sm:$0xff]
    %692 = vset.pattern.permute.xlu0 0
    %693 = vperm.xlu0 %692, %v651
    %v694 = vpop.permute.xlu0 %693
    %697 = vset.pattern.permute.xlu0 0
    %698 = vperm.xlu0 %697, %v652
    %v699 = vpop.permute.xlu0 %698
    %702 = vset.pattern.permute.xlu0 0
    %703 = vperm.xlu0 %702, %v653
    %v704 = vpop.permute.xlu0 %703
    %707 = vset.pattern.permute.xlu0 0
    %708 = vperm.xlu0 %707, %v654
    %v709 = vpop.permute.xlu0 %708
    %712 = vset.pattern.permute.xlu0 0
    %713 = vperm.xlu0 %712, %v655
    %v714 = vpop.permute.xlu0 %713
    %717 = vset.pattern.permute.xlu0 0
    %718 = vperm.xlu0 %717, %v656
    %v719 = vpop.permute.xlu0 %718
    %722 = vset.pattern.permute.xlu0 0
    %723 = vperm.xlu0 %722, %v657
    %v724 = vpop.permute.xlu0 %723
    %727 = vset.pattern.permute.xlu0 0
    %728 = vperm.xlu0 %727, %v658
    %v729 = vpop.permute.xlu0 %728
    %v731 = vmul.f32 %v683, %v694
    %v732 = vmul.f32 %v684, %v699
    %v733 = vmul.f32 %v685, %v704
    %v734 = vmul.f32 %v686, %v709
    %v735 = vmul.f32 %v687, %v714
    %v736 = vmul.f32 %v688, %v719
    %v737 = vmul.f32 %v689, %v724
    %v738 = vmul.f32 %v690, %v729
    %740 = vset.pattern.permute.xlu0 0
    %741 = vperm.xlu0 %740, %v675
    %v742 = vpop.permute.xlu0 %741
    %745 = vset.pattern.permute.xlu0 0
    %746 = vperm.xlu0 %745, %v676
    %v747 = vpop.permute.xlu0 %746
    %750 = vset.pattern.permute.xlu0 0
    %751 = vperm.xlu0 %750, %v677
    %v752 = vpop.permute.xlu0 %751
    %755 = vset.pattern.permute.xlu0 0
    %756 = vperm.xlu0 %755, %v678
    %v757 = vpop.permute.xlu0 %756
    %760 = vset.pattern.permute.xlu0 0
    %761 = vperm.xlu0 %760, %v679
    %v762 = vpop.permute.xlu0 %761
    %765 = vset.pattern.permute.xlu0 0
    %766 = vperm.xlu0 %765, %v680
    %v767 = vpop.permute.xlu0 %766
    %770 = vset.pattern.permute.xlu0 0
    %771 = vperm.xlu0 %770, %v681
    %v772 = vpop.permute.xlu0 %771
    %775 = vset.pattern.permute.xlu0 0
    %776 = vperm.xlu0 %775, %v682
    %v777 = vpop.permute.xlu0 %776
    %v779 = vadd.f32 %v731, %v742
    %v780 = vadd.f32 %v732, %v747
    %v781 = vadd.f32 %v733, %v752
    %v782 = vadd.f32 %v734, %v757
    %v783 = vadd.f32 %v735, %v762
    %v784 = vadd.f32 %v736, %v767
    %v785 = vadd.f32 %v737, %v772
    %v786 = vadd.f32 %v738, %v777
    %787 = vst [vmem:[%s5] sm:$0xff] %v779
    %788 = vst [vmem:[%s5 + $0x8] sm:$0xff] %v780
    %789 = vst [vmem:[%s5 + $0x10] sm:$0xff] %v781
    %790 = vst [vmem:[%s5 + $0x18] sm:$0xff] %v782
    %791 = vst [vmem:[%s5 + $0x20] sm:$0xff] %v783
    %792 = vst [vmem:[%s5 + $0x28] sm:$0xff] %v784
    %793 = vst [vmem:[%s5 + $0x30] sm:$0xff] %v785
    %794 = vst [vmem:[%s5 + $0x38] sm:$0xff] %v786
  $region29: #{my_cnn_forward.6} parent=0 // pred_fallthru
    _
  // Predicated region
  $region30: #{my_cnn_forward.6} parent=0 // pred_check
    _
  $region31: #{my_cnn_forward.6} parent=0 // pred_check_branch
    %796 = sbr.rel (0) target = $region33
  $region32: #{my_cnn_forward.6} parent=0 // pred_region
    _
  $region33: #{my_cnn_forward.6} parent=0 // pred_fallthru
    _
  // Predicated region
  $region34: #{my_cnn_forward.6} parent=0 // pred_check
    _
  $region35: #{my_cnn_forward.6} parent=0 // pred_check_branch
    %798 = sbr.rel (0) target = $region37
  $region36: #{my_cnn_forward.6} parent=0 // pred_region
    _
  $region37: #{my_cnn_forward.6} parent=0 // pred_fallthru
    _

// kernel: my_cnn_forward.7
$region0: #{my_cnn_forward.7}
  #allocation0 [shape = 'u32[]', space=smem, size = 0x4, offset = 0x4, fixed_abs, tag = 'smem constant byte address 0x4 - core index']
  #allocation1 [shape = 'u32[144,128]{1,0:T(1,128)}', space=vmem, size = 0x12000, scoped, tag = 'internal scratch']
  #allocation2 [shape = 'f32[1]{0:T(128)S(6)}', space=smem, size = 0x200, scoped, tag = 'scoped memory for my_cnn_forward.7']
  #allocation3 [shape = 'f32[1]{0:T(128)S(6)}', space=smem, size = 0x200, scoped, tag = 'scoped memory for my_cnn_forward.7']
  %s0 = inlined_call_operand.vmem [shape: bf16[576,128], index: 0, kind: input, shape index: {}]
  %s1 = inlined_call_operand.vmem [shape: bf16[128,576], index: 1, kind: input, shape index: {}]
  %s2 = inlined_call_operand.vmem [shape: f32[128,1], index: 2, kind: input, shape index: {}]
  %s3 = inlined_call_operand.<no memory space> [shape: f32[1], index: 3, kind: input, shape index: {}]
  %s4 = inlined_call_operand.<no memory space> [shape: f32[1], index: 4, kind: input, shape index: {}]
  %s5 = inlined_call_operand.vmem [shape: f32[128,128], index: 5, kind: output, shape index: {}]
  %s6 = sld [smem:[#allocation0]]
  $region30: #{my_cnn_forward.7} parent=0
    _
  %s8 = ssub.s32 1, %s6
  %s9 = scalar_select 0, %s8, %s6
  %10 = sst [smem:[#allocation2]] %s3
  %11 = sst [smem:[#allocation3]] %s4
  // Predicated region
  $region2: #{my_cnn_forward.7} parent=0 // pred_check
    _
  $region3: #{my_cnn_forward.7} parent=0 // pred_check_branch
    %13 = sbr.rel (0) target = $region5
  $region4: #{my_cnn_forward.7} parent=0 // pred_region
    _
  $region5: #{my_cnn_forward.7} parent=0 // pred_fallthru
    _
  // Predicated region
  $region6: #{my_cnn_forward.7} parent=0 // pred_check
    _
  $region7: #{my_cnn_forward.7} parent=0 // pred_check_branch
    %15 = sbr.rel (0) target = $region9
  $region8: #{my_cnn_forward.7} parent=0 // pred_region
    _
  $region9: #{my_cnn_forward.7} parent=0 // pred_fallthru
    _
  // Predicated region
  $region10: #{my_cnn_forward.7} parent=0 // pred_check
    _
  $region11: #{my_cnn_forward.7} parent=0 // pred_check_branch
    %17 = sbr.rel (0) target = $region13
  $region12: #{my_cnn_forward.7} parent=0 // pred_region
    _
  $region13: #{my_cnn_forward.7} parent=0 // pred_fallthru
    _
  // Predicated region
  $region14: #{my_cnn_forward.7} parent=0 // pred_check
    _
  $region15: #{my_cnn_forward.7} parent=0 // pred_check_branch
    %19 = sbr.rel (0) target = $region17
  $region16: #{my_cnn_forward.7} parent=0 // pred_region
    _
  $region17: #{my_cnn_forward.7} parent=0 // pred_fallthru
    _
  // Predicated region
  $region18: #{my_cnn_forward.7} parent=0 // pred_check
    _
  $region19: #{my_cnn_forward.7} parent=0 // pred_check_branch
    %21 = sbr.rel (0) target = $region21
  $region20: #{my_cnn_forward.7} parent=0 // pred_region
    _
  $region21: #{my_cnn_forward.7} parent=0 // pred_fallthru
    _
  %v23 = vld [vmem:[%s1] sm:$0xff]
  %v24 = vld [vmem:[%s1 + $0x8] sm:$0xff]
  %v25 = vld [vmem:[%s1 + $0x10] sm:$0xf]
  %v26 = vld [vmem:[%s1 + $0x14] sm:$0xff]
  %v27 = vld [vmem:[%s1 + $0x1c] sm:$0xff]
  %v28 = vld [vmem:[%s1 + $0x24] sm:$0xf]
  %v29 = vld [vmem:[%s1 + $0x28] sm:$0xff]
  %v30 = vld [vmem:[%s1 + $0x30] sm:$0xff]
  %v31 = vld [vmem:[%s1 + $0x38] sm:$0xf]
  %v32 = vld [vmem:[%s1 + $0x3c] sm:$0xff]
  %v33 = vld [vmem:[%s1 + $0x44] sm:$0xff]
  %v34 = vld [vmem:[%s1 + $0x4c] sm:$0xf]
  %v35 = vld [vmem:[%s1 + $0x50] sm:$0xff]
  %v36 = vld [vmem:[%s1 + $0x58] sm:$0xff]
  %v37 = vld [vmem:[%s1 + $0x60] sm:$0xf]
  %v38 = vld [vmem:[%s1 + $0x64] sm:$0xff]
  %v39 = vld [vmem:[%s1 + $0x6c] sm:$0xff]
  %v40 = vld [vmem:[%s1 + $0x74] sm:$0xf]
  %v41 = vld [vmem:[%s1 + $0x78] sm:$0xff]
  %v42 = vld [vmem:[%s1 + $0x80] sm:$0xff]
  %v43 = vld [vmem:[%s1 + $0x88] sm:$0xf]
  %v44 = vld [vmem:[%s1 + $0x8c] sm:$0xff]
  %v45 = vld [vmem:[%s1 + $0x94] sm:$0xff]
  %v46 = vld [vmem:[%s1 + $0x9c] sm:$0xf]
  %v47 = vld [vmem:[%s1 + $0xa0] sm:$0xff]
  %v48 = vld [vmem:[%s1 + $0xa8] sm:$0xff]
  %v49 = vld [vmem:[%s1 + $0xb0] sm:$0xf]
  %v50 = vld [vmem:[%s1 + $0xb4] sm:$0xff]
  %v51 = vld [vmem:[%s1 + $0xbc] sm:$0xff]
  %v52 = vld [vmem:[%s1 + $0xc4] sm:$0xf]
  %v53 = vld [vmem:[%s1 + $0xc8] sm:$0xff]
  %v54 = vld [vmem:[%s1 + $0xd0] sm:$0xff]
  %v55 = vld [vmem:[%s1 + $0xd8] sm:$0xf]
  %v56 = vld [vmem:[%s1 + $0xdc] sm:$0xff]
  %v57 = vld [vmem:[%s1 + $0xe4] sm:$0xff]
  %v58 = vld [vmem:[%s1 + $0xec] sm:$0xf]
  %v59 = vld [vmem:[%s1 + $0xf0] sm:$0xff]
  %v60 = vld [vmem:[%s1 + $0xf8] sm:$0xff]
  %v61 = vld [vmem:[%s1 + $0x100] sm:$0xf]
  %v62 = vld [vmem:[%s1 + $0x104] sm:$0xff]
  %v63 = vld [vmem:[%s1 + $0x10c] sm:$0xff]
  %v64 = vld [vmem:[%s1 + $0x114] sm:$0xf]
  %v65 = vld [vmem:[%s1 + $0x118] sm:$0xff]
  %v66 = vld [vmem:[%s1 + $0x120] sm:$0xff]
  %v67 = vld [vmem:[%s1 + $0x128] sm:$0xf]
  %v68 = vld [vmem:[%s1 + $0x12c] sm:$0xff]
  %v69 = vld [vmem:[%s1 + $0x134] sm:$0xff]
  %v70 = vld [vmem:[%s1 + $0x13c] sm:$0xf]
  %v71 = vld [vmem:[%s0] sm:$0xf]
  %v72 = vld [vmem:[%s0 + $0x4] sm:$0xf]
  %v73 = vld [vmem:[%s0 + $0x8] sm:$0xf]
  %v74 = vld [vmem:[%s0 + $0xc] sm:$0xf]
  %v75 = vld [vmem:[%s0 + $0x10] sm:$0xf]
  %v76 = vld [vmem:[%s0 + $0x14] sm:$0xf]
  %v77 = vld [vmem:[%s0 + $0x18] sm:$0xf]
  %v78 = vld [vmem:[%s0 + $0x1c] sm:$0xf]
  %v79 = vld [vmem:[%s0 + $0x20] sm:$0xf]
  %v80 = vld [vmem:[%s0 + $0x24] sm:$0xf]
  %v81 = vld [vmem:[%s0 + $0x28] sm:$0xf]
  %v82 = vld [vmem:[%s0 + $0x2c] sm:$0xf]
  %v83 = vld [vmem:[%s0 + $0x30] sm:$0xf]
  %v84 = vld [vmem:[%s0 + $0x34] sm:$0xf]
  %v85 = vld [vmem:[%s0 + $0x38] sm:$0xf]
  %v86 = vld [vmem:[%s0 + $0x3c] sm:$0xf]
  %v87 = vld [vmem:[%s0 + $0x40] sm:$0xf]
  %v88 = vld [vmem:[%s0 + $0x44] sm:$0xf]
  %v89 = vld [vmem:[%s0 + $0x48] sm:$0xf]
  %v90 = vld [vmem:[%s0 + $0x4c] sm:$0xf]
  %v91 = vld [vmem:[%s0 + $0x50] sm:$0xf]
  %v92 = vld [vmem:[%s0 + $0x54] sm:$0xf]
  %v93 = vld [vmem:[%s0 + $0x58] sm:$0xf]
  %v94 = vld [vmem:[%s0 + $0x5c] sm:$0xf]
  %v95 = vld [vmem:[%s0 + $0x60] sm:$0xf]
  %v96 = vld [vmem:[%s0 + $0x64] sm:$0xf]
  %v97 = vld [vmem:[%s0 + $0x68] sm:$0xf]
  %v98 = vld [vmem:[%s0 + $0x6c] sm:$0xf]
  %v99 = vld [vmem:[%s0 + $0x70] sm:$0xf]
  %v100 = vld [vmem:[%s0 + $0x74] sm:$0xf]
  %v101 = vld [vmem:[%s0 + $0x78] sm:$0xf]
  %v102 = vld [vmem:[%s0 + $0x7c] sm:$0xf]
  %v103 = vld [vmem:[%s0 + $0x80] sm:$0xf]
  %v104 = vld [vmem:[%s0 + $0x84] sm:$0xf]
  %v105 = vld [vmem:[%s0 + $0x88] sm:$0xf]
  %v106 = vld [vmem:[%s0 + $0x8c] sm:$0xf]
  %v107 = vld [vmem:[%s0 + $0x90] sm:$0xf]
  %v108 = vld [vmem:[%s0 + $0x94] sm:$0xf]
  %v109 = vld [vmem:[%s0 + $0x98] sm:$0xf]
  %v110 = vld [vmem:[%s0 + $0x9c] sm:$0xf]
  %v111 = vld [vmem:[%s0 + $0xa0] sm:$0xf]
  %v112 = vld [vmem:[%s0 + $0xa4] sm:$0xf]
  %v113 = vld [vmem:[%s0 + $0xa8] sm:$0xf]
  %v114 = vld [vmem:[%s0 + $0xac] sm:$0xf]
  %v115 = vld [vmem:[%s0 + $0xb0] sm:$0xf]
  %v116 = vld [vmem:[%s0 + $0xb4] sm:$0xf]
  %v117 = vld [vmem:[%s0 + $0xb8] sm:$0xf]
  %v118 = vld [vmem:[%s0 + $0xbc] sm:$0xf]
  %v119 = vld [vmem:[%s0 + $0xc0] sm:$0xf]
  %v120 = vld [vmem:[%s0 + $0xc4] sm:$0xf]
  %v121 = vld [vmem:[%s0 + $0xc8] sm:$0xf]
  %v122 = vld [vmem:[%s0 + $0xcc] sm:$0xf]
  %v123 = vld [vmem:[%s0 + $0xd0] sm:$0xf]
  %v124 = vld [vmem:[%s0 + $0xd4] sm:$0xf]
  %v125 = vld [vmem:[%s0 + $0xd8] sm:$0xf]
  %v126 = vld [vmem:[%s0 + $0xdc] sm:$0xf]
  %v127 = vld [vmem:[%s0 + $0xe0] sm:$0xf]
  %v128 = vld [vmem:[%s0 + $0xe4] sm:$0xf]
  %v129 = vld [vmem:[%s0 + $0xe8] sm:$0xf]
  %v130 = vld [vmem:[%s0 + $0xec] sm:$0xf]
  %v131 = vld [vmem:[%s0 + $0xf0] sm:$0xf]
  %v132 = vld [vmem:[%s0 + $0xf4] sm:$0xf]
  %v133 = vld [vmem:[%s0 + $0xf8] sm:$0xf]
  %v134 = vld [vmem:[%s0 + $0xfc] sm:$0xf]
  %v135 = vld [vmem:[%s0 + $0x100] sm:$0xf]
  %v136 = vld [vmem:[%s0 + $0x104] sm:$0xf]
  %v137 = vld [vmem:[%s0 + $0x108] sm:$0xf]
  %v138 = vld [vmem:[%s0 + $0x10c] sm:$0xf]
  %v139 = vld [vmem:[%s0 + $0x110] sm:$0xf]
  %v140 = vld [vmem:[%s0 + $0x114] sm:$0xf]
  %v141 = vld [vmem:[%s0 + $0x118] sm:$0xf]
  %v142 = vld [vmem:[%s0 + $0x11c] sm:$0xf]
  %v143 = vld [vmem:[%s2] sm:$0xff]
  %v144 = vld [vmem:[%s2 + $0x8] sm:$0xff]
  %v145 = vld [vmem:[%s2 + $0x10] sm:$0xff]
  %v146 = vld [vmem:[%s2 + $0x18] sm:$0xff]
  %v147 = vld [vmem:[%s2 + $0x20] sm:$0xff]
  %v148 = vld [vmem:[%s2 + $0x28] sm:$0xff]
  %v149 = vld [vmem:[%s2 + $0x30] sm:$0xff]
  %v150 = vld [vmem:[%s2 + $0x38] sm:$0xff]
  %v151 = vld [vmem:[%s2 + $0x40] sm:$0xff]
  %v152 = vld [vmem:[%s2 + $0x48] sm:$0xff]
  %v153 = vld [vmem:[%s2 + $0x50] sm:$0xff]
  %v154 = vld [vmem:[%s2 + $0x58] sm:$0xff]
  %v155 = vld [vmem:[%s2 + $0x60] sm:$0xff]
  %v156 = vld [vmem:[%s2 + $0x68] sm:$0xff]
  %v157 = vld [vmem:[%s2 + $0x70] sm:$0xff]
  %v158 = vld [vmem:[%s2 + $0x78] sm:$0xff]
  %160 = vset.pattern.permute.xlu0 0
  %161 = vperm.xlu0 %160, %v143
  %v162 = vpop.permute.xlu0 %161
  %165 = vset.pattern.permute.xlu0 0
  %166 = vperm.xlu0 %165, %v144
  %v167 = vpop.permute.xlu0 %166
  %170 = vset.pattern.permute.xlu0 0
  %171 = vperm.xlu0 %170, %v145
  %v172 = vpop.permute.xlu0 %171
  %175 = vset.pattern.permute.xlu0 0
  %176 = vperm.xlu0 %175, %v146
  %v177 = vpop.permute.xlu0 %176
  %180 = vset.pattern.permute.xlu0 0
  %181 = vperm.xlu0 %180, %v147
  %v182 = vpop.permute.xlu0 %181
  %185 = vset.pattern.permute.xlu0 0
  %186 = vperm.xlu0 %185, %v148
  %v187 = vpop.permute.xlu0 %186
  %190 = vset.pattern.permute.xlu0 0
  %191 = vperm.xlu0 %190, %v149
  %v192 = vpop.permute.xlu0 %191
  %195 = vset.pattern.permute.xlu0 0
  %196 = vperm.xlu0 %195, %v150
  %v197 = vpop.permute.xlu0 %196
  %200 = vset.pattern.permute.xlu0 0
  %201 = vperm.xlu0 %200, %v151
  %v202 = vpop.permute.xlu0 %201
  %205 = vset.pattern.permute.xlu0 0
  %206 = vperm.xlu0 %205, %v152
  %v207 = vpop.permute.xlu0 %206
  %210 = vset.pattern.permute.xlu0 0
  %211 = vperm.xlu0 %210, %v153
  %v212 = vpop.permute.xlu0 %211
  %215 = vset.pattern.permute.xlu0 0
  %216 = vperm.xlu0 %215, %v154
  %v217 = vpop.permute.xlu0 %216
  %220 = vset.pattern.permute.xlu0 0
  %221 = vperm.xlu0 %220, %v155
  %v222 = vpop.permute.xlu0 %221
  %225 = vset.pattern.permute.xlu0 0
  %226 = vperm.xlu0 %225, %v156
  %v227 = vpop.permute.xlu0 %226
  %230 = vset.pattern.permute.xlu0 0
  %231 = vperm.xlu0 %230, %v157
  %v232 = vpop.permute.xlu0 %231
  %235 = vset.pattern.permute.xlu0 0
  %236 = vperm.xlu0 %235, %v158
  %v237 = vpop.permute.xlu0 %236
  %v287 = vunpack.c.l.b16 %v23
  %v288 = vunpack.c.h.b16 %v23
  %v289 = vunpack.c.l.b16 %v24
  %v290 = vunpack.c.h.b16 %v24
  %v291 = vunpack.c.l.b16 %v25
  %v292 = vunpack.c.l.b16 %v26
  %v293 = vunpack.c.h.b16 %v26
  %v294 = vunpack.c.l.b16 %v27
  %v295 = vunpack.c.h.b16 %v27
  %v296 = vunpack.c.l.b16 %v28
  %v297 = vunpack.c.l.b16 %v29
  %v298 = vunpack.c.h.b16 %v29
  %v299 = vunpack.c.l.b16 %v30
  %v300 = vunpack.c.h.b16 %v30
  %v301 = vunpack.c.l.b16 %v31
  %v302 = vunpack.c.l.b16 %v32
  %v303 = vunpack.c.h.b16 %v32
  %v304 = vunpack.c.l.b16 %v33
  %v305 = vunpack.c.h.b16 %v33
  %v306 = vunpack.c.l.b16 %v34
  %v307 = vunpack.c.l.b16 %v35
  %v308 = vunpack.c.h.b16 %v35
  %v309 = vunpack.c.l.b16 %v36
  %v310 = vunpack.c.h.b16 %v36
  %v311 = vunpack.c.l.b16 %v37
  %v312 = vunpack.c.l.b16 %v38
  %v313 = vunpack.c.h.b16 %v38
  %v314 = vunpack.c.l.b16 %v39
  %v315 = vunpack.c.h.b16 %v39
  %v316 = vunpack.c.l.b16 %v40
  %v317 = vunpack.c.l.b16 %v41
  %v318 = vunpack.c.h.b16 %v41
  %v319 = vunpack.c.l.b16 %v42
  %v320 = vunpack.c.h.b16 %v42
  %v321 = vunpack.c.l.b16 %v43
  %v322 = vunpack.c.l.b16 %v44
  %v323 = vunpack.c.h.b16 %v44
  %v324 = vunpack.c.l.b16 %v45
  %v325 = vunpack.c.h.b16 %v45
  %v326 = vunpack.c.l.b16 %v46
  %v327 = vunpack.c.l.b16 %v47
  %v328 = vunpack.c.h.b16 %v47
  %v329 = vunpack.c.l.b16 %v48
  %v330 = vunpack.c.h.b16 %v48
  %v331 = vunpack.c.l.b16 %v49
  %v332 = vunpack.c.l.b16 %v50
  %v333 = vunpack.c.h.b16 %v50
  %v334 = vunpack.c.l.b16 %v51
  %v335 = vunpack.c.h.b16 %v51
  %v336 = vunpack.c.l.b16 %v52
  %v337 = vunpack.c.l.b16 %v53
  %v338 = vunpack.c.h.b16 %v53
  %v339 = vunpack.c.l.b16 %v54
  %v340 = vunpack.c.h.b16 %v54
  %v341 = vunpack.c.l.b16 %v55
  %v342 = vunpack.c.l.b16 %v56
  %v343 = vunpack.c.h.b16 %v56
  %v344 = vunpack.c.l.b16 %v57
  %v345 = vunpack.c.h.b16 %v57
  %v346 = vunpack.c.l.b16 %v58
  %v347 = vunpack.c.l.b16 %v59
  %v348 = vunpack.c.h.b16 %v59
  %v349 = vunpack.c.l.b16 %v60
  %v350 = vunpack.c.h.b16 %v60
  %v351 = vunpack.c.l.b16 %v61
  %v352 = vunpack.c.l.b16 %v62
  %v353 = vunpack.c.h.b16 %v62
  %v354 = vunpack.c.l.b16 %v63
  %v355 = vunpack.c.h.b16 %v63
  %v356 = vunpack.c.l.b16 %v64
  %v357 = vunpack.c.l.b16 %v65
  %v358 = vunpack.c.h.b16 %v65
  %v359 = vunpack.c.l.b16 %v66
  %v360 = vunpack.c.h.b16 %v66
  %v361 = vunpack.c.l.b16 %v67
  %v362 = vunpack.c.l.b16 %v68
  %v363 = vunpack.c.h.b16 %v68
  %v364 = vunpack.c.l.b16 %v69
  %v365 = vunpack.c.h.b16 %v69
  %v366 = vunpack.c.l.b16 %v70
  %v367 = vpack.c.b16 %v292, %v287
  %v368 = vpack.c.b16 %v293, %v288
  %v369 = vpack.c.b16 %v294, %v289
  %v370 = vpack.c.b16 %v295, %v290
  %v371 = vpack.c.b16 %v296, %v291
  %v372 = vpack.c.b16 %v302, %v297
  %v373 = vpack.c.b16 %v303, %v298
  %v374 = vpack.c.b16 %v304, %v299
  %v375 = vpack.c.b16 %v305, %v300
  %v376 = vpack.c.b16 %v306, %v301
  %v377 = vpack.c.b16 %v312, %v307
  %v378 = vpack.c.b16 %v313, %v308
  %v379 = vpack.c.b16 %v314, %v309
  %v380 = vpack.c.b16 %v315, %v310
  %v381 = vpack.c.b16 %v316, %v311
  %v382 = vpack.c.b16 %v322, %v317
  %v383 = vpack.c.b16 %v323, %v318
  %v384 = vpack.c.b16 %v324, %v319
  %v385 = vpack.c.b16 %v325, %v320
  %v386 = vpack.c.b16 %v326, %v321
  %v387 = vpack.c.b16 %v332, %v327
  %v388 = vpack.c.b16 %v333, %v328
  %v389 = vpack.c.b16 %v334, %v329
  %v390 = vpack.c.b16 %v335, %v330
  %v391 = vpack.c.b16 %v336, %v331
  %v392 = vpack.c.b16 %v342, %v337
  %v393 = vpack.c.b16 %v343, %v338
  %v394 = vpack.c.b16 %v344, %v339
  %v395 = vpack.c.b16 %v345, %v340
  %v396 = vpack.c.b16 %v346, %v341
  %v397 = vpack.c.b16 %v352, %v347
  %v398 = vpack.c.b16 %v353, %v348
  %v399 = vpack.c.b16 %v354, %v349
  %v400 = vpack.c.b16 %v355, %v350
  %v401 = vpack.c.b16 %v356, %v351
  %v402 = vpack.c.b16 %v362, %v357
  %v403 = vpack.c.b16 %v363, %v358
  %v404 = vpack.c.b16 %v364, %v359
  %v405 = vpack.c.b16 %v365, %v360
  %v406 = vpack.c.b16 %v366, %v361
  %v511 = vunpack.c.l.b16 %v71
  %v512 = vunpack.c.l.b16 %v72
  %v513 = vunpack.c.l.b16 %v73
  %v514 = vunpack.c.l.b16 %v74
  %v515 = vunpack.c.l.b16 %v75
  %v516 = vunpack.c.l.b16 %v76
  %v517 = vunpack.c.l.b16 %v77
  %v518 = vunpack.c.l.b16 %v78
  %v519 = vunpack.c.l.b16 %v79
  %v520 = vunpack.c.l.b16 %v80
  %v521 = vunpack.c.l.b16 %v81
  %v522 = vunpack.c.l.b16 %v82
  %v523 = vunpack.c.l.b16 %v83
  %v524 = vunpack.c.l.b16 %v84
  %v525 = vunpack.c.l.b16 %v85
  %v526 = vunpack.c.l.b16 %v86
  %v527 = vunpack.c.l.b16 %v87
  %v528 = vunpack.c.l.b16 %v88
  %v529 = vunpack.c.l.b16 %v89
  %v530 = vunpack.c.l.b16 %v90
  %v531 = vunpack.c.l.b16 %v91
  %v532 = vunpack.c.l.b16 %v92
  %v533 = vunpack.c.l.b16 %v93
  %v534 = vunpack.c.l.b16 %v94
  %v535 = vunpack.c.l.b16 %v95
  %v536 = vunpack.c.l.b16 %v96
  %v537 = vunpack.c.l.b16 %v97
  %v538 = vunpack.c.l.b16 %v98
  %v539 = vunpack.c.l.b16 %v99
  %v540 = vunpack.c.l.b16 %v100
  %v541 = vunpack.c.l.b16 %v101
  %v542 = vunpack.c.l.b16 %v102
  %v543 = vunpack.c.l.b16 %v103
  %v544 = vunpack.c.l.b16 %v104
  %v545 = vunpack.c.l.b16 %v105
  %v546 = vunpack.c.l.b16 %v106
  %v547 = vunpack.c.l.b16 %v107
  %v548 = vunpack.c.l.b16 %v108
  %v549 = vunpack.c.l.b16 %v109
  %v550 = vunpack.c.l.b16 %v110
  %v551 = vunpack.c.l.b16 %v111
  %v552 = vunpack.c.l.b16 %v112
  %v553 = vunpack.c.l.b16 %v113
  %v554 = vunpack.c.l.b16 %v114
  %v555 = vunpack.c.l.b16 %v115
  %v556 = vunpack.c.l.b16 %v116
  %v557 = vunpack.c.l.b16 %v117
  %v558 = vunpack.c.l.b16 %v118
  %v559 = vunpack.c.l.b16 %v119
  %v560 = vunpack.c.l.b16 %v120
  %v561 = vunpack.c.l.b16 %v121
  %v562 = vunpack.c.l.b16 %v122
  %v563 = vunpack.c.l.b16 %v123
  %v564 = vunpack.c.l.b16 %v124
  %v565 = vunpack.c.l.b16 %v125
  %v566 = vunpack.c.l.b16 %v126
  %v567 = vunpack.c.l.b16 %v127
  %v568 = vunpack.c.l.b16 %v128
  %v569 = vunpack.c.l.b16 %v129
  %v570 = vunpack.c.l.b16 %v130
  %v571 = vunpack.c.l.b16 %v131
  %v572 = vunpack.c.l.b16 %v132
  %v573 = vunpack.c.l.b16 %v133
  %v574 = vunpack.c.l.b16 %v134
  %v575 = vunpack.c.l.b16 %v135
  %v576 = vunpack.c.l.b16 %v136
  %v577 = vunpack.c.l.b16 %v137
  %v578 = vunpack.c.l.b16 %v138
  %v579 = vunpack.c.l.b16 %v139
  %v580 = vunpack.c.l.b16 %v140
  %v581 = vunpack.c.l.b16 %v141
  %v582 = vunpack.c.l.b16 %v142
  %v583 = vpack.c.b16 %v512, %v511
  %v584 = vpack.c.b16 %v514, %v513
  %v585 = vpack.c.b16 %v516, %v515
  %v586 = vpack.c.b16 %v518, %v517
  %v587 = vpack.c.b16 %v520, %v519
  %v588 = vpack.c.b16 %v522, %v521
  %v589 = vpack.c.b16 %v524, %v523
  %v590 = vpack.c.b16 %v526, %v525
  %v591 = vpack.c.b16 %v528, %v527
  %v592 = vpack.c.b16 %v530, %v529
  %v593 = vpack.c.b16 %v532, %v531
  %v594 = vpack.c.b16 %v534, %v533
  %v595 = vpack.c.b16 %v536, %v535
  %v596 = vpack.c.b16 %v538, %v537
  %v597 = vpack.c.b16 %v540, %v539
  %v598 = vpack.c.b16 %v542, %v541
  %v599 = vpack.c.b16 %v544, %v543
  %v600 = vpack.c.b16 %v546, %v545
  %v601 = vpack.c.b16 %v548, %v547
  %v602 = vpack.c.b16 %v550, %v549
  %v603 = vpack.c.b16 %v552, %v551
  %v604 = vpack.c.b16 %v554, %v553
  %v605 = vpack.c.b16 %v556, %v555
  %v606 = vpack.c.b16 %v558, %v557
  %v607 = vpack.c.b16 %v560, %v559
  %v608 = vpack.c.b16 %v562, %v561
  %v609 = vpack.c.b16 %v564, %v563
  %v610 = vpack.c.b16 %v566, %v565
  %v611 = vpack.c.b16 %v568, %v567
  %v612 = vpack.c.b16 %v570, %v569
  %v613 = vpack.c.b16 %v572, %v571
  %v614 = vpack.c.b16 %v574, %v573
  %v615 = vpack.c.b16 %v576, %v575
  %v616 = vpack.c.b16 %v578, %v577
  %v617 = vpack.c.b16 %v580, %v579
  %v618 = vpack.c.b16 %v582, %v581
  %vm655 = vcmask 523264
  %v657 = vsel %vm655, %v371, 0
  %v660 = vsel %vm655, %v376, 0
  %v663 = vsel %vm655, %v381, 0
  %v666 = vsel %vm655, %v386, 0
  %v669 = vsel %vm655, %v391, 0
  %v672 = vsel %vm655, %v396, 0
  %v675 = vsel %vm655, %v401, 0
  %v678 = vsel %vm655, %v406, 0
  %680 = vmatprep.subr.bf16.mxu0 0
  %681 = vmatpush1.bf16.msra.mxu0 %v583
  %682 = vmatprep.subr.bf16.mxu0 0
  %683 = vmatpush1.bf16.msra.mxu0 %v584
  %684 = vmatprep.subr.bf16.mxu0 0
  %685 = vmatpush1.bf16.msra.mxu0 %v585
  %686 = vmatprep.subr.bf16.mxu0 0
  %687 = vmatpush1.bf16.msra.mxu0 %v586
  %688 = vmatprep.subr.bf16.mxu0 0
  %689 = vmatpush1.bf16.msra.mxu0 %v587
  %690 = vmatprep.subr.bf16.mxu0 0
  %691 = vmatpush1.bf16.msra.mxu0 %v588
  %692 = vmatprep.subr.bf16.mxu0 0
  %693 = vmatpush1.bf16.msra.mxu0 %v589
  %694 = vmatprep.subr.bf16.mxu0 0
  %695 = vmatpush1.bf16.msra.mxu0 %v590
  %696 = vmatprep.subr.bf16.mxu0 0
  %697 = vmatpush1.bf16.msra.mxu0 %v591
  %698 = vmatprep.subr.bf16.mxu0 0
  %699 = vmatpush1.bf16.msra.mxu0 %v592
  %700 = vmatprep.subr.bf16.mxu0 0
  %701 = vmatpush1.bf16.msra.mxu0 %v593
  %702 = vmatprep.subr.bf16.mxu0 0
  %703 = vmatpush1.bf16.msra.mxu0 %v594
  %704 = vmatprep.subr.bf16.mxu0 0
  %705 = vmatpush1.bf16.msra.mxu0 %v595
  %706 = vmatprep.subr.bf16.mxu0 0
  %707 = vmatpush1.bf16.msra.mxu0 %v596
  %708 = vmatprep.subr.bf16.mxu0 0
  %709 = vmatpush1.bf16.msra.mxu0 %v597
  %710 = vmatprep.subr.bf16.mxu0 0
  %711 = vmatpush1.bf16.msra.mxu0 %v598
  %712 = vmatprep.mubr.bf16.mxu0 %v368
  %713 = vmatmul.mubr.bf16.gmra.mrb[0].mxu0 %v367
  %v714 = vpop.f32.mrb[0].mxu0
  %v715 = vadd.f32 %v162, %v714
  %v716 = vpop.f32.mrb[0].mxu0
  %v717 = vpop.f32.mrb[0].mxu0
  %v718 = vadd.f32 %v167, %v717
  %v719 = vpop.f32.mrb[0].mxu0
  %720 = vmatprep.mubr.bf16.mxu0 %v373
  %721 = vmatmul.mubr.bf16.gmra.mrb[0].mxu0 %v372
  %v722 = vpop.f32.mrb[0].mxu0
  %v723 = vadd.f32 %v172, %v722
  %v724 = vpop.f32.mrb[0].mxu0
  %v725 = vpop.f32.mrb[0].mxu0
  %v726 = vadd.f32 %v177, %v725
  %v727 = vpop.f32.mrb[0].mxu0
  %728 = vmatprep.mubr.bf16.mxu0 %v378
  %729 = vmatmul.mubr.bf16.gmra.mrb[0].mxu0 %v377
  %v730 = vpop.f32.mrb[0].mxu0
  %v731 = vadd.f32 %v182, %v730
  %v732 = vpop.f32.mrb[0].mxu0
  %v733 = vpop.f32.mrb[0].mxu0
  %v734 = vadd.f32 %v187, %v733
  %v735 = vpop.f32.mrb[0].mxu0
  %736 = vmatprep.mubr.bf16.mxu0 %v383
  %737 = vmatmul.mubr.bf16.gmra.mrb[0].mxu0 %v382
  %v738 = vpop.f32.mrb[0].mxu0
  %v739 = vadd.f32 %v192, %v738
  %v740 = vpop.f32.mrb[0].mxu0
  %v741 = vpop.f32.mrb[0].mxu0
  %v742 = vadd.f32 %v197, %v741
  %v743 = vpop.f32.mrb[0].mxu0
  %744 = vmatprep.mubr.bf16.mxu0 %v388
  %745 = vmatmul.mubr.bf16.gmra.mrb[0].mxu0 %v387
  %v746 = vpop.f32.mrb[0].mxu0
  %v747 = vadd.f32 %v202, %v746
  %v748 = vpop.f32.mrb[0].mxu0
  %v749 = vpop.f32.mrb[0].mxu0
  %v750 = vadd.f32 %v207, %v749
  %v751 = vpop.f32.mrb[0].mxu0
  %752 = vmatprep.mubr.bf16.mxu0 %v393
  %753 = vmatmul.mubr.bf16.gmra.mrb[0].mxu0 %v392
  %v754 = vpop.f32.mrb[0].mxu0
  %v755 = vadd.f32 %v212, %v754
  %v756 = vpop.f32.mrb[0].mxu0
  %v757 = vpop.f32.mrb[0].mxu0
  %v758 = vadd.f32 %v217, %v757
  %v759 = vpop.f32.mrb[0].mxu0
  %760 = vmatprep.mubr.bf16.mxu0 %v398
  %761 = vmatmul.mubr.bf16.gmra.mrb[0].mxu0 %v397
  %v762 = vpop.f32.mrb[0].mxu0
  %v763 = vadd.f32 %v222, %v762
  %v764 = vpop.f32.mrb[0].mxu0
  %v765 = vpop.f32.mrb[0].mxu0
  %v766 = vadd.f32 %v227, %v765
  %v767 = vpop.f32.mrb[0].mxu0
  %768 = vmatprep.mubr.bf16.mxu0 %v403
  %769 = vmatmul.mubr.bf16.gmra.mrb[0].mxu0 %v402
  %v770 = vpop.f32.mrb[0].mxu0
  %v771 = vadd.f32 %v232, %v770
  %v772 = vpop.f32.mrb[0].mxu0
  %v773 = vpop.f32.mrb[0].mxu0
  %v774 = vadd.f32 %v237, %v773
  %v775 = vpop.f32.mrb[0].mxu0
  %776 = vdwg.mxu0
  %777 = vmatprep.subr.bf16.mxu0 0
  %778 = vmatpush1.bf16.msra.mxu0 %v599
  %779 = vmatprep.subr.bf16.mxu0 0
  %780 = vmatpush1.bf16.msra.mxu0 %v600
  %781 = vmatprep.subr.bf16.mxu0 0
  %782 = vmatpush1.bf16.msra.mxu0 %v601
  %783 = vmatprep.subr.bf16.mxu0 0
  %784 = vmatpush1.bf16.msra.mxu0 %v602
  %785 = vmatprep.subr.bf16.mxu0 0
  %786 = vmatpush1.bf16.msra.mxu0 %v603
  %787 = vmatprep.subr.bf16.mxu0 0
  %788 = vmatpush1.bf16.msra.mxu0 %v604
  %789 = vmatprep.subr.bf16.mxu0 0
  %790 = vmatpush1.bf16.msra.mxu0 %v605
  %791 = vmatprep.subr.bf16.mxu0 0
  %792 = vmatpush1.bf16.msra.mxu0 %v606
  %793 = vmatprep.subr.bf16.mxu0 0
  %794 = vmatpush1.bf16.msra.mxu0 %v607
  %795 = vmatprep.subr.bf16.mxu0 0
  %796 = vmatpush1.bf16.msra.mxu0 %v608
  %797 = vmatprep.subr.bf16.mxu0 0
  %798 = vmatpush1.bf16.msra.mxu0 %v609
  %799 = vmatprep.subr.bf16.mxu0 0
  %800 = vmatpush1.bf16.msra.mxu0 %v610
  %801 = vmatprep.subr.bf16.mxu0 0
  %802 = vmatpush1.bf16.msra.mxu0 %v611
  %803 = vmatprep.subr.bf16.mxu0 0
  %804 = vmatpush1.bf16.msra.mxu0 %v612
  %805 = vmatprep.subr.bf16.mxu0 0
  %806 = vmatpush1.bf16.msra.mxu0 %v613
  %807 = vmatprep.subr.bf16.mxu0 0
  %808 = vmatpush1.bf16.msra.mxu0 %v614
  %809 = vmatprep.mubr.bf16.mxu0 %v370
  %810 = vmatmul.mubr.bf16.gmra.mrb[0].mxu0 %v369
  %v811 = vpop.f32.mrb[0].mxu0
  %v812 = vadd.f32 %v715, %v811
  %v813 = vpop.f32.mrb[0].mxu0
  %v814 = vpop.f32.mrb[0].mxu0
  %v815 = vadd.f32 %v718, %v814
  %v816 = vpop.f32.mrb[0].mxu0
  %817 = vmatprep.mubr.bf16.mxu0 %v375
  %818 = vmatmul.mubr.bf16.gmra.mrb[0].mxu0 %v374
  %v819 = vpop.f32.mrb[0].mxu0
  %v820 = vadd.f32 %v723, %v819
  %v821 = vpop.f32.mrb[0].mxu0
  %v822 = vpop.f32.mrb[0].mxu0
  %v823 = vadd.f32 %v726, %v822
  %v824 = vpop.f32.mrb[0].mxu0
  %825 = vmatprep.mubr.bf16.mxu0 %v380
  %826 = vmatmul.mubr.bf16.gmra.mrb[0].mxu0 %v379
  %v827 = vpop.f32.mrb[0].mxu0
  %v828 = vadd.f32 %v731, %v827
  %v829 = vpop.f32.mrb[0].mxu0
  %v830 = vpop.f32.mrb[0].mxu0
  %v831 = vadd.f32 %v734, %v830
  %v832 = vpop.f32.mrb[0].mxu0
  %833 = vmatprep.mubr.bf16.mxu0 %v385
  %834 = vmatmul.mubr.bf16.gmra.mrb[0].mxu0 %v384
  %v835 = vpop.f32.mrb[0].mxu0
  %v836 = vadd.f32 %v739, %v835
  %v837 = vpop.f32.mrb[0].mxu0
  %v838 = vpop.f32.mrb[0].mxu0
  %v839 = vadd.f32 %v742, %v838
  %v840 = vpop.f32.mrb[0].mxu0
  %841 = vmatprep.mubr.bf16.mxu0 %v390
  %842 = vmatmul.mubr.bf16.gmra.mrb[0].mxu0 %v389
  %v843 = vpop.f32.mrb[0].mxu0
  %v844 = vadd.f32 %v747, %v843
  %v845 = vpop.f32.mrb[0].mxu0
  %v846 = vpop.f32.mrb[0].mxu0
  %v847 = vadd.f32 %v750, %v846
  %v848 = vpop.f32.mrb[0].mxu0
  %849 = vmatprep.mubr.bf16.mxu0 %v395
  %850 = vmatmul.mubr.bf16.gmra.mrb[0].mxu0 %v394
  %v851 = vpop.f32.mrb[0].mxu0
  %v852 = vadd.f32 %v755, %v851
  %v853 = vpop.f32.mrb[0].mxu0
  %v854 = vpop.f32.mrb[0].mxu0
  %v855 = vadd.f32 %v758, %v854
  %v856 = vpop.f32.mrb[0].mxu0
  %857 = vmatprep.mubr.bf16.mxu0 %v400
  %858 = vmatmul.mubr.bf16.gmra.mrb[0].mxu0 %v399
  %v859 = vpop.f32.mrb[0].mxu0
  %v860 = vadd.f32 %v763, %v859
  %v861 = vpop.f32.mrb[0].mxu0
  %v862 = vpop.f32.mrb[0].mxu0
  %v863 = vadd.f32 %v766, %v862
  %v864 = vpop.f32.mrb[0].mxu0
  %865 = vmatprep.mubr.bf16.mxu0 %v405
  %866 = vmatmul.mubr.bf16.gmra.mrb[0].mxu0 %v404
  %v867 = vpop.f32.mrb[0].mxu0
  %v868 = vadd.f32 %v771, %v867
  %v869 = vpop.f32.mrb[0].mxu0
  %v870 = vpop.f32.mrb[0].mxu0
  %v871 = vadd.f32 %v774, %v870
  %v872 = vpop.f32.mrb[0].mxu0
  %873 = vdwg.mxu0
  %874 = vmatprep.subr.bf16.mxu0 0
  %875 = vmatpush1.bf16.msra.mxu0 %v615
  %876 = vmatprep.subr.bf16.mxu0 0
  %877 = vmatpush1.bf16.msra.mxu0 %v616
  %878 = vmatprep.subr.bf16.mxu0 0
  %879 = vmatpush1.bf16.msra.mxu0 %v617
  %880 = vmatprep.subr.bf16.mxu0 0
  %881 = vmatpush1.bf16.msra.mxu0 %v618
  %882 = vmatprep.subr.bf16.mxu0 0
  %883 = vmatpush1.bf16.msra.mxu0 0
  %884 = vmatprep.subr.bf16.mxu0 0
  %885 = vmatpush1.bf16.msra.mxu0 0
  %886 = vmatprep.subr.bf16.mxu0 0
  %887 = vmatpush1.bf16.msra.mxu0 0
  %888 = vmatprep.subr.bf16.mxu0 0
  %889 = vmatpush1.bf16.msra.mxu0 0
  %890 = vmatprep.subr.bf16.mxu0 0
  %891 = vmatpush1.bf16.msra.mxu0 0
  %892 = vmatprep.subr.bf16.mxu0 0
  %893 = vmatpush1.bf16.msra.mxu0 0
  %894 = vmatprep.subr.bf16.mxu0 0
  %895 = vmatpush1.bf16.msra.mxu0 0
  %896 = vmatprep.subr.bf16.mxu0 0
  %897 = vmatpush1.bf16.msra.mxu0 0
  %898 = vmatprep.subr.bf16.mxu0 0
  %899 = vmatpush1.bf16.msra.mxu0 0
  %900 = vmatprep.subr.bf16.mxu0 0
  %901 = vmatpush1.bf16.msra.mxu0 0
  %902 = vmatprep.subr.bf16.mxu0 0
  %903 = vmatpush1.bf16.msra.mxu0 0
  %904 = vmatprep.subr.bf16.mxu0 0
  %905 = vmatpush1.bf16.msra.mxu0 0
  %906 = vmatprep.mubr.bf16.mxu0 0
  %907 = vmatmul.mubr.bf16.gmra.mrb[0].mxu0 %v657
  %v908 = vpop.f32.mrb[0].mxu0
  %v909 = vadd.f32 %v812, %v908
  %v910 = vpop.f32.mrb[0].mxu0
  %v911 = vpop.f32.mrb[0].mxu0
  %v912 = vadd.f32 %v815, %v911
  %v913 = vpop.f32.mrb[0].mxu0
  %914 = vmatprep.mubr.bf16.mxu0 0
  %915 = vmatmul.mubr.bf16.gmra.mrb[0].mxu0 %v660
  %v916 = vpop.f32.mrb[0].mxu0
  %v917 = vadd.f32 %v820, %v916
  %v918 = vpop.f32.mrb[0].mxu0
  %v919 = vpop.f32.mrb[0].mxu0
  %v920 = vadd.f32 %v823, %v919
  %v921 = vpop.f32.mrb[0].mxu0
  %922 = vmatprep.mubr.bf16.mxu0 0
  %923 = vmatmul.mubr.bf16.gmra.mrb[0].mxu0 %v663
  %v924 = vpop.f32.mrb[0].mxu0
  %v925 = vadd.f32 %v828, %v924
  %v926 = vpop.f32.mrb[0].mxu0
  %v927 = vpop.f32.mrb[0].mxu0
  %v928 = vadd.f32 %v831, %v927
  %v929 = vpop.f32.mrb[0].mxu0
  %930 = vmatprep.mubr.bf16.mxu0 0
  %931 = vmatmul.mubr.bf16.gmra.mrb[0].mxu0 %v666
  %v932 = vpop.f32.mrb[0].mxu0
  %v933 = vadd.f32 %v836, %v932
  %v934 = vpop.f32.mrb[0].mxu0
  %v935 = vpop.f32.mrb[0].mxu0
  %v936 = vadd.f32 %v839, %v935
  %v937 = vpop.f32.mrb[0].mxu0
  %938 = vmatprep.mubr.bf16.mxu0 0
  %939 = vmatmul.mubr.bf16.gmra.mrb[0].mxu0 %v669
  %v940 = vpop.f32.mrb[0].mxu0
  %v941 = vadd.f32 %v844, %v940
  %v942 = vpop.f32.mrb[0].mxu0
  %v943 = vpop.f32.mrb[0].mxu0
  %v944 = vadd.f32 %v847, %v943
  %v945 = vpop.f32.mrb[0].mxu0
  %946 = vmatprep.mubr.bf16.mxu0 0
  %947 = vmatmul.mubr.bf16.gmra.mrb[0].mxu0 %v672
  %v948 = vpop.f32.mrb[0].mxu0
  %v949 = vadd.f32 %v852, %v948
  %v950 = vpop.f32.mrb[0].mxu0
  %v951 = vpop.f32.mrb[0].mxu0
  %v952 = vadd.f32 %v855, %v951
  %v953 = vpop.f32.mrb[0].mxu0
  %954 = vmatprep.mubr.bf16.mxu0 0
  %955 = vmatmul.mubr.bf16.gmra.mrb[0].mxu0 %v675
  %v956 = vpop.f32.mrb[0].mxu0
  %v957 = vadd.f32 %v860, %v956
  %v958 = vpop.f32.mrb[0].mxu0
  %v959 = vpop.f32.mrb[0].mxu0
  %v960 = vadd.f32 %v863, %v959
  %v961 = vpop.f32.mrb[0].mxu0
  %962 = vmatprep.mubr.bf16.mxu0 0
  %963 = vmatmul.mubr.bf16.gmra.mrb[0].mxu0 %v678
  %v964 = vpop.f32.mrb[0].mxu0
  %v965 = vadd.f32 %v868, %v964
  %v966 = vpop.f32.mrb[0].mxu0
  %v967 = vpop.f32.mrb[0].mxu0
  %v968 = vadd.f32 %v871, %v967
  %v969 = vpop.f32.mrb[0].mxu0
  %970 = vdwg.mxu0
  %v971 = vmax.f32 %v909, 0.0
  %v972 = vmax.f32 %v912, 0.0
  %v973 = vmax.f32 %v917, 0.0
  %v974 = vmax.f32 %v920, 0.0
  %v975 = vmax.f32 %v925, 0.0
  %v976 = vmax.f32 %v928, 0.0
  %v977 = vmax.f32 %v933, 0.0
  %v978 = vmax.f32 %v936, 0.0
  %v979 = vmax.f32 %v941, 0.0
  %v980 = vmax.f32 %v944, 0.0
  %v981 = vmax.f32 %v949, 0.0
  %v982 = vmax.f32 %v952, 0.0
  %v983 = vmax.f32 %v957, 0.0
  %v984 = vmax.f32 %v960, 0.0
  %v985 = vmax.f32 %v965, 0.0
  %v986 = vmax.f32 %v968, 0.0
  %s987 = smul.u32 0, 128
  %v988 = vlaneseq
  %v989 = vand.u32 %v988, 127
  %v990 = vstv %s987
  %v991 = vadd.s32 %v990, %v989
  %vm992 = vcmp.lt.s32.totalorder %v991, 2
  %v993 = vsel %vm992, %v971, 0.0
  %v994 = vsel %vm992, %v972, 0.0
  %v995 = vsel %vm992, %v973, 0.0
  %v996 = vsel %vm992, %v974, 0.0
  %v997 = vsel %vm992, %v975, 0.0
  %v998 = vsel %vm992, %v976, 0.0
  %v999 = vsel %vm992, %v977, 0.0
  %v1000 = vsel %vm992, %v978, 0.0
  %v1001 = vsel %vm992, %v979, 0.0
  %v1002 = vsel %vm992, %v980, 0.0
  %v1003 = vsel %vm992, %v981, 0.0
  %v1004 = vsel %vm992, %v982, 0.0
  %v1005 = vsel %vm992, %v983, 0.0
  %v1006 = vsel %vm992, %v984, 0.0
  %v1007 = vsel %vm992, %v985, 0.0
  %v1008 = vsel %vm992, %v986, 0.0
  %s1009 = sld [smem:[#allocation2]]
  %v1010 = vstv %s1009
  %v1011 = vmul.f32 %v993, %v1010
  %v1012 = vmul.f32 %v994, %v1010
  %v1013 = vmul.f32 %v995, %v1010
  %v1014 = vmul.f32 %v996, %v1010
  %v1015 = vmul.f32 %v997, %v1010
  %v1016 = vmul.f32 %v998, %v1010
  %v1017 = vmul.f32 %v999, %v1010
  %v1018 = vmul.f32 %v1000, %v1010
  %v1019 = vmul.f32 %v1001, %v1010
  %v1020 = vmul.f32 %v1002, %v1010
  %v1021 = vmul.f32 %v1003, %v1010
  %v1022 = vmul.f32 %v1004, %v1010
  %v1023 = vmul.f32 %v1005, %v1010
  %v1024 = vmul.f32 %v1006, %v1010
  %v1025 = vmul.f32 %v1007, %v1010
  %v1026 = vmul.f32 %v1008, %v1010
  %s1027 = sld [smem:[#allocation3]]
  %v1028 = vstv %s1027
  %v1029 = vadd.f32 %v1011, %v1028
  %v1030 = vadd.f32 %v1012, %v1028
  %v1031 = vadd.f32 %v1013, %v1028
  %v1032 = vadd.f32 %v1014, %v1028
  %v1033 = vadd.f32 %v1015, %v1028
  %v1034 = vadd.f32 %v1016, %v1028
  %v1035 = vadd.f32 %v1017, %v1028
  %v1036 = vadd.f32 %v1018, %v1028
  %v1037 = vadd.f32 %v1019, %v1028
  %v1038 = vadd.f32 %v1020, %v1028
  %v1039 = vadd.f32 %v1021, %v1028
  %v1040 = vadd.f32 %v1022, %v1028
  %v1041 = vadd.f32 %v1023, %v1028
  %v1042 = vadd.f32 %v1024, %v1028
  %v1043 = vadd.f32 %v1025, %v1028
  %v1044 = vadd.f32 %v1026, %v1028
  %s1045 = sshra.s32 %s987, 7
  %s1046 = sand.u32 %s987, 127
  %s1047 = scalar_lea.vmem %s5, %s1045
  %1048 = vst [vmem:[%s1047] sm:$0xff] %v1029
  %1049 = vst [vmem:[%s1047 + $0x8] sm:$0xff] %v1030
  %1050 = vst [vmem:[%s1047 + $0x10] sm:$0xff] %v1031
  %1051 = vst [vmem:[%s1047 + $0x18] sm:$0xff] %v1032
  %1052 = vst [vmem:[%s1047 + $0x20] sm:$0xff] %v1033
  %1053 = vst [vmem:[%s1047 + $0x28] sm:$0xff] %v1034
  %1054 = vst [vmem:[%s1047 + $0x30] sm:$0xff] %v1035
  %1055 = vst [vmem:[%s1047 + $0x38] sm:$0xff] %v1036
  %1056 = vst [vmem:[%s1047 + $0x40] sm:$0xff] %v1037
  %1057 = vst [vmem:[%s1047 + $0x48] sm:$0xff] %v1038
  %1058 = vst [vmem:[%s1047 + $0x50] sm:$0xff] %v1039
  %1059 = vst [vmem:[%s1047 + $0x58] sm:$0xff] %v1040
  %1060 = vst [vmem:[%s1047 + $0x60] sm:$0xff] %v1041
  %1061 = vst [vmem:[%s1047 + $0x68] sm:$0xff] %v1042
  %1062 = vst [vmem:[%s1047 + $0x70] sm:$0xff] %v1043
  %1063 = vst [vmem:[%s1047 + $0x78] sm:$0xff] %v1044
  // Predicated region
  $region22: #{my_cnn_forward.7} parent=0 // pred_check
    _
  $region23: #{my_cnn_forward.7} parent=0 // pred_check_branch
    %1065 = sbr.rel (0) target = $region25
  $region24: #{my_cnn_forward.7} parent=0 // pred_region
    _
  $region25: #{my_cnn_forward.7} parent=0 // pred_fallthru
    _
  // Predicated region
  $region26: #{my_cnn_forward.7} parent=0 // pred_check
    _
  $region27: #{my_cnn_forward.7} parent=0 // pred_check_branch
    %1067 = sbr.rel (0) target = $region29
  $region28: #{my_cnn_forward.7} parent=0 // pred_region
    _
  $region29: #{my_cnn_forward.7} parent=0 // pred_fallthru
    _

</llo_original>
